<compile_context>
chip_gen: v7x
topology: tpu7x:2x2x1
jax: 0.10.0
libtpu: 0.0.40
codegen_flags: <defaults>
</compile_context>

<pallas_src>
import numpy as np
import jax
import jax.numpy as jnp
from jax import lax
from jax.experimental import pallas as pl
from jax.experimental.pallas import tpu as pltpu

EPS = 1e-5
LANE = 128


def _round_up(x, m):
    return ((x + m - 1) // m) * m


def _pick_tile(n, pref):
    """Largest multiple-of-128 tile <= pref that divides n; fall back to the
    full extent when n is not 128-divisible (valid per the (8,128) rule)."""
    if n % LANE != 0:
        return n
    t = min(_round_up(pref, LANE), n)
    t = (t // LANE) * LANE
    while t >= LANE:
        if n % t == 0:
            return t
        t -= LANE
    return n


def spectral_project_kernel(t_ref, sqrtlam_ref, v_ref, xy_ref, w_ref, acc_ref):
    """w = cos(t*s) (.) (V^T x) + sinc(t*s) (.) (V^T y).

    grid = (spectral row blocks i, node contraction blocks k); k last.
      t_ref:       (1, 1)       f32 SMEM scalar time
      sqrtlam_ref: (tm, 1)      f32 sqrt eigenvalues of this spectral block
      v_ref:       (tk, tm)     f32 V[node_block, spec_block]
      xy_ref:      (tk, 2*LP)   f32 [x_pad | y_pad] rows of this node block
      w_ref:       (tm, LP)     f32 output (lane-dense, zero-padded past CF)
      acc_ref:     (tm, 2*LP)   f32 accumulator scratch (persists over k)
    """
    k = pl.program_id(1)

    @pl.when(k == 0)
    def _():
        acc_ref[...] = jnp.zeros_like(acc_ref)

    # V^T @ [x | y]: contract the node axis (axis 0 of both operands) on the
    # MXU -- no explicit V.T materialization.
    acc_ref[...] += lax.dot_general(
        v_ref[...], xy_ref[...],
        dimension_numbers=(((0,), (0,)), ((), ())),
        preferred_element_type=jnp.float32)

    @pl.when(k == pl.num_programs(1) - 1)
    def _():
        t = t_ref[0, 0]
        s = sqrtlam_ref[...]                       # (tm, 1): broadcasts along lanes
        cos_d = jnp.cos(t * s)
        small = jnp.abs(s) < EPS
        sinc_d = jnp.where(small, t, jnp.sin(t * s) / jnp.where(small, 1.0, s))
        lp = w_ref.shape[-1]                       # 128-aligned -> clean vreg slices
        z = acc_ref[...]
        w_ref[...] = cos_d * z[:, :lp] + sinc_d * z[:, lp:]


def reconstruct_kernel(v_ref, w_ref, o_ref, acc_ref):
    """out = V @ w  (spectral reconstruction), standard tiled matmul."""
    k = pl.program_id(1)

    @pl.when(k == 0)
    def _():
        acc_ref[...] = jnp.zeros_like(acc_ref)

    acc_ref[...] += jnp.dot(v_ref[...], w_ref[...],
                            preferred_element_type=jnp.float32)

    @pl.when(k == pl.num_programs(1) - 1)
    def _():
        o_ref[...] = acc_ref[...].astype(o_ref.dtype)


def wave_eqn_sol(V, sqrtlam, x, y, t, *, row_tile=256, k_tile=512):
    """Pallas implementation of WaveEqnSol.forward(x, y, t).

    out = V diag(cos(t*sqrt(lam))) V^T x + V diag(sinc(t*sqrt(lam))) V^T y,
    computed as project -> scale -> reconstruct (O(N^2*CF) instead of O(N^3)).
    """
    N, C, F = x.shape
    CF = C * F
    LP = max(LANE, _round_up(CF, LANE))            # lane-dense feature width

    xf = x.reshape(N, CF).astype(jnp.float32)
    yf = y.reshape(N, CF).astype(jnp.float32)
    xp = jnp.pad(xf, ((0, 0), (0, LP - CF)))
    yp = jnp.pad(yf, ((0, 0), (0, LP - CF)))
    xy = jnp.concatenate([xp, yp], axis=-1)        # (N, 2*LP): one long contraction
    Vf = V.astype(jnp.float32)
    sl = sqrtlam.reshape(N, 1).astype(jnp.float32)  # (N, 1): sublane vector
    t_arr = jnp.full((1, 1), t, dtype=jnp.float32)

    tm = _pick_tile(N, row_tile)     # output-row / spectral-row tile
    tk = _pick_tile(N, k_tile)       # contraction tile
    grid = (N // tm, N // tk)
    cparams = pltpu.CompilerParams(
        dimension_semantics=("parallel", "arbitrary"))

    # TODO(synk): for production, batch graphs / time steps along the feature
    # axis and cast MXU operands (V, xy, w) to bf16 on v6e/v7x if accuracy allows.

    # Stage 1: spectral projection + scaling.
    w = pl.pallas_call(
        spectral_project_kernel,
        out_shape=jax.ShapeDtypeStruct((N, LP), jnp.float32),
        grid=grid,
        in_specs=[
            pl.BlockSpec(memory_space=pltpu.MemorySpace.SMEM),   # t (scalar)
            pl.BlockSpec((tm, 1), lambda i, k: (i, 0)),          # sqrt(lam) rows
            pl.BlockSpec((tk, tm), lambda i, k: (k, i)),         # V[node, spec]
            pl.BlockSpec((tk, 2 * LP), lambda i, k: (k, 0)),     # [x | y] padded
        ],
        out_specs=pl.BlockSpec((tm, LP), lambda i, k: (i, 0)),
        scratch_shapes=[pltpu.VMEM((tm, 2 * LP), jnp.float32)],
        compiler_params=cparams,
        cost_estimate=pl.CostEstimate(
            flops=2 * N * N * 2 * LP,
            transcendentals=2 * N,
            bytes_accessed=4 * (N * N + 2 * N * LP + N * LP + N)),
    )(t_arr, sl, Vf, xy)

    # Stage 2: spectral reconstruction.
    out_pad = pl.pallas_call(
        reconstruct_kernel,
        out_shape=jax.ShapeDtypeStruct((N, LP), jnp.float32),
        grid=grid,
        in_specs=[
            pl.BlockSpec((tm, tk), lambda i, k: (i, k)),         # V rows
            pl.BlockSpec((tk, LP), lambda i, k: (k, 0)),         # w
        ],
        out_specs=pl.BlockSpec((tm, LP), lambda i, k: (i, 0)),
        scratch_shapes=[pltpu.VMEM((tm, LP), jnp.float32)],
        compiler_params=cparams,
        cost_estimate=pl.CostEstimate(
            flops=2 * N * N * LP,
            transcendentals=0,
            bytes_accessed=4 * (N * N + 2 * N * LP)),
    )(Vf, w)

    return out_pad[:, :CF].reshape(N, C, F)


def reference_forward(V, sqrtlam, x, y, t):
    """Pure-numpy reference mirroring the PyTorch forward (dense equivalent of
    the sparse message passing: from_tensor + add-aggregation == matmul)."""
    cos_d = np.cos(t * sqrtlam)
    small = np.abs(sqrtlam) < EPS
    sinc_d = np.where(small, t, np.sin(t * sqrtlam) / np.where(small, 1.0, sqrtlam))
    P1 = V @ np.diag(cos_d) @ V.T
    P2 = V @ np.diag(sinc_d) @ V.T
    return np.einsum("ij,jab->iab", P1, x) + np.einsum("ij,jab->iab", P2, y)


if __name__ == "__main__":
    N, C, F = 128, 4, 8          # nodes, channels, features (node dim = -3)
    t_val = 0.7

    key = jax.random.PRNGKey(0)
    k_adj, k_x, k_y = jax.random.split(key, 3)

    # Deterministic symmetric zero-diagonal adjacency, scaled so ||L||_2 = O(1):
    # then float64 eigh resolves the Laplacian's zero eigenvalue to ~1e-14 and
    # the forward's assert |sqrtlam[0]| < eps holds robustly.
    A = np.asarray(jax.random.uniform(k_adj, (N, N), dtype=jnp.float32),
                   dtype=np.float64) * (2.0 / N)
    A = (A + A.T) * 0.5
    np.fill_diagonal(A, 0.0)
    L = np.diag(A.sum(axis=1)) - A                               # graph Laplacian

    # Eigendecomposition (the __init__ of EqnSolEigdecomp / WaveEqnSol).
    lam, Vnp = np.linalg.eigh(L)
    assert (lam > -EPS).all(), "lam is not positive"             # safe_sqrt check
    sqrtlam_np = np.sqrt(np.clip(lam, 0.0, None))                # safe_sqrt
    assert abs(sqrtlam_np[0]) < EPS, "sqrtlam[0] is not zero"    # forward's assert

    V32 = np.asarray(Vnp, dtype=np.float32)
    sqrtlam32 = np.asarray(sqrtlam_np, dtype=np.float32)

    # Node signals: (N, C, F), node dim = -3.
    x = jax.random.normal(k_x, (N, C, F), dtype=jnp.float32)
    y = jax.random.normal(k_y, (N, C, F), dtype=jnp.float32)

    out = wave_eqn_sol(jnp.asarray(V32), jnp.asarray(sqrtlam32), x, y, t_val,
                       row_tile=128, k_tile=128)                 # grid = (1, 1) at N = 128
    out = jax.block_until_ready(out)

    ref = reference_forward(V32.astype(np.float64), sqrtlam32.astype(np.float64),
                            np.asarray(x, np.float64), np.asarray(y, np.float64),
                            t_val)
    np.testing.assert_allclose(np.asarray(out), ref, rtol=1e-4, atol=1e-4)

    print("KERNEL_OK")
</pallas_src>

<mosaic_0001>
module attributes {stable_mosaic.version = 11 : i64} {
  func.func @spectral_project_kernel(%arg0: i32, %arg1: i32, %arg2: memref<1x1xf32, #tpu.memory_space<smem>>, %arg3: memref<128x1xf32, #tpu.memory_space<vmem>>, %arg4: memref<128x128xf32, #tpu.memory_space<vmem>>, %arg5: memref<128x256xf32, #tpu.memory_space<vmem>>, %arg6: memref<128x128xf32, #tpu.memory_space<vmem>>, %arg7: memref<128x256xf32, #tpu.memory_space<vmem>>) attributes {dimension_semantics = [#tpu.dimension_semantics<parallel>, #tpu.dimension_semantics<arbitrary>], iteration_bounds = array<i64: 1, 1>, scalar_prefetch = 0 : i64, scratch_operands = 1 : i64, tpu.core_type = #tpu.core_type<tc>, window_params = [{transform_indices = @transform_0, window_bounds = array<i64: 1, 1>}, {transform_indices = @transform_1, window_bounds = array<i64: 128, 1>}, {transform_indices = @transform_2, window_bounds = array<i64: 128, 128>}, {transform_indices = @transform_3, window_bounds = array<i64: 128, 256>}, {transform_indices = @transform_4, window_bounds = array<i64: 128, 128>}]} {
    %c0_i32 = arith.constant 0 : i32
    %0 = arith.cmpi eq, %arg1, %c0_i32 : i32
    %1 = arith.extui %0 : i1 to i32
    %c0_i32_0 = arith.constant 0 : i32
    %2 = arith.cmpi ne, %1, %c0_i32_0 : i32
    scf.if %2 {
      %cst_10 = arith.constant 0.000000e+00 : f32
      %12 = vector.broadcast %cst_10 : f32 to vector<128x256xf32>
      %c0_11 = arith.constant 0 : index
      %c0_12 = arith.constant 0 : index
      %13 = vector.load %arg7[%c0_11, %c0_12] : memref<128x256xf32, #tpu.memory_space<vmem>>, vector<128x256xf32>
      tpu.vector_store %arg7[%c0_11, %c0_12], %12 {strides = array<i32>} : memref<128x256xf32, #tpu.memory_space<vmem>>, vector<128x256xf32>,
    } else {
    }
    %c0 = arith.constant 0 : index
    %c0_1 = arith.constant 0 : index
    %3 = vector.load %arg7[%c0, %c0_1] : memref<128x256xf32, #tpu.memory_space<vmem>>, vector<128x256xf32>
    %c0_2 = arith.constant 0 : index
    %c0_3 = arith.constant 0 : index
    %4 = vector.load %arg4[%c0_2, %c0_3] : memref<128x128xf32, #tpu.memory_space<vmem>>, vector<128x128xf32>
    %c0_4 = arith.constant 0 : index
    %c0_5 = arith.constant 0 : index
    %5 = vector.load %arg5[%c0_4, %c0_5] : memref<128x256xf32, #tpu.memory_space<vmem>>, vector<128x256xf32>
    %cst = arith.constant dense<0.000000e+00> : vector<128x256xf32>
    %6 = tpu.matmul %4, %5, %cst {dimension_numbers = #tpu.dot_dimension_numbers<[0], [0], [1], [1], [0, 1, 1, 1], [], []>} : vector<128x128xf32>, vector<128x256xf32>, vector<128x256xf32> -> vector<128x256xf32>
    %7 = arith.addf %3, %6 : vector<128x256xf32>
    %c0_6 = arith.constant 0 : index
    %c0_7 = arith.constant 0 : index
    %8 = vector.load %arg7[%c0_6, %c0_7] : memref<128x256xf32, #tpu.memory_space<vmem>>, vector<128x256xf32>
    tpu.vector_store %arg7[%c0_6, %c0_7], %7 {strides = array<i32>} : memref<128x256xf32, #tpu.memory_space<vmem>>, vector<128x256xf32>,
    %c0_i32_8 = arith.constant 0 : i32
    %9 = arith.cmpi eq, %arg1, %c0_i32_8 : i32
    %10 = arith.extui %9 : i1 to i32
    %c0_i32_9 = arith.constant 0 : i32
    %11 = arith.cmpi ne, %10, %c0_i32_9 : i32
    scf.if %11 {
      %c0_10 = arith.constant 0 : index
      %c0_11 = arith.constant 0 : index
      %12 = memref.load %arg2[%c0_10, %c0_11] : memref<1x1xf32, #tpu.memory_space<smem>>
      %c0_12 = arith.constant 0 : index
      %c0_13 = arith.constant 0 : index
      %13 = vector.load %arg3[%c0_12, %c0_13] : memref<128x1xf32, #tpu.memory_space<vmem>>, vector<128x1xf32>
      %14 = vector.broadcast %12 : f32 to vector<128x1xf32>
      %15 = arith.mulf %14, %13 : vector<128x1xf32>
      %16 = math.cos %15 : vector<128x1xf32>
      %17 = math.absf %13 : vector<128x1xf32>
      %cst_14 = arith.constant 9.99999974E-6 : f32
      %18 = vector.broadcast %cst_14 : f32 to vector<128x1xf32>
      %19 = arith.cmpf olt, %17, %18 : vector<128x1xf32>
      %20 = vector.broadcast %12 : f32 to vector<128x1xf32>
      %21 = arith.mulf %20, %13 : vector<128x1xf32>
      %22 = math.sin %21 : vector<128x1xf32>
      %cst_15 = arith.constant 1.000000e+00 : f32
      %23 = vector.broadcast %cst_15 : f32 to vector<128x1xf32>
      %24 = arith.select %19, %23, %13 : vector<128x1xi1>, vector<128x1xf32>
      %25 = arith.divf %22, %24 : vector<128x1xf32>
      %26 = vector.broadcast %12 : f32 to vector<128x1xf32>
      %27 = arith.select %19, %26, %25 : vector<128x1xi1>, vector<128x1xf32>
      %c0_16 = arith.constant 0 : index
      %c0_17 = arith.constant 0 : index
      %28 = vector.load %arg7[%c0_16, %c0_17] : memref<128x256xf32, #tpu.memory_space<vmem>>, vector<128x256xf32>
      %29 = vector.extract_strided_slice %28 {offsets = [0, 0], sizes = [128, 128], strides = [1, 1]} : vector<128x256xf32> to vector<128x128xf32>
      %30 = vector.broadcast %16 : vector<128x1xf32> to vector<128x128xf32>
      %31 = arith.mulf %30, %29 : vector<128x128xf32>
      %32 = vector.extract_strided_slice %28 {offsets = [0, 128], sizes = [128, 128], strides = [1, 1]} : vector<128x256xf32> to vector<128x128xf32>
      %33 = vector.broadcast %27 : vector<128x1xf32> to vector<128x128xf32>
      %34 = arith.mulf %33, %32 : vector<128x128xf32>
      %35 = arith.addf %31, %34 : vector<128x128xf32>
      %c0_18 = arith.constant 0 : index
      %c0_19 = arith.constant 0 : index
      %36 = vector.load %arg6[%c0_18, %c0_19] : memref<128x128xf32, #tpu.memory_space<vmem>>, vector<128x128xf32>
      tpu.vector_store %arg6[%c0_18, %c0_19], %35 {strides = array<i32>} : memref<128x128xf32, #tpu.memory_space<vmem>>, vector<128x128xf32>,
    } else {
    }
    return
  }
  func.func @transform_0(%arg0: i32, %arg1: i32) -> (i32, i32) {
    %c0_i32 = arith.constant 0 : i32
    %c0_i32_0 = arith.constant 0 : i32
    %c0_i32_1 = arith.constant 0 : i32
    return %c0_i32, %c0_i32_0 : i32, i32
  }
  func.func @transform_1(%arg0: i32, %arg1: i32) -> (i32, i32) {
    %c0_i32 = arith.constant 0 : i32
    %c0_i32_0 = arith.constant 0 : i32
    return %arg0, %c0_i32 : i32, i32
  }
  func.func @transform_2(%arg0: i32, %arg1: i32) -> (i32, i32) {
    %c0_i32 = arith.constant 0 : i32
    return %arg1, %arg0 : i32, i32
  }
  func.func @transform_3(%arg0: i32, %arg1: i32) -> (i32, i32) {
    %c0_i32 = arith.constant 0 : i32
    %c0_i32_0 = arith.constant 0 : i32
    return %arg1, %c0_i32 : i32, i32
  }
  func.func @transform_4(%arg0: i32, %arg1: i32) -> (i32, i32) {
    %c0_i32 = arith.constant 0 : i32
    %c0_i32_0 = arith.constant 0 : i32
    return %arg0, %c0_i32 : i32, i32
  }
}

</mosaic_0001>

<llo_original>
// kernel: tpu_custom_call.1
$region0: #{tpu_custom_call.1}
  #allocation0 [shape = 'u32[]', space=smem, size = 0x4, offset = 0x4, fixed_abs, tag = 'smem constant byte address 0x4 - core index']
  #allocation1 [shape = 'u32[144,128]{1,0:T(1,128)}', space=vmem, size = 0x12000, scoped, tag = 'internal scratch']
  #allocation2 [shape = 'f32[128,256]{1,0:T(8,128)}', space=vmem, size = 0x20000, scoped, tag = 'scratch operand']
  #allocation3 [shape = 'f32[1,1]{1,0:T(1,128)S(6)}', space=smem, size = 0x200, scoped, tag = 'scoped memory for tpu_custom_call.1']
  %s0 = inlined_call_operand.<no memory space> [shape: f32[1,1], index: 0, kind: input, shape index: {}]
  %s1 = inlined_call_operand.vmem [shape: f32[128,1], index: 1, kind: input, shape index: {}]
  %s2 = inlined_call_operand.vmem [shape: f32[128,128], index: 2, kind: input, shape index: {}]
  %s3 = inlined_call_operand.hbm [shape: f32[128,256], index: 3, kind: input, shape index: {}]
  %s4 = inlined_call_operand.hbm [shape: f32[128,128], index: 4, kind: output, shape index: {}]
  %s5 = sld [smem:[#allocation0]]
  $region38: #{tpu_custom_call.1} parent=0
    _
  %s7 = ssub.s32 1, %s5
  %s8 = scalar_select 0, %s7, %s5
  %9 = sst [smem:[#allocation3]] %s0
  $region1: #{tpu_custom_call.1} parent=0
    #allocation4 [shape = 'u8[131072]{0}', space=vmem, size = 0x20000, scoped, tag = 'input window, operand 3, single buffered']
    #allocation5 [shape = 's32[1]{0}', space=sflag, size = 0x4, scoped, tag = 'scoped memory for tpu_custom_call.1']
    #allocation6 [shape = 's32[1]{0}', space=sflag, size = 0x4, scoped, tag = 'scoped memory for tpu_custom_call.1']
    #allocation7 [shape = 'u8[65536]{0}', space=vmem, size = 0x10000, scoped, tag = 'output window, operand 0, single buffered']
    %10 = vsyncpa [#allocation5], 0
    %11 = vsyncpa [#allocation6], 0
    // Predicated region
    $region2: #{tpu_custom_call.1} parent=1 // pred_check
      _
    $region3: #{tpu_custom_call.1} parent=1 // pred_check_branch
      %13 = sbr.rel (0) target = $region5
    $region4: #{tpu_custom_call.1} parent=1 // pred_region
      _
    $region5: #{tpu_custom_call.1} parent=1 // pred_fallthru
      _
    // Predicated region
    $region6: #{tpu_custom_call.1} parent=1 // pred_check
      _
    $region7: #{tpu_custom_call.1} parent=1 // pred_check_branch
      %15 = sbr.rel (0) target = $region9
    $region8: #{tpu_custom_call.1} parent=1 // pred_region
      _
    $region9: #{tpu_custom_call.1} parent=1 // pred_fallthru
      _
    // Predicated region
    $region10: #{tpu_custom_call.1} parent=1 // pred_check
      _
    $region11: #{tpu_custom_call.1} parent=1 // pred_check_branch
      %17 = sbr.rel (0) target = $region13
    $region12: #{tpu_custom_call.1} parent=1 // pred_region
      _
    $region13: #{tpu_custom_call.1} parent=1 // pred_fallthru
      _
    // Predicated region
    $region14: #{tpu_custom_call.1} parent=1 // pred_check
      _
    $region15: #{tpu_custom_call.1} parent=1 // pred_check_branch
      %19 = sbr.rel (0) target = $region17
    $region16: #{tpu_custom_call.1} parent=1 // pred_region
      %s21 = ssub.s32 4096, 4096
      %22 = vsyncadd [#allocation5], %s21
      %s23 = sshll.u32 [#allocation4], 4
      %s24 = int_to_ptr.vmem [resolvable:$true] %s23
      %29 = dma.hbm_to_vmem [thread:$0]  %s3, 4096, %s24, [#allocation5], 256, 256, 16
    $region17: #{tpu_custom_call.1} parent=1 // pred_fallthru
      _
    // Predicated region
    $region18: #{tpu_custom_call.1} parent=1 // pred_check
      _
    $region19: #{tpu_custom_call.1} parent=1 // pred_check_branch
      %31 = sbr.rel (0) target = $region21
    $region20: #{tpu_custom_call.1} parent=1 // pred_region
      %32 = dma.done [#allocation5], 4096
    $region21: #{tpu_custom_call.1} parent=1 // pred_fallthru
      _
    %p33 = scmp.eq.s32.totalorder 0, 0
    // Predicated region
    $region22: #{tpu_custom_call.1} parent=1 // pred_check
      %p34 = pneg %p33
    $region23: #{tpu_custom_call.1} parent=1 // pred_check_branch
      %36 = sbr.rel (%p34) target = $region25
    $region24: #{tpu_custom_call.1} parent=1 // pred_region
      %37 = vst [vmem:[#allocation2] sm:$0xff] 0.0
      %38 = vst [vmem:[#allocation2 + $0x8] sm:$0xff] 0.0
      %39 = vst [vmem:[#allocation2 + $0x10] sm:$0xff] 0.0
      %40 = vst [vmem:[#allocation2 + $0x18] sm:$0xff] 0.0
      %41 = vst [vmem:[#allocation2 + $0x20] sm:$0xff] 0.0
      %42 = vst [vmem:[#allocation2 + $0x28] sm:$0xff] 0.0
      %43 = vst [vmem:[#allocation2 + $0x30] sm:$0xff] 0.0
      %44 = vst [vmem:[#allocation2 + $0x38] sm:$0xff] 0.0
      %45 = vst [vmem:[#allocation2 + $0x40] sm:$0xff] 0.0
      %46 = vst [vmem:[#allocation2 + $0x48] sm:$0xff] 0.0
      %47 = vst [vmem:[#allocation2 + $0x50] sm:$0xff] 0.0
      %48 = vst [vmem:[#allocation2 + $0x58] sm:$0xff] 0.0
      %49 = vst [vmem:[#allocation2 + $0x60] sm:$0xff] 0.0
      %50 = vst [vmem:[#allocation2 + $0x68] sm:$0xff] 0.0
      %51 = vst [vmem:[#allocation2 + $0x70] sm:$0xff] 0.0
      %52 = vst [vmem:[#allocation2 + $0x78] sm:$0xff] 0.0
      %53 = vst [vmem:[#allocation2 + $0x80] sm:$0xff] 0.0
      %54 = vst [vmem:[#allocation2 + $0x88] sm:$0xff] 0.0
      %55 = vst [vmem:[#allocation2 + $0x90] sm:$0xff] 0.0
      %56 = vst [vmem:[#allocation2 + $0x98] sm:$0xff] 0.0
      %57 = vst [vmem:[#allocation2 + $0xa0] sm:$0xff] 0.0
      %58 = vst [vmem:[#allocation2 + $0xa8] sm:$0xff] 0.0
      %59 = vst [vmem:[#allocation2 + $0xb0] sm:$0xff] 0.0
      %60 = vst [vmem:[#allocation2 + $0xb8] sm:$0xff] 0.0
      %61 = vst [vmem:[#allocation2 + $0xc0] sm:$0xff] 0.0
      %62 = vst [vmem:[#allocation2 + $0xc8] sm:$0xff] 0.0
      %63 = vst [vmem:[#allocation2 + $0xd0] sm:$0xff] 0.0
      %64 = vst [vmem:[#allocation2 + $0xd8] sm:$0xff] 0.0
      %65 = vst [vmem:[#allocation2 + $0xe0] sm:$0xff] 0.0
      %66 = vst [vmem:[#allocation2 + $0xe8] sm:$0xff] 0.0
      %67 = vst [vmem:[#allocation2 + $0xf0] sm:$0xff] 0.0
      %68 = vst [vmem:[#allocation2 + $0xf8] sm:$0xff] 0.0
    $region25: #{tpu_custom_call.1} parent=1 // pred_fallthru
      _
    %v69 = vld [vmem:[#allocation2] sm:$0xff]
    %v70 = vld [vmem:[#allocation2 + $0x8] sm:$0xff]
    %v71 = vld [vmem:[#allocation2 + $0x10] sm:$0xff]
    %v72 = vld [vmem:[#allocation2 + $0x18] sm:$0xff]
    %v73 = vld [vmem:[#allocation2 + $0x20] sm:$0xff]
    %v74 = vld [vmem:[#allocation2 + $0x28] sm:$0xff]
    %v75 = vld [vmem:[#allocation2 + $0x30] sm:$0xff]
    %v76 = vld [vmem:[#allocation2 + $0x38] sm:$0xff]
    %v77 = vld [vmem:[#allocation2 + $0x40] sm:$0xff]
    %v78 = vld [vmem:[#allocation2 + $0x48] sm:$0xff]
    %v79 = vld [vmem:[#allocation2 + $0x50] sm:$0xff]
    %v80 = vld [vmem:[#allocation2 + $0x58] sm:$0xff]
    %v81 = vld [vmem:[#allocation2 + $0x60] sm:$0xff]
    %v82 = vld [vmem:[#allocation2 + $0x68] sm:$0xff]
    %v83 = vld [vmem:[#allocation2 + $0x70] sm:$0xff]
    %v84 = vld [vmem:[#allocation2 + $0x78] sm:$0xff]
    %v85 = vld [vmem:[#allocation2 + $0x80] sm:$0xff]
    %v86 = vld [vmem:[#allocation2 + $0x88] sm:$0xff]
    %v87 = vld [vmem:[#allocation2 + $0x90] sm:$0xff]
    %v88 = vld [vmem:[#allocation2 + $0x98] sm:$0xff]
    %v89 = vld [vmem:[#allocation2 + $0xa0] sm:$0xff]
    %v90 = vld [vmem:[#allocation2 + $0xa8] sm:$0xff]
    %v91 = vld [vmem:[#allocation2 + $0xb0] sm:$0xff]
    %v92 = vld [vmem:[#allocation2 + $0xb8] sm:$0xff]
    %v93 = vld [vmem:[#allocation2 + $0xc0] sm:$0xff]
    %v94 = vld [vmem:[#allocation2 + $0xc8] sm:$0xff]
    %v95 = vld [vmem:[#allocation2 + $0xd0] sm:$0xff]
    %v96 = vld [vmem:[#allocation2 + $0xd8] sm:$0xff]
    %v97 = vld [vmem:[#allocation2 + $0xe0] sm:$0xff]
    %v98 = vld [vmem:[#allocation2 + $0xe8] sm:$0xff]
    %v99 = vld [vmem:[#allocation2 + $0xf0] sm:$0xff]
    %v100 = vld [vmem:[#allocation2 + $0xf8] sm:$0xff]
    %v101 = vld [vmem:[%s2] sm:$0xff]
    %v102 = vld [vmem:[%s2 + $0x8] sm:$0xff]
    %v103 = vld [vmem:[%s2 + $0x10] sm:$0xff]
    %v104 = vld [vmem:[%s2 + $0x18] sm:$0xff]
    %v105 = vld [vmem:[%s2 + $0x20] sm:$0xff]
    %v106 = vld [vmem:[%s2 + $0x28] sm:$0xff]
    %v107 = vld [vmem:[%s2 + $0x30] sm:$0xff]
    %v108 = vld [vmem:[%s2 + $0x38] sm:$0xff]
    %v109 = vld [vmem:[%s2 + $0x40] sm:$0xff]
    %v110 = vld [vmem:[%s2 + $0x48] sm:$0xff]
    %v111 = vld [vmem:[%s2 + $0x50] sm:$0xff]
    %v112 = vld [vmem:[%s2 + $0x58] sm:$0xff]
    %v113 = vld [vmem:[%s2 + $0x60] sm:$0xff]
    %v114 = vld [vmem:[%s2 + $0x68] sm:$0xff]
    %v115 = vld [vmem:[%s2 + $0x70] sm:$0xff]
    %v116 = vld [vmem:[%s2 + $0x78] sm:$0xff]
    %v117 = vld [vmem:[#allocation4] sm:$0xff]
    %v118 = vld [vmem:[#allocation4 + $0x8] sm:$0xff]
    %v119 = vld [vmem:[#allocation4 + $0x10] sm:$0xff]
    %v120 = vld [vmem:[#allocation4 + $0x18] sm:$0xff]
    %v121 = vld [vmem:[#allocation4 + $0x20] sm:$0xff]
    %v122 = vld [vmem:[#allocation4 + $0x28] sm:$0xff]
    %v123 = vld [vmem:[#allocation4 + $0x30] sm:$0xff]
    %v124 = vld [vmem:[#allocation4 + $0x38] sm:$0xff]
    %v125 = vld [vmem:[#allocation4 + $0x40] sm:$0xff]
    %v126 = vld [vmem:[#allocation4 + $0x48] sm:$0xff]
    %v127 = vld [vmem:[#allocation4 + $0x50] sm:$0xff]
    %v128 = vld [vmem:[#allocation4 + $0x58] sm:$0xff]
    %v129 = vld [vmem:[#allocation4 + $0x60] sm:$0xff]
    %v130 = vld [vmem:[#allocation4 + $0x68] sm:$0xff]
    %v131 = vld [vmem:[#allocation4 + $0x70] sm:$0xff]
    %v132 = vld [vmem:[#allocation4 + $0x78] sm:$0xff]
    %v133 = vld [vmem:[#allocation4 + $0x80] sm:$0xff]
    %v134 = vld [vmem:[#allocation4 + $0x88] sm:$0xff]
    %v135 = vld [vmem:[#allocation4 + $0x90] sm:$0xff]
    %v136 = vld [vmem:[#allocation4 + $0x98] sm:$0xff]
    %v137 = vld [vmem:[#allocation4 + $0xa0] sm:$0xff]
    %v138 = vld [vmem:[#allocation4 + $0xa8] sm:$0xff]
    %v139 = vld [vmem:[#allocation4 + $0xb0] sm:$0xff]
    %v140 = vld [vmem:[#allocation4 + $0xb8] sm:$0xff]
    %v141 = vld [vmem:[#allocation4 + $0xc0] sm:$0xff]
    %v142 = vld [vmem:[#allocation4 + $0xc8] sm:$0xff]
    %v143 = vld [vmem:[#allocation4 + $0xd0] sm:$0xff]
    %v144 = vld [vmem:[#allocation4 + $0xd8] sm:$0xff]
    %v145 = vld [vmem:[#allocation4 + $0xe0] sm:$0xff]
    %v146 = vld [vmem:[#allocation4 + $0xe8] sm:$0xff]
    %v147 = vld [vmem:[#allocation4 + $0xf0] sm:$0xff]
    %v148 = vld [vmem:[#allocation4 + $0xf8] sm:$0xff]
    %149 = vxpose.xlu0.b32.start [1/16] %v101, 128
    %150 = vxpose.xlu0.b32.cont [2/16] %v102, 128
    %151 = vxpose.xlu0.b32.cont [3/16] %v103, 128
    %152 = vxpose.xlu0.b32.cont [4/16] %v104, 128
    %153 = vxpose.xlu0.b32.cont [5/16] %v105, 128
    %154 = vxpose.xlu0.b32.cont [6/16] %v106, 128
    %155 = vxpose.xlu0.b32.cont [7/16] %v107, 128
    %156 = vxpose.xlu0.b32.cont [8/16] %v108, 128
    %157 = vxpose.xlu0.b32.cont [9/16] %v109, 128
    %158 = vxpose.xlu0.b32.cont [10/16] %v110, 128
    %159 = vxpose.xlu0.b32.cont [11/16] %v111, 128
    %160 = vxpose.xlu0.b32.cont [12/16] %v112, 128
    %161 = vxpose.xlu0.b32.cont [13/16] %v113, 128
    %162 = vxpose.xlu0.b32.cont [14/16] %v114, 128
    %163 = vxpose.xlu0.b32.cont [15/16] %v115, 128
    %164 = vxpose.xlu0.b32.end [16/16] %v116, 128
    %v165 = vpop.trf.xlu0
    %v166 = vpop.trf.xlu0
    %v167 = vpop.trf.xlu0
    %v168 = vpop.trf.xlu0
    %v169 = vpop.trf.xlu0
    %v170 = vpop.trf.xlu0
    %v171 = vpop.trf.xlu0
    %v172 = vpop.trf.xlu0
    %v173 = vpop.trf.xlu0
    %v174 = vpop.trf.xlu0
    %v175 = vpop.trf.xlu0
    %v176 = vpop.trf.xlu0
    %v177 = vpop.trf.xlu0
    %v178 = vpop.trf.xlu0
    %v179 = vpop.trf.xlu0
    %v180 = vpop.trf.xlu0
    %181 = vmatprep.subr.mxu0 %v118
    %182 = vmatpush1.msra.mxu0 %v117
    %183 = vmatprep.subr.mxu0 %v120
    %184 = vmatpush1.msra.mxu0 %v119
    %185 = vmatprep.subr.mxu0 %v122
    %186 = vmatpush1.msra.mxu0 %v121
    %187 = vmatprep.subr.mxu0 %v124
    %188 = vmatpush1.msra.mxu0 %v123
    %189 = vmatprep.subr.mxu0 %v126
    %190 = vmatpush1.msra.mxu0 %v125
    %191 = vmatprep.subr.mxu0 %v128
    %192 = vmatpush1.msra.mxu0 %v127
    %193 = vmatprep.subr.mxu0 %v130
    %194 = vmatpush1.msra.mxu0 %v129
    %195 = vmatprep.subr.mxu0 %v132
    %196 = vmatpush1.msra.mxu0 %v131
    %197 = vmatprep.subr.mxu0 %v134
    %198 = vmatpush1.msra.mxu0 %v133
    %199 = vmatprep.subr.mxu0 %v136
    %200 = vmatpush1.msra.mxu0 %v135
    %201 = vmatprep.subr.mxu0 %v138
    %202 = vmatpush1.msra.mxu0 %v137
    %203 = vmatprep.subr.mxu0 %v140
    %204 = vmatpush1.msra.mxu0 %v139
    %205 = vmatprep.subr.mxu0 %v142
    %206 = vmatpush1.msra.mxu0 %v141
    %207 = vmatprep.subr.mxu0 %v144
    %208 = vmatpush1.msra.mxu0 %v143
    %209 = vmatprep.subr.mxu0 %v146
    %210 = vmatpush1.msra.mxu0 %v145
    %211 = vmatprep.subr.mxu0 %v148
    %212 = vmatpush1.msra.mxu0 %v147
    %213 = vmatprep.subr.mxu0 0.0
    %214 = vmatpush1.msra.mxu0 0.0
    %215 = vmatprep.subr.mxu0 0.0
    %216 = vmatpush1.msra.mxu0 0.0
    %217 = vmatprep.subr.mxu0 0.0
    %218 = vmatpush1.msra.mxu0 0.0
    %219 = vmatprep.subr.mxu0 0.0
    %220 = vmatpush1.msra.mxu0 0.0
    %221 = vmatprep.subr.mxu0 0.0
    %222 = vmatpush1.msra.mxu0 0.0
    %223 = vmatprep.subr.mxu0 0.0
    %224 = vmatpush1.msra.mxu0 0.0
    %225 = vmatprep.subr.mxu0 0.0
    %226 = vmatpush1.msra.mxu0 0.0
    %227 = vmatprep.subr.mxu0 0.0
    %228 = vmatpush1.msra.mxu0 0.0
    %229 = vmatprep.subr.mxu0 0.0
    %230 = vmatpush1.msra.mxu0 0.0
    %231 = vmatprep.subr.mxu0 0.0
    %232 = vmatpush1.msra.mxu0 0.0
    %233 = vmatprep.subr.mxu0 0.0
    %234 = vmatpush1.msra.mxu0 0.0
    %235 = vmatprep.subr.mxu0 0.0
    %236 = vmatpush1.msra.mxu0 0.0
    %237 = vmatprep.subr.mxu0 0.0
    %238 = vmatpush1.msra.mxu0 0.0
    %239 = vmatprep.subr.mxu0 0.0
    %240 = vmatpush1.msra.mxu0 0.0
    %241 = vmatprep.subr.mxu0 0.0
    %242 = vmatpush1.msra.mxu0 0.0
    %243 = vmatprep.subr.mxu0 0.0
    %244 = vmatpush1.msra.mxu0 0.0
    %245 = vmatprep.mubr.f32.mxu0 0.0
    %246 = vmatmul.mubr.f32.gmra.mrb[0].mxu0 %v165
    %v247 = vpop.f32.mrb[0].mxu0
    %v248 = vadd.f32 0.0, %v247
    %v249 = vpop.f32.mrb[0].mxu0
    %v250 = vadd.f32 0.0, %v249
    %251 = vmatprep.mubr.f32.mxu0 0.0
    %252 = vmatmul.mubr.f32.gmra.mrb[0].mxu0 %v166
    %v253 = vpop.f32.mrb[0].mxu0
    %v254 = vadd.f32 0.0, %v253
    %v255 = vpop.f32.mrb[0].mxu0
    %v256 = vadd.f32 0.0, %v255
    %257 = vmatprep.mubr.f32.mxu0 0.0
    %258 = vmatmul.mubr.f32.gmra.mrb[0].mxu0 %v167
    %v259 = vpop.f32.mrb[0].mxu0
    %v260 = vadd.f32 0.0, %v259
    %v261 = vpop.f32.mrb[0].mxu0
    %v262 = vadd.f32 0.0, %v261
    %263 = vmatprep.mubr.f32.mxu0 0.0
    %264 = vmatmul.mubr.f32.gmra.mrb[0].mxu0 %v168
    %v265 = vpop.f32.mrb[0].mxu0
    %v266 = vadd.f32 0.0, %v265
    %v267 = vpop.f32.mrb[0].mxu0
    %v268 = vadd.f32 0.0, %v267
    %269 = vmatprep.mubr.f32.mxu0 0.0
    %270 = vmatmul.mubr.f32.gmra.mrb[0].mxu0 %v169
    %v271 = vpop.f32.mrb[0].mxu0
    %v272 = vadd.f32 0.0, %v271
    %v273 = vpop.f32.mrb[0].mxu0
    %v274 = vadd.f32 0.0, %v273
    %275 = vmatprep.mubr.f32.mxu0 0.0
    %276 = vmatmul.mubr.f32.gmra.mrb[0].mxu0 %v170
    %v277 = vpop.f32.mrb[0].mxu0
    %v278 = vadd.f32 0.0, %v277
    %v279 = vpop.f32.mrb[0].mxu0
    %v280 = vadd.f32 0.0, %v279
    %281 = vmatprep.mubr.f32.mxu0 0.0
    %282 = vmatmul.mubr.f32.gmra.mrb[0].mxu0 %v171
    %v283 = vpop.f32.mrb[0].mxu0
    %v284 = vadd.f32 0.0, %v283
    %v285 = vpop.f32.mrb[0].mxu0
    %v286 = vadd.f32 0.0, %v285
    %287 = vmatprep.mubr.f32.mxu0 0.0
    %288 = vmatmul.mubr.f32.gmra.mrb[0].mxu0 %v172
    %v289 = vpop.f32.mrb[0].mxu0
    %v290 = vadd.f32 0.0, %v289
    %v291 = vpop.f32.mrb[0].mxu0
    %v292 = vadd.f32 0.0, %v291
    %293 = vmatprep.mubr.f32.mxu0 0.0
    %294 = vmatmul.mubr.f32.gmra.mrb[0].mxu0 %v173
    %v295 = vpop.f32.mrb[0].mxu0
    %v296 = vadd.f32 0.0, %v295
    %v297 = vpop.f32.mrb[0].mxu0
    %v298 = vadd.f32 0.0, %v297
    %299 = vmatprep.mubr.f32.mxu0 0.0
    %300 = vmatmul.mubr.f32.gmra.mrb[0].mxu0 %v174
    %v301 = vpop.f32.mrb[0].mxu0
    %v302 = vadd.f32 0.0, %v301
    %v303 = vpop.f32.mrb[0].mxu0
    %v304 = vadd.f32 0.0, %v303
    %305 = vmatprep.mubr.f32.mxu0 0.0
    %306 = vmatmul.mubr.f32.gmra.mrb[0].mxu0 %v175
    %v307 = vpop.f32.mrb[0].mxu0
    %v308 = vadd.f32 0.0, %v307
    %v309 = vpop.f32.mrb[0].mxu0
    %v310 = vadd.f32 0.0, %v309
    %311 = vmatprep.mubr.f32.mxu0 0.0
    %312 = vmatmul.mubr.f32.gmra.mrb[0].mxu0 %v176
    %v313 = vpop.f32.mrb[0].mxu0
    %v314 = vadd.f32 0.0, %v313
    %v315 = vpop.f32.mrb[0].mxu0
    %v316 = vadd.f32 0.0, %v315
    %317 = vmatprep.mubr.f32.mxu0 0.0
    %318 = vmatmul.mubr.f32.gmra.mrb[0].mxu0 %v177
    %v319 = vpop.f32.mrb[0].mxu0
    %v320 = vadd.f32 0.0, %v319
    %v321 = vpop.f32.mrb[0].mxu0
    %v322 = vadd.f32 0.0, %v321
    %323 = vmatprep.mubr.f32.mxu0 0.0
    %324 = vmatmul.mubr.f32.gmra.mrb[0].mxu0 %v178
    %v325 = vpop.f32.mrb[0].mxu0
    %v326 = vadd.f32 0.0, %v325
    %v327 = vpop.f32.mrb[0].mxu0
    %v328 = vadd.f32 0.0, %v327
    %329 = vmatprep.mubr.f32.mxu0 0.0
    %330 = vmatmul.mubr.f32.gmra.mrb[0].mxu0 %v179
    %v331 = vpop.f32.mrb[0].mxu0
    %v332 = vadd.f32 0.0, %v331
    %v333 = vpop.f32.mrb[0].mxu0
    %v334 = vadd.f32 0.0, %v333
    %335 = vmatprep.mubr.f32.mxu0 0.0
    %336 = vmatmul.mubr.f32.gmra.mrb[0].mxu0 %v180
    %v337 = vpop.f32.mrb[0].mxu0
    %v338 = vadd.f32 0.0, %v337
    %v339 = vpop.f32.mrb[0].mxu0
    %v340 = vadd.f32 0.0, %v339
    %341 = vdwg.mxu0
    %v342 = vadd.f32 %v69, %v248
    %v343 = vadd.f32 %v70, %v250
    %v344 = vadd.f32 %v71, %v254
    %v345 = vadd.f32 %v72, %v256
    %v346 = vadd.f32 %v73, %v260
    %v347 = vadd.f32 %v74, %v262
    %v348 = vadd.f32 %v75, %v266
    %v349 = vadd.f32 %v76, %v268
    %v350 = vadd.f32 %v77, %v272
    %v351 = vadd.f32 %v78, %v274
    %v352 = vadd.f32 %v79, %v278
    %v353 = vadd.f32 %v80, %v280
    %v354 = vadd.f32 %v81, %v284
    %v355 = vadd.f32 %v82, %v286
    %v356 = vadd.f32 %v83, %v290
    %v357 = vadd.f32 %v84, %v292
    %v358 = vadd.f32 %v85, %v296
    %v359 = vadd.f32 %v86, %v298
    %v360 = vadd.f32 %v87, %v302
    %v361 = vadd.f32 %v88, %v304
    %v362 = vadd.f32 %v89, %v308
    %v363 = vadd.f32 %v90, %v310
    %v364 = vadd.f32 %v91, %v314
    %v365 = vadd.f32 %v92, %v316
    %v366 = vadd.f32 %v93, %v320
    %v367 = vadd.f32 %v94, %v322
    %v368 = vadd.f32 %v95, %v326
    %v369 = vadd.f32 %v96, %v328
    %v370 = vadd.f32 %v97, %v332
    %v371 = vadd.f32 %v98, %v334
    %v372 = vadd.f32 %v99, %v338
    %v373 = vadd.f32 %v100, %v340
    %374 = vst [vmem:[#allocation2] sm:$0xff] %v342
    %375 = vst [vmem:[#allocation2 + $0x8] sm:$0xff] %v343
    %376 = vst [vmem:[#allocation2 + $0x10] sm:$0xff] %v344
    %377 = vst [vmem:[#allocation2 + $0x18] sm:$0xff] %v345
    %378 = vst [vmem:[#allocation2 + $0x20] sm:$0xff] %v346
    %379 = vst [vmem:[#allocation2 + $0x28] sm:$0xff] %v347
    %380 = vst [vmem:[#allocation2 + $0x30] sm:$0xff] %v348
    %381 = vst [vmem:[#allocation2 + $0x38] sm:$0xff] %v349
    %382 = vst [vmem:[#allocation2 + $0x40] sm:$0xff] %v350
    %383 = vst [vmem:[#allocation2 + $0x48] sm:$0xff] %v351
    %384 = vst [vmem:[#allocation2 + $0x50] sm:$0xff] %v352
    %385 = vst [vmem:[#allocation2 + $0x58] sm:$0xff] %v353
    %386 = vst [vmem:[#allocation2 + $0x60] sm:$0xff] %v354
    %387 = vst [vmem:[#allocation2 + $0x68] sm:$0xff] %v355
    %388 = vst [vmem:[#allocation2 + $0x70] sm:$0xff] %v356
    %389 = vst [vmem:[#allocation2 + $0x78] sm:$0xff] %v357
    %390 = vst [vmem:[#allocation2 + $0x80] sm:$0xff] %v358
    %391 = vst [vmem:[#allocation2 + $0x88] sm:$0xff] %v359
    %392 = vst [vmem:[#allocation2 + $0x90] sm:$0xff] %v360
    %393 = vst [vmem:[#allocation2 + $0x98] sm:$0xff] %v361
    %394 = vst [vmem:[#allocation2 + $0xa0] sm:$0xff] %v362
    %395 = vst [vmem:[#allocation2 + $0xa8] sm:$0xff] %v363
    %396 = vst [vmem:[#allocation2 + $0xb0] sm:$0xff] %v364
    %397 = vst [vmem:[#allocation2 + $0xb8] sm:$0xff] %v365
    %398 = vst [vmem:[#allocation2 + $0xc0] sm:$0xff] %v366
    %399 = vst [vmem:[#allocation2 + $0xc8] sm:$0xff] %v367
    %400 = vst [vmem:[#allocation2 + $0xd0] sm:$0xff] %v368
    %401 = vst [vmem:[#allocation2 + $0xd8] sm:$0xff] %v369
    %402 = vst [vmem:[#allocation2 + $0xe0] sm:$0xff] %v370
    %403 = vst [vmem:[#allocation2 + $0xe8] sm:$0xff] %v371
    %404 = vst [vmem:[#allocation2 + $0xf0] sm:$0xff] %v372
    %405 = vst [vmem:[#allocation2 + $0xf8] sm:$0xff] %v373
    // Predicated region
    $region26: #{tpu_custom_call.1} parent=1 // pred_check
      %p406 = pneg %p33
    $region27: #{tpu_custom_call.1} parent=1 // pred_check_branch
      %408 = sbr.rel (%p406) target = $region29
    $region28: #{tpu_custom_call.1} parent=1 // pred_region
      %s409 = sld [smem:[#allocation3]]
      %v410 = vld [vmem:[%s1] sm:$0xff]
      %v411 = vld [vmem:[%s1 + $0x8] sm:$0xff]
      %v412 = vld [vmem:[%s1 + $0x10] sm:$0xff]
      %v413 = vld [vmem:[%s1 + $0x18] sm:$0xff]
      %v414 = vld [vmem:[%s1 + $0x20] sm:$0xff]
      %v415 = vld [vmem:[%s1 + $0x28] sm:$0xff]
      %v416 = vld [vmem:[%s1 + $0x30] sm:$0xff]
      %v417 = vld [vmem:[%s1 + $0x38] sm:$0xff]
      %v418 = vld [vmem:[%s1 + $0x40] sm:$0xff]
      %v419 = vld [vmem:[%s1 + $0x48] sm:$0xff]
      %v420 = vld [vmem:[%s1 + $0x50] sm:$0xff]
      %v421 = vld [vmem:[%s1 + $0x58] sm:$0xff]
      %v422 = vld [vmem:[%s1 + $0x60] sm:$0xff]
      %v423 = vld [vmem:[%s1 + $0x68] sm:$0xff]
      %v424 = vld [vmem:[%s1 + $0x70] sm:$0xff]
      %v425 = vld [vmem:[%s1 + $0x78] sm:$0xff]
      %v426 = vstv %s409
      %v427 = vmul.f32 %v426, %v410
      %v428 = vmul.f32 %v426, %v411
      %v429 = vmul.f32 %v426, %v412
      %v430 = vmul.f32 %v426, %v413
      %v431 = vmul.f32 %v426, %v414
      %v432 = vmul.f32 %v426, %v415
      %v433 = vmul.f32 %v426, %v416
      %v434 = vmul.f32 %v426, %v417
      %v435 = vmul.f32 %v426, %v418
      %v436 = vmul.f32 %v426, %v419
      %v437 = vmul.f32 %v426, %v420
      %v438 = vmul.f32 %v426, %v421
      %v439 = vmul.f32 %v426, %v422
      %v440 = vmul.f32 %v426, %v423
      %v441 = vmul.f32 %v426, %v424
      %v442 = vmul.f32 %v426, %v425
      %v443 = vand.u32 2147483647, %v427
      %vm444 = vcmp.le.f32.partialorder %v443, 0.7853982
      %vm445 = vcmp.lt.s32.totalorder %v427, 0
      %v446 = vand.u32 %v427, 2139095040
      %v447 = vshrl.u32 %v446, 23
      %v448 = vsub.s32 %v447, 127
      %v449 = vand.u32 2147483647, %v427
      %v450 = vand.u32 %v449, 8388607
      %v451 = vor.u32 %v450, 8388608
      %v452 = vsub.s32 0, %v451
      %v453 = vadd.s32 %v448, 1
      %vm454 = vcmp.gt.s32.totalorder %v453, 0
      %v455 = vsel %vm454, %v453, 0
      %v456 = vshrl.u32 %v455, 5
      %v457 = vand.u32 %v455, 31
      %v458 = vsub.s32 32, %v457
      %v459 = vshrl.u32 683565275, %v458
      %v460 = vshll.u32 683565275, %v457
      %v461 = vshrl.u32 2475754826, %v458
      %v462 = vor.u32 %v460, %v461
      %v463 = vshll.u32 2475754826, %v457
      %v464 = vshrl.u32 2131351028, %v458
      %v465 = vor.u32 %v463, %v464
      %v466 = vshll.u32 2131351028, %v457
      %v467 = vshrl.u32 2102212464, %v458
      %v468 = vor.u32 %v466, %v467
      %v469 = vshll.u32 2102212464, %v457
      %v470 = vshrl.u32 920167782, %v458
      %v471 = vor.u32 %v469, %v470
      %v472 = vshll.u32 920167782, %v457
      %v473 = vshrl.u32 1326507024, %v458
      %v474 = vor.u32 %v472, %v473
      %vm475 = vcmp.lt.s32.totalorder %v456, 1
      %vm476 = vcmp.lt.s32.totalorder %v456, 2
      %vm477 = vcmp.lt.s32.totalorder %v456, 3
      %vm478 = vcmp.lt.s32.totalorder %v456, 4
      %v479 = vsel %vm475, %v459, %v462
      %v480 = vsel %vm478, %v468, 2102212464
      %v481 = vsel %vm477, %v465, %v480
      %v482 = vsel %vm476, %v479, %v481
      %v483 = vsel %vm475, %v462, %v465
      %v484 = vsel %vm478, %v471, 920167782
      %v485 = vsel %vm477, %v468, %v484
      %v486 = vsel %vm476, %v483, %v485
      %v487 = vsel %vm475, %v465, %v468
      %v488 = vsel %vm478, %v474, 1326507024
      %v489 = vsel %vm477, %v471, %v488
      %v490 = vsel %vm476, %v487, %v489
      %v491 = vshll.u32 %v451, 8
      %v492 = vmul.u32.u64.compose %v491, %v490
      %v493 = vextract.low.u32 %v492
      %v494 = vextract.high.u32 %v492
      %v495 = vmul.u32.u64.compose %v491, %v486
      %v496 = vextract.low.u32 %v495
      %v497 = vextract.high.u32 %v495
      %v498 = vmul.u32 %v491, %v482
      %v499 = vadd.s32 %v494, %v496
      %vm500 = vc.u32 %v494, %v496
      %v501 = vadd.s32 %v497, 1
      %v502 = vsel %vm500, %v501, %v497
      %v503 = vadd.s32 %v498, %v502
      %v504 = vadd.s32 %v503, 536870912
      %v505 = vshrl.u32 %v504, 30
      %v506 = vshll.u32 %v505, 30
      %v507 = vsub.s32 %v503, %v506
      %vm508 = vcmp.lt.s32.totalorder %v507, 0
      %v509 = vsub.s32 0, %v507
      %v510 = vsel %vm508, %v509, %v507
      %v511 = vclz %v510
      %v512 = vsub.s32 %v511, 2
      %vm513 = vcmp.gt.s32.totalorder 0, %v512
      %v514 = vsel %vm513, 0, %v512
      %v515 = vsub.s32 32, %v514
      %v516 = vshll.u32 %v507, %v514
      %v517 = vshrl.u32 %v499, %v515
      %v518 = vor.u32 %v516, %v517
      %v519 = vsub.s32 4294967266, %v514
      %v520 = vadd.s32 %v519, 127
      %v521 = vshll.u32 %v520, 23
      %v522 = vor.u32 4788187, %v521
      %v523 = vand.u32 2147483647, %v522
      %v525 = vcvt.s32.f32 %v518
      %v526 = vmul.f32 %v525, %v523
      %v527 = vxor.u32 %v526, 2147483648
      %v528 = vsel %vm445, %v527, %v526
      %v529 = vsub.s32 4, %v505
      %v530 = vsel %vm445, %v529, %v505
      %v531 = vsel %vm444, %v427, %v528
      %v532 = vsel %vm444, 0, %v530
      %v533 = vcosq.f32.pop %v531
      %v534 = vsinq.f32.pop %v531
      %vm535 = vweird.f32 %v427
      %v536 = vand.u32 %v532, 3
      %vm537 = vcmp.lt.s32.totalorder %v536, 2
      %vm538 = vcmp.eq.s32.totalorder %v536, 0
      %v539 = vxor.u32 %v534, 2147483648
      %v540 = vsel %vm538, %v533, %v539
      %vm541 = vcmp.eq.s32.totalorder %v536, 2
      %v542 = vxor.u32 %v533, 2147483648
      %v543 = vsel %vm541, %v542, %v534
      %v544 = vsel %vm537, %v540, %v543
      %v545 = vsel %vm535, nan, %v544
      %v546 = vand.u32 2147483647, %v428
      %vm547 = vcmp.le.f32.partialorder %v546, 0.7853982
      %vm548 = vcmp.lt.s32.totalorder %v428, 0
      %v549 = vand.u32 %v428, 2139095040
      %v550 = vshrl.u32 %v549, 23
      %v551 = vsub.s32 %v550, 127
      %v552 = vand.u32 2147483647, %v428
      %v553 = vand.u32 %v552, 8388607
      %v554 = vor.u32 %v553, 8388608
      %v555 = vsub.s32 0, %v554
      %v556 = vadd.s32 %v551, 1
      %vm557 = vcmp.gt.s32.totalorder %v556, 0
      %v558 = vsel %vm557, %v556, 0
      %v559 = vshrl.u32 %v558, 5
      %v560 = vand.u32 %v558, 31
      %v561 = vsub.s32 32, %v560
      %v562 = vshrl.u32 683565275, %v561
      %v563 = vshll.u32 683565275, %v560
      %v564 = vshrl.u32 2475754826, %v561
      %v565 = vor.u32 %v563, %v564
      %v566 = vshll.u32 2475754826, %v560
      %v567 = vshrl.u32 2131351028, %v561
      %v568 = vor.u32 %v566, %v567
      %v569 = vshll.u32 2131351028, %v560
      %v570 = vshrl.u32 2102212464, %v561
      %v571 = vor.u32 %v569, %v570
      %v572 = vshll.u32 2102212464, %v560
      %v573 = vshrl.u32 920167782, %v561
      %v574 = vor.u32 %v572, %v573
      %v575 = vshll.u32 920167782, %v560
      %v576 = vshrl.u32 1326507024, %v561
      %v577 = vor.u32 %v575, %v576
      %vm578 = vcmp.lt.s32.totalorder %v559, 1
      %vm579 = vcmp.lt.s32.totalorder %v559, 2
      %vm580 = vcmp.lt.s32.totalorder %v559, 3
      %vm581 = vcmp.lt.s32.totalorder %v559, 4
      %v582 = vsel %vm578, %v562, %v565
      %v583 = vsel %vm581, %v571, 2102212464
      %v584 = vsel %vm580, %v568, %v583
      %v585 = vsel %vm579, %v582, %v584
      %v586 = vsel %vm578, %v565, %v568
      %v587 = vsel %vm581, %v574, 920167782
      %v588 = vsel %vm580, %v571, %v587
      %v589 = vsel %vm579, %v586, %v588
      %v590 = vsel %vm578, %v568, %v571
      %v591 = vsel %vm581, %v577, 1326507024
      %v592 = vsel %vm580, %v574, %v591
      %v593 = vsel %vm579, %v590, %v592
      %v594 = vshll.u32 %v554, 8
      %v595 = vmul.u32.u64.compose %v594, %v593
      %v596 = vextract.low.u32 %v595
      %v597 = vextract.high.u32 %v595
      %v598 = vmul.u32.u64.compose %v594, %v589
      %v599 = vextract.low.u32 %v598
      %v600 = vextract.high.u32 %v598
      %v601 = vmul.u32 %v594, %v585
      %v602 = vadd.s32 %v597, %v599
      %vm603 = vc.u32 %v597, %v599
      %v604 = vadd.s32 %v600, 1
      %v605 = vsel %vm603, %v604, %v600
      %v606 = vadd.s32 %v601, %v605
      %v607 = vadd.s32 %v606, 536870912
      %v608 = vshrl.u32 %v607, 30
      %v609 = vshll.u32 %v608, 30
      %v610 = vsub.s32 %v606, %v609
      %vm611 = vcmp.lt.s32.totalorder %v610, 0
      %v612 = vsub.s32 0, %v610
      %v613 = vsel %vm611, %v612, %v610
      %v614 = vclz %v613
      %v615 = vsub.s32 %v614, 2
      %vm616 = vcmp.gt.s32.totalorder 0, %v615
      %v617 = vsel %vm616, 0, %v615
      %v618 = vsub.s32 32, %v617
      %v619 = vshll.u32 %v610, %v617
      %v620 = vshrl.u32 %v602, %v618
      %v621 = vor.u32 %v619, %v620
      %v622 = vsub.s32 4294967266, %v617
      %v623 = vadd.s32 %v622, 127
      %v624 = vshll.u32 %v623, 23
      %v625 = vor.u32 4788187, %v624
      %v626 = vand.u32 2147483647, %v625
      %v628 = vcvt.s32.f32 %v621
      %v629 = vmul.f32 %v628, %v626
      %v630 = vxor.u32 %v629, 2147483648
      %v631 = vsel %vm548, %v630, %v629
      %v632 = vsub.s32 4, %v608
      %v633 = vsel %vm548, %v632, %v608
      %v634 = vsel %vm547, %v428, %v631
      %v635 = vsel %vm547, 0, %v633
      %v636 = vcosq.f32.pop %v634
      %v637 = vsinq.f32.pop %v634
      %vm638 = vweird.f32 %v428
      %v639 = vand.u32 %v635, 3
      %vm640 = vcmp.lt.s32.totalorder %v639, 2
      %vm641 = vcmp.eq.s32.totalorder %v639, 0
      %v642 = vxor.u32 %v637, 2147483648
      %v643 = vsel %vm641, %v636, %v642
      %vm644 = vcmp.eq.s32.totalorder %v639, 2
      %v645 = vxor.u32 %v636, 2147483648
      %v646 = vsel %vm644, %v645, %v637
      %v647 = vsel %vm640, %v643, %v646
      %v648 = vsel %vm638, nan, %v647
      %v649 = vand.u32 2147483647, %v429
      %vm650 = vcmp.le.f32.partialorder %v649, 0.7853982
      %vm651 = vcmp.lt.s32.totalorder %v429, 0
      %v652 = vand.u32 %v429, 2139095040
      %v653 = vshrl.u32 %v652, 23
      %v654 = vsub.s32 %v653, 127
      %v655 = vand.u32 2147483647, %v429
      %v656 = vand.u32 %v655, 8388607
      %v657 = vor.u32 %v656, 8388608
      %v658 = vsub.s32 0, %v657
      %v659 = vadd.s32 %v654, 1
      %vm660 = vcmp.gt.s32.totalorder %v659, 0
      %v661 = vsel %vm660, %v659, 0
      %v662 = vshrl.u32 %v661, 5
      %v663 = vand.u32 %v661, 31
      %v664 = vsub.s32 32, %v663
      %v665 = vshrl.u32 683565275, %v664
      %v666 = vshll.u32 683565275, %v663
      %v667 = vshrl.u32 2475754826, %v664
      %v668 = vor.u32 %v666, %v667
      %v669 = vshll.u32 2475754826, %v663
      %v670 = vshrl.u32 2131351028, %v664
      %v671 = vor.u32 %v669, %v670
      %v672 = vshll.u32 2131351028, %v663
      %v673 = vshrl.u32 2102212464, %v664
      %v674 = vor.u32 %v672, %v673
      %v675 = vshll.u32 2102212464, %v663
      %v676 = vshrl.u32 920167782, %v664
      %v677 = vor.u32 %v675, %v676
      %v678 = vshll.u32 920167782, %v663
      %v679 = vshrl.u32 1326507024, %v664
      %v680 = vor.u32 %v678, %v679
      %vm681 = vcmp.lt.s32.totalorder %v662, 1
      %vm682 = vcmp.lt.s32.totalorder %v662, 2
      %vm683 = vcmp.lt.s32.totalorder %v662, 3
      %vm684 = vcmp.lt.s32.totalorder %v662, 4
      %v685 = vsel %vm681, %v665, %v668
      %v686 = vsel %vm684, %v674, 2102212464
      %v687 = vsel %vm683, %v671, %v686
      %v688 = vsel %vm682, %v685, %v687
      %v689 = vsel %vm681, %v668, %v671
      %v690 = vsel %vm684, %v677, 920167782
      %v691 = vsel %vm683, %v674, %v690
      %v692 = vsel %vm682, %v689, %v691
      %v693 = vsel %vm681, %v671, %v674
      %v694 = vsel %vm684, %v680, 1326507024
      %v695 = vsel %vm683, %v677, %v694
      %v696 = vsel %vm682, %v693, %v695
      %v697 = vshll.u32 %v657, 8
      %v698 = vmul.u32.u64.compose %v697, %v696
      %v699 = vextract.low.u32 %v698
      %v700 = vextract.high.u32 %v698
      %v701 = vmul.u32.u64.compose %v697, %v692
      %v702 = vextract.low.u32 %v701
      %v703 = vextract.high.u32 %v701
      %v704 = vmul.u32 %v697, %v688
      %v705 = vadd.s32 %v700, %v702
      %vm706 = vc.u32 %v700, %v702
      %v707 = vadd.s32 %v703, 1
      %v708 = vsel %vm706, %v707, %v703
      %v709 = vadd.s32 %v704, %v708
      %v710 = vadd.s32 %v709, 536870912
      %v711 = vshrl.u32 %v710, 30
      %v712 = vshll.u32 %v711, 30
      %v713 = vsub.s32 %v709, %v712
      %vm714 = vcmp.lt.s32.totalorder %v713, 0
      %v715 = vsub.s32 0, %v713
      %v716 = vsel %vm714, %v715, %v713
      %v717 = vclz %v716
      %v718 = vsub.s32 %v717, 2
      %vm719 = vcmp.gt.s32.totalorder 0, %v718
      %v720 = vsel %vm719, 0, %v718
      %v721 = vsub.s32 32, %v720
      %v722 = vshll.u32 %v713, %v720
      %v723 = vshrl.u32 %v705, %v721
      %v724 = vor.u32 %v722, %v723
      %v725 = vsub.s32 4294967266, %v720
      %v726 = vadd.s32 %v725, 127
      %v727 = vshll.u32 %v726, 23
      %v728 = vor.u32 4788187, %v727
      %v729 = vand.u32 2147483647, %v728
      %v731 = vcvt.s32.f32 %v724
      %v732 = vmul.f32 %v731, %v729
      %v733 = vxor.u32 %v732, 2147483648
      %v734 = vsel %vm651, %v733, %v732
      %v735 = vsub.s32 4, %v711
      %v736 = vsel %vm651, %v735, %v711
      %v737 = vsel %vm650, %v429, %v734
      %v738 = vsel %vm650, 0, %v736
      %v739 = vcosq.f32.pop %v737
      %v740 = vsinq.f32.pop %v737
      %vm741 = vweird.f32 %v429
      %v742 = vand.u32 %v738, 3
      %vm743 = vcmp.lt.s32.totalorder %v742, 2
      %vm744 = vcmp.eq.s32.totalorder %v742, 0
      %v745 = vxor.u32 %v740, 2147483648
      %v746 = vsel %vm744, %v739, %v745
      %vm747 = vcmp.eq.s32.totalorder %v742, 2
      %v748 = vxor.u32 %v739, 2147483648
      %v749 = vsel %vm747, %v748, %v740
      %v750 = vsel %vm743, %v746, %v749
      %v751 = vsel %vm741, nan, %v750
      %v752 = vand.u32 2147483647, %v430
      %vm753 = vcmp.le.f32.partialorder %v752, 0.7853982
      %vm754 = vcmp.lt.s32.totalorder %v430, 0
      %v755 = vand.u32 %v430, 2139095040
      %v756 = vshrl.u32 %v755, 23
      %v757 = vsub.s32 %v756, 127
      %v758 = vand.u32 2147483647, %v430
      %v759 = vand.u32 %v758, 8388607
      %v760 = vor.u32 %v759, 8388608
      %v761 = vsub.s32 0, %v760
      %v762 = vadd.s32 %v757, 1
      %vm763 = vcmp.gt.s32.totalorder %v762, 0
      %v764 = vsel %vm763, %v762, 0
      %v765 = vshrl.u32 %v764, 5
      %v766 = vand.u32 %v764, 31
      %v767 = vsub.s32 32, %v766
      %v768 = vshrl.u32 683565275, %v767
      %v769 = vshll.u32 683565275, %v766
      %v770 = vshrl.u32 2475754826, %v767
      %v771 = vor.u32 %v769, %v770
      %v772 = vshll.u32 2475754826, %v766
      %v773 = vshrl.u32 2131351028, %v767
      %v774 = vor.u32 %v772, %v773
      %v775 = vshll.u32 2131351028, %v766
      %v776 = vshrl.u32 2102212464, %v767
      %v777 = vor.u32 %v775, %v776
      %v778 = vshll.u32 2102212464, %v766
      %v779 = vshrl.u32 920167782, %v767
      %v780 = vor.u32 %v778, %v779
      %v781 = vshll.u32 920167782, %v766
      %v782 = vshrl.u32 1326507024, %v767
      %v783 = vor.u32 %v781, %v782
      %vm784 = vcmp.lt.s32.totalorder %v765, 1
      %vm785 = vcmp.lt.s32.totalorder %v765, 2
      %vm786 = vcmp.lt.s32.totalorder %v765, 3
      %vm787 = vcmp.lt.s32.totalorder %v765, 4
      %v788 = vsel %vm784, %v768, %v771
      %v789 = vsel %vm787, %v777, 2102212464
      %v790 = vsel %vm786, %v774, %v789
      %v791 = vsel %vm785, %v788, %v790
      %v792 = vsel %vm784, %v771, %v774
      %v793 = vsel %vm787, %v780, 920167782
      %v794 = vsel %vm786, %v777, %v793
      %v795 = vsel %vm785, %v792, %v794
      %v796 = vsel %vm784, %v774, %v777
      %v797 = vsel %vm787, %v783, 1326507024
      %v798 = vsel %vm786, %v780, %v797
      %v799 = vsel %vm785, %v796, %v798
      %v800 = vshll.u32 %v760, 8
      %v801 = vmul.u32.u64.compose %v800, %v799
      %v802 = vextract.low.u32 %v801
      %v803 = vextract.high.u32 %v801
      %v804 = vmul.u32.u64.compose %v800, %v795
      %v805 = vextract.low.u32 %v804
      %v806 = vextract.high.u32 %v804
      %v807 = vmul.u32 %v800, %v791
      %v808 = vadd.s32 %v803, %v805
      %vm809 = vc.u32 %v803, %v805
      %v810 = vadd.s32 %v806, 1
      %v811 = vsel %vm809, %v810, %v806
      %v812 = vadd.s32 %v807, %v811
      %v813 = vadd.s32 %v812, 536870912
      %v814 = vshrl.u32 %v813, 30
      %v815 = vshll.u32 %v814, 30
      %v816 = vsub.s32 %v812, %v815
      %vm817 = vcmp.lt.s32.totalorder %v816, 0
      %v818 = vsub.s32 0, %v816
      %v819 = vsel %vm817, %v818, %v816
      %v820 = vclz %v819
      %v821 = vsub.s32 %v820, 2
      %vm822 = vcmp.gt.s32.totalorder 0, %v821
      %v823 = vsel %vm822, 0, %v821
      %v824 = vsub.s32 32, %v823
      %v825 = vshll.u32 %v816, %v823
      %v826 = vshrl.u32 %v808, %v824
      %v827 = vor.u32 %v825, %v826
      %v828 = vsub.s32 4294967266, %v823
      %v829 = vadd.s32 %v828, 127
      %v830 = vshll.u32 %v829, 23
      %v831 = vor.u32 4788187, %v830
      %v832 = vand.u32 2147483647, %v831
      %v834 = vcvt.s32.f32 %v827
      %v835 = vmul.f32 %v834, %v832
      %v836 = vxor.u32 %v835, 2147483648
      %v837 = vsel %vm754, %v836, %v835
      %v838 = vsub.s32 4, %v814
      %v839 = vsel %vm754, %v838, %v814
      %v840 = vsel %vm753, %v430, %v837
      %v841 = vsel %vm753, 0, %v839
      %v842 = vcosq.f32.pop %v840
      %v843 = vsinq.f32.pop %v840
      %vm844 = vweird.f32 %v430
      %v845 = vand.u32 %v841, 3
      %vm846 = vcmp.lt.s32.totalorder %v845, 2
      %vm847 = vcmp.eq.s32.totalorder %v845, 0
      %v848 = vxor.u32 %v843, 2147483648
      %v849 = vsel %vm847, %v842, %v848
      %vm850 = vcmp.eq.s32.totalorder %v845, 2
      %v851 = vxor.u32 %v842, 2147483648
      %v852 = vsel %vm850, %v851, %v843
      %v853 = vsel %vm846, %v849, %v852
      %v854 = vsel %vm844, nan, %v853
      %v855 = vand.u32 2147483647, %v431
      %vm856 = vcmp.le.f32.partialorder %v855, 0.7853982
      %vm857 = vcmp.lt.s32.totalorder %v431, 0
      %v858 = vand.u32 %v431, 2139095040
      %v859 = vshrl.u32 %v858, 23
      %v860 = vsub.s32 %v859, 127
      %v861 = vand.u32 2147483647, %v431
      %v862 = vand.u32 %v861, 8388607
      %v863 = vor.u32 %v862, 8388608
      %v864 = vsub.s32 0, %v863
      %v865 = vadd.s32 %v860, 1
      %vm866 = vcmp.gt.s32.totalorder %v865, 0
      %v867 = vsel %vm866, %v865, 0
      %v868 = vshrl.u32 %v867, 5
      %v869 = vand.u32 %v867, 31
      %v870 = vsub.s32 32, %v869
      %v871 = vshrl.u32 683565275, %v870
      %v872 = vshll.u32 683565275, %v869
      %v873 = vshrl.u32 2475754826, %v870
      %v874 = vor.u32 %v872, %v873
      %v875 = vshll.u32 2475754826, %v869
      %v876 = vshrl.u32 2131351028, %v870
      %v877 = vor.u32 %v875, %v876
      %v878 = vshll.u32 2131351028, %v869
      %v879 = vshrl.u32 2102212464, %v870
      %v880 = vor.u32 %v878, %v879
      %v881 = vshll.u32 2102212464, %v869
      %v882 = vshrl.u32 920167782, %v870
      %v883 = vor.u32 %v881, %v882
      %v884 = vshll.u32 920167782, %v869
      %v885 = vshrl.u32 1326507024, %v870
      %v886 = vor.u32 %v884, %v885
      %vm887 = vcmp.lt.s32.totalorder %v868, 1
      %vm888 = vcmp.lt.s32.totalorder %v868, 2
      %vm889 = vcmp.lt.s32.totalorder %v868, 3
      %vm890 = vcmp.lt.s32.totalorder %v868, 4
      %v891 = vsel %vm887, %v871, %v874
      %v892 = vsel %vm890, %v880, 2102212464
      %v893 = vsel %vm889, %v877, %v892
      %v894 = vsel %vm888, %v891, %v893
      %v895 = vsel %vm887, %v874, %v877
      %v896 = vsel %vm890, %v883, 920167782
      %v897 = vsel %vm889, %v880, %v896
      %v898 = vsel %vm888, %v895, %v897
      %v899 = vsel %vm887, %v877, %v880
      %v900 = vsel %vm890, %v886, 1326507024
      %v901 = vsel %vm889, %v883, %v900
      %v902 = vsel %vm888, %v899, %v901
      %v903 = vshll.u32 %v863, 8
      %v904 = vmul.u32.u64.compose %v903, %v902
      %v905 = vextract.low.u32 %v904
      %v906 = vextract.high.u32 %v904
      %v907 = vmul.u32.u64.compose %v903, %v898
      %v908 = vextract.low.u32 %v907
      %v909 = vextract.high.u32 %v907
      %v910 = vmul.u32 %v903, %v894
      %v911 = vadd.s32 %v906, %v908
      %vm912 = vc.u32 %v906, %v908
      %v913 = vadd.s32 %v909, 1
      %v914 = vsel %vm912, %v913, %v909
      %v915 = vadd.s32 %v910, %v914
      %v916 = vadd.s32 %v915, 536870912
      %v917 = vshrl.u32 %v916, 30
      %v918 = vshll.u32 %v917, 30
      %v919 = vsub.s32 %v915, %v918
      %vm920 = vcmp.lt.s32.totalorder %v919, 0
      %v921 = vsub.s32 0, %v919
      %v922 = vsel %vm920, %v921, %v919
      %v923 = vclz %v922
      %v924 = vsub.s32 %v923, 2
      %vm925 = vcmp.gt.s32.totalorder 0, %v924
      %v926 = vsel %vm925, 0, %v924
      %v927 = vsub.s32 32, %v926
      %v928 = vshll.u32 %v919, %v926
      %v929 = vshrl.u32 %v911, %v927
      %v930 = vor.u32 %v928, %v929
      %v931 = vsub.s32 4294967266, %v926
      %v932 = vadd.s32 %v931, 127
      %v933 = vshll.u32 %v932, 23
      %v934 = vor.u32 4788187, %v933
      %v935 = vand.u32 2147483647, %v934
      %v937 = vcvt.s32.f32 %v930
      %v938 = vmul.f32 %v937, %v935
      %v939 = vxor.u32 %v938, 2147483648
      %v940 = vsel %vm857, %v939, %v938
      %v941 = vsub.s32 4, %v917
      %v942 = vsel %vm857, %v941, %v917
      %v943 = vsel %vm856, %v431, %v940
      %v944 = vsel %vm856, 0, %v942
      %v945 = vcosq.f32.pop %v943
      %v946 = vsinq.f32.pop %v943
      %vm947 = vweird.f32 %v431
      %v948 = vand.u32 %v944, 3
      %vm949 = vcmp.lt.s32.totalorder %v948, 2
      %vm950 = vcmp.eq.s32.totalorder %v948, 0
      %v951 = vxor.u32 %v946, 2147483648
      %v952 = vsel %vm950, %v945, %v951
      %vm953 = vcmp.eq.s32.totalorder %v948, 2
      %v954 = vxor.u32 %v945, 2147483648
      %v955 = vsel %vm953, %v954, %v946
      %v956 = vsel %vm949, %v952, %v955
      %v957 = vsel %vm947, nan, %v956
      %v958 = vand.u32 2147483647, %v432
      %vm959 = vcmp.le.f32.partialorder %v958, 0.7853982
      %vm960 = vcmp.lt.s32.totalorder %v432, 0
      %v961 = vand.u32 %v432, 2139095040
      %v962 = vshrl.u32 %v961, 23
      %v963 = vsub.s32 %v962, 127
      %v964 = vand.u32 2147483647, %v432
      %v965 = vand.u32 %v964, 8388607
      %v966 = vor.u32 %v965, 8388608
      %v967 = vsub.s32 0, %v966
      %v968 = vadd.s32 %v963, 1
      %vm969 = vcmp.gt.s32.totalorder %v968, 0
      %v970 = vsel %vm969, %v968, 0
      %v971 = vshrl.u32 %v970, 5
      %v972 = vand.u32 %v970, 31
      %v973 = vsub.s32 32, %v972
      %v974 = vshrl.u32 683565275, %v973
      %v975 = vshll.u32 683565275, %v972
      %v976 = vshrl.u32 2475754826, %v973
      %v977 = vor.u32 %v975, %v976
      %v978 = vshll.u32 2475754826, %v972
      %v979 = vshrl.u32 2131351028, %v973
      %v980 = vor.u32 %v978, %v979
      %v981 = vshll.u32 2131351028, %v972
      %v982 = vshrl.u32 2102212464, %v973
      %v983 = vor.u32 %v981, %v982
      %v984 = vshll.u32 2102212464, %v972
      %v985 = vshrl.u32 920167782, %v973
      %v986 = vor.u32 %v984, %v985
      %v987 = vshll.u32 920167782, %v972
      %v988 = vshrl.u32 1326507024, %v973
      %v989 = vor.u32 %v987, %v988
      %vm990 = vcmp.lt.s32.totalorder %v971, 1
      %vm991 = vcmp.lt.s32.totalorder %v971, 2
      %vm992 = vcmp.lt.s32.totalorder %v971, 3
      %vm993 = vcmp.lt.s32.totalorder %v971, 4
      %v994 = vsel %vm990, %v974, %v977
      %v995 = vsel %vm993, %v983, 2102212464
      %v996 = vsel %vm992, %v980, %v995
      %v997 = vsel %vm991, %v994, %v996
      %v998 = vsel %vm990, %v977, %v980
      %v999 = vsel %vm993, %v986, 920167782
      %v1000 = vsel %vm992, %v983, %v999
      %v1001 = vsel %vm991, %v998, %v1000
      %v1002 = vsel %vm990, %v980, %v983
      %v1003 = vsel %vm993, %v989, 1326507024
      %v1004 = vsel %vm992, %v986, %v1003
      %v1005 = vsel %vm991, %v1002, %v1004
      %v1006 = vshll.u32 %v966, 8
      %v1007 = vmul.u32.u64.compose %v1006, %v1005
      %v1008 = vextract.low.u32 %v1007
      %v1009 = vextract.high.u32 %v1007
      %v1010 = vmul.u32.u64.compose %v1006, %v1001
      %v1011 = vextract.low.u32 %v1010
      %v1012 = vextract.high.u32 %v1010
      %v1013 = vmul.u32 %v1006, %v997
      %v1014 = vadd.s32 %v1009, %v1011
      %vm1015 = vc.u32 %v1009, %v1011
      %v1016 = vadd.s32 %v1012, 1
      %v1017 = vsel %vm1015, %v1016, %v1012
      %v1018 = vadd.s32 %v1013, %v1017
      %v1019 = vadd.s32 %v1018, 536870912
      %v1020 = vshrl.u32 %v1019, 30
      %v1021 = vshll.u32 %v1020, 30
      %v1022 = vsub.s32 %v1018, %v1021
      %vm1023 = vcmp.lt.s32.totalorder %v1022, 0
      %v1024 = vsub.s32 0, %v1022
      %v1025 = vsel %vm1023, %v1024, %v1022
      %v1026 = vclz %v1025
      %v1027 = vsub.s32 %v1026, 2
      %vm1028 = vcmp.gt.s32.totalorder 0, %v1027
      %v1029 = vsel %vm1028, 0, %v1027
      %v1030 = vsub.s32 32, %v1029
      %v1031 = vshll.u32 %v1022, %v1029
      %v1032 = vshrl.u32 %v1014, %v1030
      %v1033 = vor.u32 %v1031, %v1032
      %v1034 = vsub.s32 4294967266, %v1029
      %v1035 = vadd.s32 %v1034, 127
      %v1036 = vshll.u32 %v1035, 23
      %v1037 = vor.u32 4788187, %v1036
      %v1038 = vand.u32 2147483647, %v1037
      %v1040 = vcvt.s32.f32 %v1033
      %v1041 = vmul.f32 %v1040, %v1038
      %v1042 = vxor.u32 %v1041, 2147483648
      %v1043 = vsel %vm960, %v1042, %v1041
      %v1044 = vsub.s32 4, %v1020
      %v1045 = vsel %vm960, %v1044, %v1020
      %v1046 = vsel %vm959, %v432, %v1043
      %v1047 = vsel %vm959, 0, %v1045
      %v1048 = vcosq.f32.pop %v1046
      %v1049 = vsinq.f32.pop %v1046
      %vm1050 = vweird.f32 %v432
      %v1051 = vand.u32 %v1047, 3
      %vm1052 = vcmp.lt.s32.totalorder %v1051, 2
      %vm1053 = vcmp.eq.s32.totalorder %v1051, 0
      %v1054 = vxor.u32 %v1049, 2147483648
      %v1055 = vsel %vm1053, %v1048, %v1054
      %vm1056 = vcmp.eq.s32.totalorder %v1051, 2
      %v1057 = vxor.u32 %v1048, 2147483648
      %v1058 = vsel %vm1056, %v1057, %v1049
      %v1059 = vsel %vm1052, %v1055, %v1058
      %v1060 = vsel %vm1050, nan, %v1059
      %v1061 = vand.u32 2147483647, %v433
      %vm1062 = vcmp.le.f32.partialorder %v1061, 0.7853982
      %vm1063 = vcmp.lt.s32.totalorder %v433, 0
      %v1064 = vand.u32 %v433, 2139095040
      %v1065 = vshrl.u32 %v1064, 23
      %v1066 = vsub.s32 %v1065, 127
      %v1067 = vand.u32 2147483647, %v433
      %v1068 = vand.u32 %v1067, 8388607
      %v1069 = vor.u32 %v1068, 8388608
      %v1070 = vsub.s32 0, %v1069
      %v1071 = vadd.s32 %v1066, 1
      %vm1072 = vcmp.gt.s32.totalorder %v1071, 0
      %v1073 = vsel %vm1072, %v1071, 0
      %v1074 = vshrl.u32 %v1073, 5
      %v1075 = vand.u32 %v1073, 31
      %v1076 = vsub.s32 32, %v1075
      %v1077 = vshrl.u32 683565275, %v1076
      %v1078 = vshll.u32 683565275, %v1075
      %v1079 = vshrl.u32 2475754826, %v1076
      %v1080 = vor.u32 %v1078, %v1079
      %v1081 = vshll.u32 2475754826, %v1075
      %v1082 = vshrl.u32 2131351028, %v1076
      %v1083 = vor.u32 %v1081, %v1082
      %v1084 = vshll.u32 2131351028, %v1075
      %v1085 = vshrl.u32 2102212464, %v1076
      %v1086 = vor.u32 %v1084, %v1085
      %v1087 = vshll.u32 2102212464, %v1075
      %v1088 = vshrl.u32 920167782, %v1076
      %v1089 = vor.u32 %v1087, %v1088
      %v1090 = vshll.u32 920167782, %v1075
      %v1091 = vshrl.u32 1326507024, %v1076
      %v1092 = vor.u32 %v1090, %v1091
      %vm1093 = vcmp.lt.s32.totalorder %v1074, 1
      %vm1094 = vcmp.lt.s32.totalorder %v1074, 2
      %vm1095 = vcmp.lt.s32.totalorder %v1074, 3
      %vm1096 = vcmp.lt.s32.totalorder %v1074, 4
      %v1097 = vsel %vm1093, %v1077, %v1080
      %v1098 = vsel %vm1096, %v1086, 2102212464
      %v1099 = vsel %vm1095, %v1083, %v1098
      %v1100 = vsel %vm1094, %v1097, %v1099
      %v1101 = vsel %vm1093, %v1080, %v1083
      %v1102 = vsel %vm1096, %v1089, 920167782
      %v1103 = vsel %vm1095, %v1086, %v1102
      %v1104 = vsel %vm1094, %v1101, %v1103
      %v1105 = vsel %vm1093, %v1083, %v1086
      %v1106 = vsel %vm1096, %v1092, 1326507024
      %v1107 = vsel %vm1095, %v1089, %v1106
      %v1108 = vsel %vm1094, %v1105, %v1107
      %v1109 = vshll.u32 %v1069, 8
      %v1110 = vmul.u32.u64.compose %v1109, %v1108
      %v1111 = vextract.low.u32 %v1110
      %v1112 = vextract.high.u32 %v1110
      %v1113 = vmul.u32.u64.compose %v1109, %v1104
      %v1114 = vextract.low.u32 %v1113
      %v1115 = vextract.high.u32 %v1113
      %v1116 = vmul.u32 %v1109, %v1100
      %v1117 = vadd.s32 %v1112, %v1114
      %vm1118 = vc.u32 %v1112, %v1114
      %v1119 = vadd.s32 %v1115, 1
      %v1120 = vsel %vm1118, %v1119, %v1115
      %v1121 = vadd.s32 %v1116, %v1120
      %v1122 = vadd.s32 %v1121, 536870912
      %v1123 = vshrl.u32 %v1122, 30
      %v1124 = vshll.u32 %v1123, 30
      %v1125 = vsub.s32 %v1121, %v1124
      %vm1126 = vcmp.lt.s32.totalorder %v1125, 0
      %v1127 = vsub.s32 0, %v1125
      %v1128 = vsel %vm1126, %v1127, %v1125
      %v1129 = vclz %v1128
      %v1130 = vsub.s32 %v1129, 2
      %vm1131 = vcmp.gt.s32.totalorder 0, %v1130
      %v1132 = vsel %vm1131, 0, %v1130
      %v1133 = vsub.s32 32, %v1132
      %v1134 = vshll.u32 %v1125, %v1132
      %v1135 = vshrl.u32 %v1117, %v1133
      %v1136 = vor.u32 %v1134, %v1135
      %v1137 = vsub.s32 4294967266, %v1132
      %v1138 = vadd.s32 %v1137, 127
      %v1139 = vshll.u32 %v1138, 23
      %v1140 = vor.u32 4788187, %v1139
      %v1141 = vand.u32 2147483647, %v1140
      %v1143 = vcvt.s32.f32 %v1136
      %v1144 = vmul.f32 %v1143, %v1141
      %v1145 = vxor.u32 %v1144, 2147483648
      %v1146 = vsel %vm1063, %v1145, %v1144
      %v1147 = vsub.s32 4, %v1123
      %v1148 = vsel %vm1063, %v1147, %v1123
      %v1149 = vsel %vm1062, %v433, %v1146
      %v1150 = vsel %vm1062, 0, %v1148
      %v1151 = vcosq.f32.pop %v1149
      %v1152 = vsinq.f32.pop %v1149
      %vm1153 = vweird.f32 %v433
      %v1154 = vand.u32 %v1150, 3
      %vm1155 = vcmp.lt.s32.totalorder %v1154, 2
      %vm1156 = vcmp.eq.s32.totalorder %v1154, 0
      %v1157 = vxor.u32 %v1152, 2147483648
      %v1158 = vsel %vm1156, %v1151, %v1157
      %vm1159 = vcmp.eq.s32.totalorder %v1154, 2
      %v1160 = vxor.u32 %v1151, 2147483648
      %v1161 = vsel %vm1159, %v1160, %v1152
      %v1162 = vsel %vm1155, %v1158, %v1161
      %v1163 = vsel %vm1153, nan, %v1162
      %v1164 = vand.u32 2147483647, %v434
      %vm1165 = vcmp.le.f32.partialorder %v1164, 0.7853982
      %vm1166 = vcmp.lt.s32.totalorder %v434, 0
      %v1167 = vand.u32 %v434, 2139095040
      %v1168 = vshrl.u32 %v1167, 23
      %v1169 = vsub.s32 %v1168, 127
      %v1170 = vand.u32 2147483647, %v434
      %v1171 = vand.u32 %v1170, 8388607
      %v1172 = vor.u32 %v1171, 8388608
      %v1173 = vsub.s32 0, %v1172
      %v1174 = vadd.s32 %v1169, 1
      %vm1175 = vcmp.gt.s32.totalorder %v1174, 0
      %v1176 = vsel %vm1175, %v1174, 0
      %v1177 = vshrl.u32 %v1176, 5
      %v1178 = vand.u32 %v1176, 31
      %v1179 = vsub.s32 32, %v1178
      %v1180 = vshrl.u32 683565275, %v1179
      %v1181 = vshll.u32 683565275, %v1178
      %v1182 = vshrl.u32 2475754826, %v1179
      %v1183 = vor.u32 %v1181, %v1182
      %v1184 = vshll.u32 2475754826, %v1178
      %v1185 = vshrl.u32 2131351028, %v1179
      %v1186 = vor.u32 %v1184, %v1185
      %v1187 = vshll.u32 2131351028, %v1178
      %v1188 = vshrl.u32 2102212464, %v1179
      %v1189 = vor.u32 %v1187, %v1188
      %v1190 = vshll.u32 2102212464, %v1178
      %v1191 = vshrl.u32 920167782, %v1179
      %v1192 = vor.u32 %v1190, %v1191
      %v1193 = vshll.u32 920167782, %v1178
      %v1194 = vshrl.u32 1326507024, %v1179
      %v1195 = vor.u32 %v1193, %v1194
      %vm1196 = vcmp.lt.s32.totalorder %v1177, 1
      %vm1197 = vcmp.lt.s32.totalorder %v1177, 2
      %vm1198 = vcmp.lt.s32.totalorder %v1177, 3
      %vm1199 = vcmp.lt.s32.totalorder %v1177, 4
      %v1200 = vsel %vm1196, %v1180, %v1183
      %v1201 = vsel %vm1199, %v1189, 2102212464
      %v1202 = vsel %vm1198, %v1186, %v1201
      %v1203 = vsel %vm1197, %v1200, %v1202
      %v1204 = vsel %vm1196, %v1183, %v1186
      %v1205 = vsel %vm1199, %v1192, 920167782
      %v1206 = vsel %vm1198, %v1189, %v1205
      %v1207 = vsel %vm1197, %v1204, %v1206
      %v1208 = vsel %vm1196, %v1186, %v1189
      %v1209 = vsel %vm1199, %v1195, 1326507024
      %v1210 = vsel %vm1198, %v1192, %v1209
      %v1211 = vsel %vm1197, %v1208, %v1210
      %v1212 = vshll.u32 %v1172, 8
      %v1213 = vmul.u32.u64.compose %v1212, %v1211
      %v1214 = vextract.low.u32 %v1213
      %v1215 = vextract.high.u32 %v1213
      %v1216 = vmul.u32.u64.compose %v1212, %v1207
      %v1217 = vextract.low.u32 %v1216
      %v1218 = vextract.high.u32 %v1216
      %v1219 = vmul.u32 %v1212, %v1203
      %v1220 = vadd.s32 %v1215, %v1217
      %vm1221 = vc.u32 %v1215, %v1217
      %v1222 = vadd.s32 %v1218, 1
      %v1223 = vsel %vm1221, %v1222, %v1218
      %v1224 = vadd.s32 %v1219, %v1223
      %v1225 = vadd.s32 %v1224, 536870912
      %v1226 = vshrl.u32 %v1225, 30
      %v1227 = vshll.u32 %v1226, 30
      %v1228 = vsub.s32 %v1224, %v1227
      %vm1229 = vcmp.lt.s32.totalorder %v1228, 0
      %v1230 = vsub.s32 0, %v1228
      %v1231 = vsel %vm1229, %v1230, %v1228
      %v1232 = vclz %v1231
      %v1233 = vsub.s32 %v1232, 2
      %vm1234 = vcmp.gt.s32.totalorder 0, %v1233
      %v1235 = vsel %vm1234, 0, %v1233
      %v1236 = vsub.s32 32, %v1235
      %v1237 = vshll.u32 %v1228, %v1235
      %v1238 = vshrl.u32 %v1220, %v1236
      %v1239 = vor.u32 %v1237, %v1238
      %v1240 = vsub.s32 4294967266, %v1235
      %v1241 = vadd.s32 %v1240, 127
      %v1242 = vshll.u32 %v1241, 23
      %v1243 = vor.u32 4788187, %v1242
      %v1244 = vand.u32 2147483647, %v1243
      %v1246 = vcvt.s32.f32 %v1239
      %v1247 = vmul.f32 %v1246, %v1244
      %v1248 = vxor.u32 %v1247, 2147483648
      %v1249 = vsel %vm1166, %v1248, %v1247
      %v1250 = vsub.s32 4, %v1226
      %v1251 = vsel %vm1166, %v1250, %v1226
      %v1252 = vsel %vm1165, %v434, %v1249
      %v1253 = vsel %vm1165, 0, %v1251
      %v1254 = vcosq.f32.pop %v1252
      %v1255 = vsinq.f32.pop %v1252
      %vm1256 = vweird.f32 %v434
      %v1257 = vand.u32 %v1253, 3
      %vm1258 = vcmp.lt.s32.totalorder %v1257, 2
      %vm1259 = vcmp.eq.s32.totalorder %v1257, 0
      %v1260 = vxor.u32 %v1255, 2147483648
      %v1261 = vsel %vm1259, %v1254, %v1260
      %vm1262 = vcmp.eq.s32.totalorder %v1257, 2
      %v1263 = vxor.u32 %v1254, 2147483648
      %v1264 = vsel %vm1262, %v1263, %v1255
      %v1265 = vsel %vm1258, %v1261, %v1264
      %v1266 = vsel %vm1256, nan, %v1265
      %v1267 = vand.u32 2147483647, %v435
      %vm1268 = vcmp.le.f32.partialorder %v1267, 0.7853982
      %vm1269 = vcmp.lt.s32.totalorder %v435, 0
      %v1270 = vand.u32 %v435, 2139095040
      %v1271 = vshrl.u32 %v1270, 23
      %v1272 = vsub.s32 %v1271, 127
      %v1273 = vand.u32 2147483647, %v435
      %v1274 = vand.u32 %v1273, 8388607
      %v1275 = vor.u32 %v1274, 8388608
      %v1276 = vsub.s32 0, %v1275
      %v1277 = vadd.s32 %v1272, 1
      %vm1278 = vcmp.gt.s32.totalorder %v1277, 0
      %v1279 = vsel %vm1278, %v1277, 0
      %v1280 = vshrl.u32 %v1279, 5
      %v1281 = vand.u32 %v1279, 31
      %v1282 = vsub.s32 32, %v1281
      %v1283 = vshrl.u32 683565275, %v1282
      %v1284 = vshll.u32 683565275, %v1281
      %v1285 = vshrl.u32 2475754826, %v1282
      %v1286 = vor.u32 %v1284, %v1285
      %v1287 = vshll.u32 2475754826, %v1281
      %v1288 = vshrl.u32 2131351028, %v1282
      %v1289 = vor.u32 %v1287, %v1288
      %v1290 = vshll.u32 2131351028, %v1281
      %v1291 = vshrl.u32 2102212464, %v1282
      %v1292 = vor.u32 %v1290, %v1291
      %v1293 = vshll.u32 2102212464, %v1281
      %v1294 = vshrl.u32 920167782, %v1282
      %v1295 = vor.u32 %v1293, %v1294
      %v1296 = vshll.u32 920167782, %v1281
      %v1297 = vshrl.u32 1326507024, %v1282
      %v1298 = vor.u32 %v1296, %v1297
      %vm1299 = vcmp.lt.s32.totalorder %v1280, 1
      %vm1300 = vcmp.lt.s32.totalorder %v1280, 2
      %vm1301 = vcmp.lt.s32.totalorder %v1280, 3
      %vm1302 = vcmp.lt.s32.totalorder %v1280, 4
      %v1303 = vsel %vm1299, %v1283, %v1286
      %v1304 = vsel %vm1302, %v1292, 2102212464
      %v1305 = vsel %vm1301, %v1289, %v1304
      %v1306 = vsel %vm1300, %v1303, %v1305
      %v1307 = vsel %vm1299, %v1286, %v1289
      %v1308 = vsel %vm1302, %v1295, 920167782
      %v1309 = vsel %vm1301, %v1292, %v1308
      %v1310 = vsel %vm1300, %v1307, %v1309
      %v1311 = vsel %vm1299, %v1289, %v1292
      %v1312 = vsel %vm1302, %v1298, 1326507024
      %v1313 = vsel %vm1301, %v1295, %v1312
      %v1314 = vsel %vm1300, %v1311, %v1313
      %v1315 = vshll.u32 %v1275, 8
      %v1316 = vmul.u32.u64.compose %v1315, %v1314
      %v1317 = vextract.low.u32 %v1316
      %v1318 = vextract.high.u32 %v1316
      %v1319 = vmul.u32.u64.compose %v1315, %v1310
      %v1320 = vextract.low.u32 %v1319
      %v1321 = vextract.high.u32 %v1319
      %v1322 = vmul.u32 %v1315, %v1306
      %v1323 = vadd.s32 %v1318, %v1320
      %vm1324 = vc.u32 %v1318, %v1320
      %v1325 = vadd.s32 %v1321, 1
      %v1326 = vsel %vm1324, %v1325, %v1321
      %v1327 = vadd.s32 %v1322, %v1326
      %v1328 = vadd.s32 %v1327, 536870912
      %v1329 = vshrl.u32 %v1328, 30
      %v1330 = vshll.u32 %v1329, 30
      %v1331 = vsub.s32 %v1327, %v1330
      %vm1332 = vcmp.lt.s32.totalorder %v1331, 0
      %v1333 = vsub.s32 0, %v1331
      %v1334 = vsel %vm1332, %v1333, %v1331
      %v1335 = vclz %v1334
      %v1336 = vsub.s32 %v1335, 2
      %vm1337 = vcmp.gt.s32.totalorder 0, %v1336
      %v1338 = vsel %vm1337, 0, %v1336
      %v1339 = vsub.s32 32, %v1338
      %v1340 = vshll.u32 %v1331, %v1338
      %v1341 = vshrl.u32 %v1323, %v1339
      %v1342 = vor.u32 %v1340, %v1341
      %v1343 = vsub.s32 4294967266, %v1338
      %v1344 = vadd.s32 %v1343, 127
      %v1345 = vshll.u32 %v1344, 23
      %v1346 = vor.u32 4788187, %v1345
      %v1347 = vand.u32 2147483647, %v1346
      %v1349 = vcvt.s32.f32 %v1342
      %v1350 = vmul.f32 %v1349, %v1347
      %v1351 = vxor.u32 %v1350, 2147483648
      %v1352 = vsel %vm1269, %v1351, %v1350
      %v1353 = vsub.s32 4, %v1329
      %v1354 = vsel %vm1269, %v1353, %v1329
      %v1355 = vsel %vm1268, %v435, %v1352
      %v1356 = vsel %vm1268, 0, %v1354
      %v1357 = vcosq.f32.pop %v1355
      %v1358 = vsinq.f32.pop %v1355
      %vm1359 = vweird.f32 %v435
      %v1360 = vand.u32 %v1356, 3
      %vm1361 = vcmp.lt.s32.totalorder %v1360, 2
      %vm1362 = vcmp.eq.s32.totalorder %v1360, 0
      %v1363 = vxor.u32 %v1358, 2147483648
      %v1364 = vsel %vm1362, %v1357, %v1363
      %vm1365 = vcmp.eq.s32.totalorder %v1360, 2
      %v1366 = vxor.u32 %v1357, 2147483648
      %v1367 = vsel %vm1365, %v1366, %v1358
      %v1368 = vsel %vm1361, %v1364, %v1367
      %v1369 = vsel %vm1359, nan, %v1368
      %v1370 = vand.u32 2147483647, %v436
      %vm1371 = vcmp.le.f32.partialorder %v1370, 0.7853982
      %vm1372 = vcmp.lt.s32.totalorder %v436, 0
      %v1373 = vand.u32 %v436, 2139095040
      %v1374 = vshrl.u32 %v1373, 23
      %v1375 = vsub.s32 %v1374, 127
      %v1376 = vand.u32 2147483647, %v436
      %v1377 = vand.u32 %v1376, 8388607
      %v1378 = vor.u32 %v1377, 8388608
      %v1379 = vsub.s32 0, %v1378
      %v1380 = vadd.s32 %v1375, 1
      %vm1381 = vcmp.gt.s32.totalorder %v1380, 0
      %v1382 = vsel %vm1381, %v1380, 0
      %v1383 = vshrl.u32 %v1382, 5
      %v1384 = vand.u32 %v1382, 31
      %v1385 = vsub.s32 32, %v1384
      %v1386 = vshrl.u32 683565275, %v1385
      %v1387 = vshll.u32 683565275, %v1384
      %v1388 = vshrl.u32 2475754826, %v1385
      %v1389 = vor.u32 %v1387, %v1388
      %v1390 = vshll.u32 2475754826, %v1384
      %v1391 = vshrl.u32 2131351028, %v1385
      %v1392 = vor.u32 %v1390, %v1391
      %v1393 = vshll.u32 2131351028, %v1384
      %v1394 = vshrl.u32 2102212464, %v1385
      %v1395 = vor.u32 %v1393, %v1394
      %v1396 = vshll.u32 2102212464, %v1384
      %v1397 = vshrl.u32 920167782, %v1385
      %v1398 = vor.u32 %v1396, %v1397
      %v1399 = vshll.u32 920167782, %v1384
      %v1400 = vshrl.u32 1326507024, %v1385
      %v1401 = vor.u32 %v1399, %v1400
      %vm1402 = vcmp.lt.s32.totalorder %v1383, 1
      %vm1403 = vcmp.lt.s32.totalorder %v1383, 2
      %vm1404 = vcmp.lt.s32.totalorder %v1383, 3
      %vm1405 = vcmp.lt.s32.totalorder %v1383, 4
      %v1406 = vsel %vm1402, %v1386, %v1389
      %v1407 = vsel %vm1405, %v1395, 2102212464
      %v1408 = vsel %vm1404, %v1392, %v1407
      %v1409 = vsel %vm1403, %v1406, %v1408
      %v1410 = vsel %vm1402, %v1389, %v1392
      %v1411 = vsel %vm1405, %v1398, 920167782
      %v1412 = vsel %vm1404, %v1395, %v1411
      %v1413 = vsel %vm1403, %v1410, %v1412
      %v1414 = vsel %vm1402, %v1392, %v1395
      %v1415 = vsel %vm1405, %v1401, 1326507024
      %v1416 = vsel %vm1404, %v1398, %v1415
      %v1417 = vsel %vm1403, %v1414, %v1416
      %v1418 = vshll.u32 %v1378, 8
      %v1419 = vmul.u32.u64.compose %v1418, %v1417
      %v1420 = vextract.low.u32 %v1419
      %v1421 = vextract.high.u32 %v1419
      %v1422 = vmul.u32.u64.compose %v1418, %v1413
      %v1423 = vextract.low.u32 %v1422
      %v1424 = vextract.high.u32 %v1422
      %v1425 = vmul.u32 %v1418, %v1409
      %v1426 = vadd.s32 %v1421, %v1423
      %vm1427 = vc.u32 %v1421, %v1423
      %v1428 = vadd.s32 %v1424, 1
      %v1429 = vsel %vm1427, %v1428, %v1424
      %v1430 = vadd.s32 %v1425, %v1429
      %v1431 = vadd.s32 %v1430, 536870912
      %v1432 = vshrl.u32 %v1431, 30
      %v1433 = vshll.u32 %v1432, 30
      %v1434 = vsub.s32 %v1430, %v1433
      %vm1435 = vcmp.lt.s32.totalorder %v1434, 0
      %v1436 = vsub.s32 0, %v1434
      %v1437 = vsel %vm1435, %v1436, %v1434
      %v1438 = vclz %v1437
      %v1439 = vsub.s32 %v1438, 2
      %vm1440 = vcmp.gt.s32.totalorder 0, %v1439
      %v1441 = vsel %vm1440, 0, %v1439
      %v1442 = vsub.s32 32, %v1441
      %v1443 = vshll.u32 %v1434, %v1441
      %v1444 = vshrl.u32 %v1426, %v1442
      %v1445 = vor.u32 %v1443, %v1444
      %v1446 = vsub.s32 4294967266, %v1441
      %v1447 = vadd.s32 %v1446, 127
      %v1448 = vshll.u32 %v1447, 23
      %v1449 = vor.u32 4788187, %v1448
      %v1450 = vand.u32 2147483647, %v1449
      %v1452 = vcvt.s32.f32 %v1445
      %v1453 = vmul.f32 %v1452, %v1450
      %v1454 = vxor.u32 %v1453, 2147483648
      %v1455 = vsel %vm1372, %v1454, %v1453
      %v1456 = vsub.s32 4, %v1432
      %v1457 = vsel %vm1372, %v1456, %v1432
      %v1458 = vsel %vm1371, %v436, %v1455
      %v1459 = vsel %vm1371, 0, %v1457
      %v1460 = vcosq.f32.pop %v1458
      %v1461 = vsinq.f32.pop %v1458
      %vm1462 = vweird.f32 %v436
      %v1463 = vand.u32 %v1459, 3
      %vm1464 = vcmp.lt.s32.totalorder %v1463, 2
      %vm1465 = vcmp.eq.s32.totalorder %v1463, 0
      %v1466 = vxor.u32 %v1461, 2147483648
      %v1467 = vsel %vm1465, %v1460, %v1466
      %vm1468 = vcmp.eq.s32.totalorder %v1463, 2
      %v1469 = vxor.u32 %v1460, 2147483648
      %v1470 = vsel %vm1468, %v1469, %v1461
      %v1471 = vsel %vm1464, %v1467, %v1470
      %v1472 = vsel %vm1462, nan, %v1471
      %v1473 = vand.u32 2147483647, %v437
      %vm1474 = vcmp.le.f32.partialorder %v1473, 0.7853982
      %vm1475 = vcmp.lt.s32.totalorder %v437, 0
      %v1476 = vand.u32 %v437, 2139095040
      %v1477 = vshrl.u32 %v1476, 23
      %v1478 = vsub.s32 %v1477, 127
      %v1479 = vand.u32 2147483647, %v437
      %v1480 = vand.u32 %v1479, 8388607
      %v1481 = vor.u32 %v1480, 8388608
      %v1482 = vsub.s32 0, %v1481
      %v1483 = vadd.s32 %v1478, 1
      %vm1484 = vcmp.gt.s32.totalorder %v1483, 0
      %v1485 = vsel %vm1484, %v1483, 0
      %v1486 = vshrl.u32 %v1485, 5
      %v1487 = vand.u32 %v1485, 31
      %v1488 = vsub.s32 32, %v1487
      %v1489 = vshrl.u32 683565275, %v1488
      %v1490 = vshll.u32 683565275, %v1487
      %v1491 = vshrl.u32 2475754826, %v1488
      %v1492 = vor.u32 %v1490, %v1491
      %v1493 = vshll.u32 2475754826, %v1487
      %v1494 = vshrl.u32 2131351028, %v1488
      %v1495 = vor.u32 %v1493, %v1494
      %v1496 = vshll.u32 2131351028, %v1487
      %v1497 = vshrl.u32 2102212464, %v1488
      %v1498 = vor.u32 %v1496, %v1497
      %v1499 = vshll.u32 2102212464, %v1487
      %v1500 = vshrl.u32 920167782, %v1488
      %v1501 = vor.u32 %v1499, %v1500
      %v1502 = vshll.u32 920167782, %v1487
      %v1503 = vshrl.u32 1326507024, %v1488
      %v1504 = vor.u32 %v1502, %v1503
      %vm1505 = vcmp.lt.s32.totalorder %v1486, 1
      %vm1506 = vcmp.lt.s32.totalorder %v1486, 2
      %vm1507 = vcmp.lt.s32.totalorder %v1486, 3
      %vm1508 = vcmp.lt.s32.totalorder %v1486, 4
      %v1509 = vsel %vm1505, %v1489, %v1492
      %v1510 = vsel %vm1508, %v1498, 2102212464
      %v1511 = vsel %vm1507, %v1495, %v1510
      %v1512 = vsel %vm1506, %v1509, %v1511
      %v1513 = vsel %vm1505, %v1492, %v1495
      %v1514 = vsel %vm1508, %v1501, 920167782
      %v1515 = vsel %vm1507, %v1498, %v1514
      %v1516 = vsel %vm1506, %v1513, %v1515
      %v1517 = vsel %vm1505, %v1495, %v1498
      %v1518 = vsel %vm1508, %v1504, 1326507024
      %v1519 = vsel %vm1507, %v1501, %v1518
      %v1520 = vsel %vm1506, %v1517, %v1519
      %v1521 = vshll.u32 %v1481, 8
      %v1522 = vmul.u32.u64.compose %v1521, %v1520
      %v1523 = vextract.low.u32 %v1522
      %v1524 = vextract.high.u32 %v1522
      %v1525 = vmul.u32.u64.compose %v1521, %v1516
      %v1526 = vextract.low.u32 %v1525
      %v1527 = vextract.high.u32 %v1525
      %v1528 = vmul.u32 %v1521, %v1512
      %v1529 = vadd.s32 %v1524, %v1526
      %vm1530 = vc.u32 %v1524, %v1526
      %v1531 = vadd.s32 %v1527, 1
      %v1532 = vsel %vm1530, %v1531, %v1527
      %v1533 = vadd.s32 %v1528, %v1532
      %v1534 = vadd.s32 %v1533, 536870912
      %v1535 = vshrl.u32 %v1534, 30
      %v1536 = vshll.u32 %v1535, 30
      %v1537 = vsub.s32 %v1533, %v1536
      %vm1538 = vcmp.lt.s32.totalorder %v1537, 0
      %v1539 = vsub.s32 0, %v1537
      %v1540 = vsel %vm1538, %v1539, %v1537
      %v1541 = vclz %v1540
      %v1542 = vsub.s32 %v1541, 2
      %vm1543 = vcmp.gt.s32.totalorder 0, %v1542
      %v1544 = vsel %vm1543, 0, %v1542
      %v1545 = vsub.s32 32, %v1544
      %v1546 = vshll.u32 %v1537, %v1544
      %v1547 = vshrl.u32 %v1529, %v1545
      %v1548 = vor.u32 %v1546, %v1547
      %v1549 = vsub.s32 4294967266, %v1544
      %v1550 = vadd.s32 %v1549, 127
      %v1551 = vshll.u32 %v1550, 23
      %v1552 = vor.u32 4788187, %v1551
      %v1553 = vand.u32 2147483647, %v1552
      %v1555 = vcvt.s32.f32 %v1548
      %v1556 = vmul.f32 %v1555, %v1553
      %v1557 = vxor.u32 %v1556, 2147483648
      %v1558 = vsel %vm1475, %v1557, %v1556
      %v1559 = vsub.s32 4, %v1535
      %v1560 = vsel %vm1475, %v1559, %v1535
      %v1561 = vsel %vm1474, %v437, %v1558
      %v1562 = vsel %vm1474, 0, %v1560
      %v1563 = vcosq.f32.pop %v1561
      %v1564 = vsinq.f32.pop %v1561
      %vm1565 = vweird.f32 %v437
      %v1566 = vand.u32 %v1562, 3
      %vm1567 = vcmp.lt.s32.totalorder %v1566, 2
      %vm1568 = vcmp.eq.s32.totalorder %v1566, 0
      %v1569 = vxor.u32 %v1564, 2147483648
      %v1570 = vsel %vm1568, %v1563, %v1569
      %vm1571 = vcmp.eq.s32.totalorder %v1566, 2
      %v1572 = vxor.u32 %v1563, 2147483648
      %v1573 = vsel %vm1571, %v1572, %v1564
      %v1574 = vsel %vm1567, %v1570, %v1573
      %v1575 = vsel %vm1565, nan, %v1574
      %v1576 = vand.u32 2147483647, %v438
      %vm1577 = vcmp.le.f32.partialorder %v1576, 0.7853982
      %vm1578 = vcmp.lt.s32.totalorder %v438, 0
      %v1579 = vand.u32 %v438, 2139095040
      %v1580 = vshrl.u32 %v1579, 23
      %v1581 = vsub.s32 %v1580, 127
      %v1582 = vand.u32 2147483647, %v438
      %v1583 = vand.u32 %v1582, 8388607
      %v1584 = vor.u32 %v1583, 8388608
      %v1585 = vsub.s32 0, %v1584
      %v1586 = vadd.s32 %v1581, 1
      %vm1587 = vcmp.gt.s32.totalorder %v1586, 0
      %v1588 = vsel %vm1587, %v1586, 0
      %v1589 = vshrl.u32 %v1588, 5
      %v1590 = vand.u32 %v1588, 31
      %v1591 = vsub.s32 32, %v1590
      %v1592 = vshrl.u32 683565275, %v1591
      %v1593 = vshll.u32 683565275, %v1590
      %v1594 = vshrl.u32 2475754826, %v1591
      %v1595 = vor.u32 %v1593, %v1594
      %v1596 = vshll.u32 2475754826, %v1590
      %v1597 = vshrl.u32 2131351028, %v1591
      %v1598 = vor.u32 %v1596, %v1597
      %v1599 = vshll.u32 2131351028, %v1590
      %v1600 = vshrl.u32 2102212464, %v1591
      %v1601 = vor.u32 %v1599, %v1600
      %v1602 = vshll.u32 2102212464, %v1590
      %v1603 = vshrl.u32 920167782, %v1591
      %v1604 = vor.u32 %v1602, %v1603
      %v1605 = vshll.u32 920167782, %v1590
      %v1606 = vshrl.u32 1326507024, %v1591
      %v1607 = vor.u32 %v1605, %v1606
      %vm1608 = vcmp.lt.s32.totalorder %v1589, 1
      %vm1609 = vcmp.lt.s32.totalorder %v1589, 2
      %vm1610 = vcmp.lt.s32.totalorder %v1589, 3
      %vm1611 = vcmp.lt.s32.totalorder %v1589, 4
      %v1612 = vsel %vm1608, %v1592, %v1595
      %v1613 = vsel %vm1611, %v1601, 2102212464
      %v1614 = vsel %vm1610, %v1598, %v1613
      %v1615 = vsel %vm1609, %v1612, %v1614
      %v1616 = vsel %vm1608, %v1595, %v1598
      %v1617 = vsel %vm1611, %v1604, 920167782
      %v1618 = vsel %vm1610, %v1601, %v1617
      %v1619 = vsel %vm1609, %v1616, %v1618
      %v1620 = vsel %vm1608, %v1598, %v1601
      %v1621 = vsel %vm1611, %v1607, 1326507024
      %v1622 = vsel %vm1610, %v1604, %v1621
      %v1623 = vsel %vm1609, %v1620, %v1622
      %v1624 = vshll.u32 %v1584, 8
      %v1625 = vmul.u32.u64.compose %v1624, %v1623
      %v1626 = vextract.low.u32 %v1625
      %v1627 = vextract.high.u32 %v1625
      %v1628 = vmul.u32.u64.compose %v1624, %v1619
      %v1629 = vextract.low.u32 %v1628
      %v1630 = vextract.high.u32 %v1628
      %v1631 = vmul.u32 %v1624, %v1615
      %v1632 = vadd.s32 %v1627, %v1629
      %vm1633 = vc.u32 %v1627, %v1629
      %v1634 = vadd.s32 %v1630, 1
      %v1635 = vsel %vm1633, %v1634, %v1630
      %v1636 = vadd.s32 %v1631, %v1635
      %v1637 = vadd.s32 %v1636, 536870912
      %v1638 = vshrl.u32 %v1637, 30
      %v1639 = vshll.u32 %v1638, 30
      %v1640 = vsub.s32 %v1636, %v1639
      %vm1641 = vcmp.lt.s32.totalorder %v1640, 0
      %v1642 = vsub.s32 0, %v1640
      %v1643 = vsel %vm1641, %v1642, %v1640
      %v1644 = vclz %v1643
      %v1645 = vsub.s32 %v1644, 2
      %vm1646 = vcmp.gt.s32.totalorder 0, %v1645
      %v1647 = vsel %vm1646, 0, %v1645
      %v1648 = vsub.s32 32, %v1647
      %v1649 = vshll.u32 %v1640, %v1647
      %v1650 = vshrl.u32 %v1632, %v1648
      %v1651 = vor.u32 %v1649, %v1650
      %v1652 = vsub.s32 4294967266, %v1647
      %v1653 = vadd.s32 %v1652, 127
      %v1654 = vshll.u32 %v1653, 23
      %v1655 = vor.u32 4788187, %v1654
      %v1656 = vand.u32 2147483647, %v1655
      %v1658 = vcvt.s32.f32 %v1651
      %v1659 = vmul.f32 %v1658, %v1656
      %v1660 = vxor.u32 %v1659, 2147483648
      %v1661 = vsel %vm1578, %v1660, %v1659
      %v1662 = vsub.s32 4, %v1638
      %v1663 = vsel %vm1578, %v1662, %v1638
      %v1664 = vsel %vm1577, %v438, %v1661
      %v1665 = vsel %vm1577, 0, %v1663
      %v1666 = vcosq.f32.pop %v1664
      %v1667 = vsinq.f32.pop %v1664
      %vm1668 = vweird.f32 %v438
      %v1669 = vand.u32 %v1665, 3
      %vm1670 = vcmp.lt.s32.totalorder %v1669, 2
      %vm1671 = vcmp.eq.s32.totalorder %v1669, 0
      %v1672 = vxor.u32 %v1667, 2147483648
      %v1673 = vsel %vm1671, %v1666, %v1672
      %vm1674 = vcmp.eq.s32.totalorder %v1669, 2
      %v1675 = vxor.u32 %v1666, 2147483648
      %v1676 = vsel %vm1674, %v1675, %v1667
      %v1677 = vsel %vm1670, %v1673, %v1676
      %v1678 = vsel %vm1668, nan, %v1677
      %v1679 = vand.u32 2147483647, %v439
      %vm1680 = vcmp.le.f32.partialorder %v1679, 0.7853982
      %vm1681 = vcmp.lt.s32.totalorder %v439, 0
      %v1682 = vand.u32 %v439, 2139095040
      %v1683 = vshrl.u32 %v1682, 23
      %v1684 = vsub.s32 %v1683, 127
      %v1685 = vand.u32 2147483647, %v439
      %v1686 = vand.u32 %v1685, 8388607
      %v1687 = vor.u32 %v1686, 8388608
      %v1688 = vsub.s32 0, %v1687
      %v1689 = vadd.s32 %v1684, 1
      %vm1690 = vcmp.gt.s32.totalorder %v1689, 0
      %v1691 = vsel %vm1690, %v1689, 0
      %v1692 = vshrl.u32 %v1691, 5
      %v1693 = vand.u32 %v1691, 31
      %v1694 = vsub.s32 32, %v1693
      %v1695 = vshrl.u32 683565275, %v1694
      %v1696 = vshll.u32 683565275, %v1693
      %v1697 = vshrl.u32 2475754826, %v1694
      %v1698 = vor.u32 %v1696, %v1697
      %v1699 = vshll.u32 2475754826, %v1693
      %v1700 = vshrl.u32 2131351028, %v1694
      %v1701 = vor.u32 %v1699, %v1700
      %v1702 = vshll.u32 2131351028, %v1693
      %v1703 = vshrl.u32 2102212464, %v1694
      %v1704 = vor.u32 %v1702, %v1703
      %v1705 = vshll.u32 2102212464, %v1693
      %v1706 = vshrl.u32 920167782, %v1694
      %v1707 = vor.u32 %v1705, %v1706
      %v1708 = vshll.u32 920167782, %v1693
      %v1709 = vshrl.u32 1326507024, %v1694
      %v1710 = vor.u32 %v1708, %v1709
      %vm1711 = vcmp.lt.s32.totalorder %v1692, 1
      %vm1712 = vcmp.lt.s32.totalorder %v1692, 2
      %vm1713 = vcmp.lt.s32.totalorder %v1692, 3
      %vm1714 = vcmp.lt.s32.totalorder %v1692, 4
      %v1715 = vsel %vm1711, %v1695, %v1698
      %v1716 = vsel %vm1714, %v1704, 2102212464
      %v1717 = vsel %vm1713, %v1701, %v1716
      %v1718 = vsel %vm1712, %v1715, %v1717
      %v1719 = vsel %vm1711, %v1698, %v1701
      %v1720 = vsel %vm1714, %v1707, 920167782
      %v1721 = vsel %vm1713, %v1704, %v1720
      %v1722 = vsel %vm1712, %v1719, %v1721
      %v1723 = vsel %vm1711, %v1701, %v1704
      %v1724 = vsel %vm1714, %v1710, 1326507024
      %v1725 = vsel %vm1713, %v1707, %v1724
      %v1726 = vsel %vm1712, %v1723, %v1725
      %v1727 = vshll.u32 %v1687, 8
      %v1728 = vmul.u32.u64.compose %v1727, %v1726
      %v1729 = vextract.low.u32 %v1728
      %v1730 = vextract.high.u32 %v1728
      %v1731 = vmul.u32.u64.compose %v1727, %v1722
      %v1732 = vextract.low.u32 %v1731
      %v1733 = vextract.high.u32 %v1731
      %v1734 = vmul.u32 %v1727, %v1718
      %v1735 = vadd.s32 %v1730, %v1732
      %vm1736 = vc.u32 %v1730, %v1732
      %v1737 = vadd.s32 %v1733, 1
      %v1738 = vsel %vm1736, %v1737, %v1733
      %v1739 = vadd.s32 %v1734, %v1738
      %v1740 = vadd.s32 %v1739, 536870912
      %v1741 = vshrl.u32 %v1740, 30
      %v1742 = vshll.u32 %v1741, 30
      %v1743 = vsub.s32 %v1739, %v1742
      %vm1744 = vcmp.lt.s32.totalorder %v1743, 0
      %v1745 = vsub.s32 0, %v1743
      %v1746 = vsel %vm1744, %v1745, %v1743
      %v1747 = vclz %v1746
      %v1748 = vsub.s32 %v1747, 2
      %vm1749 = vcmp.gt.s32.totalorder 0, %v1748
      %v1750 = vsel %vm1749, 0, %v1748
      %v1751 = vsub.s32 32, %v1750
      %v1752 = vshll.u32 %v1743, %v1750
      %v1753 = vshrl.u32 %v1735, %v1751
      %v1754 = vor.u32 %v1752, %v1753
      %v1755 = vsub.s32 4294967266, %v1750
      %v1756 = vadd.s32 %v1755, 127
      %v1757 = vshll.u32 %v1756, 23
      %v1758 = vor.u32 4788187, %v1757
      %v1759 = vand.u32 2147483647, %v1758
      %v1761 = vcvt.s32.f32 %v1754
      %v1762 = vmul.f32 %v1761, %v1759
      %v1763 = vxor.u32 %v1762, 2147483648
      %v1764 = vsel %vm1681, %v1763, %v1762
      %v1765 = vsub.s32 4, %v1741
      %v1766 = vsel %vm1681, %v1765, %v1741
      %v1767 = vsel %vm1680, %v439, %v1764
      %v1768 = vsel %vm1680, 0, %v1766
      %v1769 = vcosq.f32.pop %v1767
      %v1770 = vsinq.f32.pop %v1767
      %vm1771 = vweird.f32 %v439
      %v1772 = vand.u32 %v1768, 3
      %vm1773 = vcmp.lt.s32.totalorder %v1772, 2
      %vm1774 = vcmp.eq.s32.totalorder %v1772, 0
      %v1775 = vxor.u32 %v1770, 2147483648
      %v1776 = vsel %vm1774, %v1769, %v1775
      %vm1777 = vcmp.eq.s32.totalorder %v1772, 2
      %v1778 = vxor.u32 %v1769, 2147483648
      %v1779 = vsel %vm1777, %v1778, %v1770
      %v1780 = vsel %vm1773, %v1776, %v1779
      %v1781 = vsel %vm1771, nan, %v1780
      %v1782 = vand.u32 2147483647, %v440
      %vm1783 = vcmp.le.f32.partialorder %v1782, 0.7853982
      %vm1784 = vcmp.lt.s32.totalorder %v440, 0
      %v1785 = vand.u32 %v440, 2139095040
      %v1786 = vshrl.u32 %v1785, 23
      %v1787 = vsub.s32 %v1786, 127
      %v1788 = vand.u32 2147483647, %v440
      %v1789 = vand.u32 %v1788, 8388607
      %v1790 = vor.u32 %v1789, 8388608
      %v1791 = vsub.s32 0, %v1790
      %v1792 = vadd.s32 %v1787, 1
      %vm1793 = vcmp.gt.s32.totalorder %v1792, 0
      %v1794 = vsel %vm1793, %v1792, 0
      %v1795 = vshrl.u32 %v1794, 5
      %v1796 = vand.u32 %v1794, 31
      %v1797 = vsub.s32 32, %v1796
      %v1798 = vshrl.u32 683565275, %v1797
      %v1799 = vshll.u32 683565275, %v1796
      %v1800 = vshrl.u32 2475754826, %v1797
      %v1801 = vor.u32 %v1799, %v1800
      %v1802 = vshll.u32 2475754826, %v1796
      %v1803 = vshrl.u32 2131351028, %v1797
      %v1804 = vor.u32 %v1802, %v1803
      %v1805 = vshll.u32 2131351028, %v1796
      %v1806 = vshrl.u32 2102212464, %v1797
      %v1807 = vor.u32 %v1805, %v1806
      %v1808 = vshll.u32 2102212464, %v1796
      %v1809 = vshrl.u32 920167782, %v1797
      %v1810 = vor.u32 %v1808, %v1809
      %v1811 = vshll.u32 920167782, %v1796
      %v1812 = vshrl.u32 1326507024, %v1797
      %v1813 = vor.u32 %v1811, %v1812
      %vm1814 = vcmp.lt.s32.totalorder %v1795, 1
      %vm1815 = vcmp.lt.s32.totalorder %v1795, 2
      %vm1816 = vcmp.lt.s32.totalorder %v1795, 3
      %vm1817 = vcmp.lt.s32.totalorder %v1795, 4
      %v1818 = vsel %vm1814, %v1798, %v1801
      %v1819 = vsel %vm1817, %v1807, 2102212464
      %v1820 = vsel %vm1816, %v1804, %v1819
      %v1821 = vsel %vm1815, %v1818, %v1820
      %v1822 = vsel %vm1814, %v1801, %v1804
      %v1823 = vsel %vm1817, %v1810, 920167782
      %v1824 = vsel %vm1816, %v1807, %v1823
      %v1825 = vsel %vm1815, %v1822, %v1824
      %v1826 = vsel %vm1814, %v1804, %v1807
      %v1827 = vsel %vm1817, %v1813, 1326507024
      %v1828 = vsel %vm1816, %v1810, %v1827
      %v1829 = vsel %vm1815, %v1826, %v1828
      %v1830 = vshll.u32 %v1790, 8
      %v1831 = vmul.u32.u64.compose %v1830, %v1829
      %v1832 = vextract.low.u32 %v1831
      %v1833 = vextract.high.u32 %v1831
      %v1834 = vmul.u32.u64.compose %v1830, %v1825
      %v1835 = vextract.low.u32 %v1834
      %v1836 = vextract.high.u32 %v1834
      %v1837 = vmul.u32 %v1830, %v1821
      %v1838 = vadd.s32 %v1833, %v1835
      %vm1839 = vc.u32 %v1833, %v1835
      %v1840 = vadd.s32 %v1836, 1
      %v1841 = vsel %vm1839, %v1840, %v1836
      %v1842 = vadd.s32 %v1837, %v1841
      %v1843 = vadd.s32 %v1842, 536870912
      %v1844 = vshrl.u32 %v1843, 30
      %v1845 = vshll.u32 %v1844, 30
      %v1846 = vsub.s32 %v1842, %v1845
      %vm1847 = vcmp.lt.s32.totalorder %v1846, 0
      %v1848 = vsub.s32 0, %v1846
      %v1849 = vsel %vm1847, %v1848, %v1846
      %v1850 = vclz %v1849
      %v1851 = vsub.s32 %v1850, 2
      %vm1852 = vcmp.gt.s32.totalorder 0, %v1851
      %v1853 = vsel %vm1852, 0, %v1851
      %v1854 = vsub.s32 32, %v1853
      %v1855 = vshll.u32 %v1846, %v1853
      %v1856 = vshrl.u32 %v1838, %v1854
      %v1857 = vor.u32 %v1855, %v1856
      %v1858 = vsub.s32 4294967266, %v1853
      %v1859 = vadd.s32 %v1858, 127
      %v1860 = vshll.u32 %v1859, 23
      %v1861 = vor.u32 4788187, %v1860
      %v1862 = vand.u32 2147483647, %v1861
      %v1864 = vcvt.s32.f32 %v1857
      %v1865 = vmul.f32 %v1864, %v1862
      %v1866 = vxor.u32 %v1865, 2147483648
      %v1867 = vsel %vm1784, %v1866, %v1865
      %v1868 = vsub.s32 4, %v1844
      %v1869 = vsel %vm1784, %v1868, %v1844
      %v1870 = vsel %vm1783, %v440, %v1867
      %v1871 = vsel %vm1783, 0, %v1869
      %v1872 = vcosq.f32.pop %v1870
      %v1873 = vsinq.f32.pop %v1870
      %vm1874 = vweird.f32 %v440
      %v1875 = vand.u32 %v1871, 3
      %vm1876 = vcmp.lt.s32.totalorder %v1875, 2
      %vm1877 = vcmp.eq.s32.totalorder %v1875, 0
      %v1878 = vxor.u32 %v1873, 2147483648
      %v1879 = vsel %vm1877, %v1872, %v1878
      %vm1880 = vcmp.eq.s32.totalorder %v1875, 2
      %v1881 = vxor.u32 %v1872, 2147483648
      %v1882 = vsel %vm1880, %v1881, %v1873
      %v1883 = vsel %vm1876, %v1879, %v1882
      %v1884 = vsel %vm1874, nan, %v1883
      %v1885 = vand.u32 2147483647, %v441
      %vm1886 = vcmp.le.f32.partialorder %v1885, 0.7853982
      %vm1887 = vcmp.lt.s32.totalorder %v441, 0
      %v1888 = vand.u32 %v441, 2139095040
      %v1889 = vshrl.u32 %v1888, 23
      %v1890 = vsub.s32 %v1889, 127
      %v1891 = vand.u32 2147483647, %v441
      %v1892 = vand.u32 %v1891, 8388607
      %v1893 = vor.u32 %v1892, 8388608
      %v1894 = vsub.s32 0, %v1893
      %v1895 = vadd.s32 %v1890, 1
      %vm1896 = vcmp.gt.s32.totalorder %v1895, 0
      %v1897 = vsel %vm1896, %v1895, 0
      %v1898 = vshrl.u32 %v1897, 5
      %v1899 = vand.u32 %v1897, 31
      %v1900 = vsub.s32 32, %v1899
      %v1901 = vshrl.u32 683565275, %v1900
      %v1902 = vshll.u32 683565275, %v1899
      %v1903 = vshrl.u32 2475754826, %v1900
      %v1904 = vor.u32 %v1902, %v1903
      %v1905 = vshll.u32 2475754826, %v1899
      %v1906 = vshrl.u32 2131351028, %v1900
      %v1907 = vor.u32 %v1905, %v1906
      %v1908 = vshll.u32 2131351028, %v1899
      %v1909 = vshrl.u32 2102212464, %v1900
      %v1910 = vor.u32 %v1908, %v1909
      %v1911 = vshll.u32 2102212464, %v1899
      %v1912 = vshrl.u32 920167782, %v1900
      %v1913 = vor.u32 %v1911, %v1912
      %v1914 = vshll.u32 920167782, %v1899
      %v1915 = vshrl.u32 1326507024, %v1900
      %v1916 = vor.u32 %v1914, %v1915
      %vm1917 = vcmp.lt.s32.totalorder %v1898, 1
      %vm1918 = vcmp.lt.s32.totalorder %v1898, 2
      %vm1919 = vcmp.lt.s32.totalorder %v1898, 3
      %vm1920 = vcmp.lt.s32.totalorder %v1898, 4
      %v1921 = vsel %vm1917, %v1901, %v1904
      %v1922 = vsel %vm1920, %v1910, 2102212464
      %v1923 = vsel %vm1919, %v1907, %v1922
      %v1924 = vsel %vm1918, %v1921, %v1923
      %v1925 = vsel %vm1917, %v1904, %v1907
      %v1926 = vsel %vm1920, %v1913, 920167782
      %v1927 = vsel %vm1919, %v1910, %v1926
      %v1928 = vsel %vm1918, %v1925, %v1927
      %v1929 = vsel %vm1917, %v1907, %v1910
      %v1930 = vsel %vm1920, %v1916, 1326507024
      %v1931 = vsel %vm1919, %v1913, %v1930
      %v1932 = vsel %vm1918, %v1929, %v1931
      %v1933 = vshll.u32 %v1893, 8
      %v1934 = vmul.u32.u64.compose %v1933, %v1932
      %v1935 = vextract.low.u32 %v1934
      %v1936 = vextract.high.u32 %v1934
      %v1937 = vmul.u32.u64.compose %v1933, %v1928
      %v1938 = vextract.low.u32 %v1937
      %v1939 = vextract.high.u32 %v1937
      %v1940 = vmul.u32 %v1933, %v1924
      %v1941 = vadd.s32 %v1936, %v1938
      %vm1942 = vc.u32 %v1936, %v1938
      %v1943 = vadd.s32 %v1939, 1
      %v1944 = vsel %vm1942, %v1943, %v1939
      %v1945 = vadd.s32 %v1940, %v1944
      %v1946 = vadd.s32 %v1945, 536870912
      %v1947 = vshrl.u32 %v1946, 30
      %v1948 = vshll.u32 %v1947, 30
      %v1949 = vsub.s32 %v1945, %v1948
      %vm1950 = vcmp.lt.s32.totalorder %v1949, 0
      %v1951 = vsub.s32 0, %v1949
      %v1952 = vsel %vm1950, %v1951, %v1949
      %v1953 = vclz %v1952
      %v1954 = vsub.s32 %v1953, 2
      %vm1955 = vcmp.gt.s32.totalorder 0, %v1954
      %v1956 = vsel %vm1955, 0, %v1954
      %v1957 = vsub.s32 32, %v1956
      %v1958 = vshll.u32 %v1949, %v1956
      %v1959 = vshrl.u32 %v1941, %v1957
      %v1960 = vor.u32 %v1958, %v1959
      %v1961 = vsub.s32 4294967266, %v1956
      %v1962 = vadd.s32 %v1961, 127
      %v1963 = vshll.u32 %v1962, 23
      %v1964 = vor.u32 4788187, %v1963
      %v1965 = vand.u32 2147483647, %v1964
      %v1967 = vcvt.s32.f32 %v1960
      %v1968 = vmul.f32 %v1967, %v1965
      %v1969 = vxor.u32 %v1968, 2147483648
      %v1970 = vsel %vm1887, %v1969, %v1968
      %v1971 = vsub.s32 4, %v1947
      %v1972 = vsel %vm1887, %v1971, %v1947
      %v1973 = vsel %vm1886, %v441, %v1970
      %v1974 = vsel %vm1886, 0, %v1972
      %v1975 = vcosq.f32.pop %v1973
      %v1976 = vsinq.f32.pop %v1973
      %vm1977 = vweird.f32 %v441
      %v1978 = vand.u32 %v1974, 3
      %vm1979 = vcmp.lt.s32.totalorder %v1978, 2
      %vm1980 = vcmp.eq.s32.totalorder %v1978, 0
      %v1981 = vxor.u32 %v1976, 2147483648
      %v1982 = vsel %vm1980, %v1975, %v1981
      %vm1983 = vcmp.eq.s32.totalorder %v1978, 2
      %v1984 = vxor.u32 %v1975, 2147483648
      %v1985 = vsel %vm1983, %v1984, %v1976
      %v1986 = vsel %vm1979, %v1982, %v1985
      %v1987 = vsel %vm1977, nan, %v1986
      %v1988 = vand.u32 2147483647, %v442
      %vm1989 = vcmp.le.f32.partialorder %v1988, 0.7853982
      %vm1990 = vcmp.lt.s32.totalorder %v442, 0
      %v1991 = vand.u32 %v442, 2139095040
      %v1992 = vshrl.u32 %v1991, 23
      %v1993 = vsub.s32 %v1992, 127
      %v1994 = vand.u32 2147483647, %v442
      %v1995 = vand.u32 %v1994, 8388607
      %v1996 = vor.u32 %v1995, 8388608
      %v1997 = vsub.s32 0, %v1996
      %v1998 = vadd.s32 %v1993, 1
      %vm1999 = vcmp.gt.s32.totalorder %v1998, 0
      %v2000 = vsel %vm1999, %v1998, 0
      %v2001 = vshrl.u32 %v2000, 5
      %v2002 = vand.u32 %v2000, 31
      %v2003 = vsub.s32 32, %v2002
      %v2004 = vshrl.u32 683565275, %v2003
      %v2005 = vshll.u32 683565275, %v2002
      %v2006 = vshrl.u32 2475754826, %v2003
      %v2007 = vor.u32 %v2005, %v2006
      %v2008 = vshll.u32 2475754826, %v2002
      %v2009 = vshrl.u32 2131351028, %v2003
      %v2010 = vor.u32 %v2008, %v2009
      %v2011 = vshll.u32 2131351028, %v2002
      %v2012 = vshrl.u32 2102212464, %v2003
      %v2013 = vor.u32 %v2011, %v2012
      %v2014 = vshll.u32 2102212464, %v2002
      %v2015 = vshrl.u32 920167782, %v2003
      %v2016 = vor.u32 %v2014, %v2015
      %v2017 = vshll.u32 920167782, %v2002
      %v2018 = vshrl.u32 1326507024, %v2003
      %v2019 = vor.u32 %v2017, %v2018
      %vm2020 = vcmp.lt.s32.totalorder %v2001, 1
      %vm2021 = vcmp.lt.s32.totalorder %v2001, 2
      %vm2022 = vcmp.lt.s32.totalorder %v2001, 3
      %vm2023 = vcmp.lt.s32.totalorder %v2001, 4
      %v2024 = vsel %vm2020, %v2004, %v2007
      %v2025 = vsel %vm2023, %v2013, 2102212464
      %v2026 = vsel %vm2022, %v2010, %v2025
      %v2027 = vsel %vm2021, %v2024, %v2026
      %v2028 = vsel %vm2020, %v2007, %v2010
      %v2029 = vsel %vm2023, %v2016, 920167782
      %v2030 = vsel %vm2022, %v2013, %v2029
      %v2031 = vsel %vm2021, %v2028, %v2030
      %v2032 = vsel %vm2020, %v2010, %v2013
      %v2033 = vsel %vm2023, %v2019, 1326507024
      %v2034 = vsel %vm2022, %v2016, %v2033
      %v2035 = vsel %vm2021, %v2032, %v2034
      %v2036 = vshll.u32 %v1996, 8
      %v2037 = vmul.u32.u64.compose %v2036, %v2035
      %v2038 = vextract.low.u32 %v2037
      %v2039 = vextract.high.u32 %v2037
      %v2040 = vmul.u32.u64.compose %v2036, %v2031
      %v2041 = vextract.low.u32 %v2040
      %v2042 = vextract.high.u32 %v2040
      %v2043 = vmul.u32 %v2036, %v2027
      %v2044 = vadd.s32 %v2039, %v2041
      %vm2045 = vc.u32 %v2039, %v2041
      %v2046 = vadd.s32 %v2042, 1
      %v2047 = vsel %vm2045, %v2046, %v2042
      %v2048 = vadd.s32 %v2043, %v2047
      %v2049 = vadd.s32 %v2048, 536870912
      %v2050 = vshrl.u32 %v2049, 30
      %v2051 = vshll.u32 %v2050, 30
      %v2052 = vsub.s32 %v2048, %v2051
      %vm2053 = vcmp.lt.s32.totalorder %v2052, 0
      %v2054 = vsub.s32 0, %v2052
      %v2055 = vsel %vm2053, %v2054, %v2052
      %v2056 = vclz %v2055
      %v2057 = vsub.s32 %v2056, 2
      %vm2058 = vcmp.gt.s32.totalorder 0, %v2057
      %v2059 = vsel %vm2058, 0, %v2057
      %v2060 = vsub.s32 32, %v2059
      %v2061 = vshll.u32 %v2052, %v2059
      %v2062 = vshrl.u32 %v2044, %v2060
      %v2063 = vor.u32 %v2061, %v2062
      %v2064 = vsub.s32 4294967266, %v2059
      %v2065 = vadd.s32 %v2064, 127
      %v2066 = vshll.u32 %v2065, 23
      %v2067 = vor.u32 4788187, %v2066
      %v2068 = vand.u32 2147483647, %v2067
      %v2070 = vcvt.s32.f32 %v2063
      %v2071 = vmul.f32 %v2070, %v2068
      %v2072 = vxor.u32 %v2071, 2147483648
      %v2073 = vsel %vm1990, %v2072, %v2071
      %v2074 = vsub.s32 4, %v2050
      %v2075 = vsel %vm1990, %v2074, %v2050
      %v2076 = vsel %vm1989, %v442, %v2073
      %v2077 = vsel %vm1989, 0, %v2075
      %v2078 = vcosq.f32.pop %v2076
      %v2079 = vsinq.f32.pop %v2076
      %vm2080 = vweird.f32 %v442
      %v2081 = vand.u32 %v2077, 3
      %vm2082 = vcmp.lt.s32.totalorder %v2081, 2
      %vm2083 = vcmp.eq.s32.totalorder %v2081, 0
      %v2084 = vxor.u32 %v2079, 2147483648
      %v2085 = vsel %vm2083, %v2078, %v2084
      %vm2086 = vcmp.eq.s32.totalorder %v2081, 2
      %v2087 = vxor.u32 %v2078, 2147483648
      %v2088 = vsel %vm2086, %v2087, %v2079
      %v2089 = vsel %vm2082, %v2085, %v2088
      %v2090 = vsel %vm2080, nan, %v2089
      %v2091 = vand.u32 2147483647, %v410
      %v2092 = vand.u32 2147483647, %v411
      %v2093 = vand.u32 2147483647, %v412
      %v2094 = vand.u32 2147483647, %v413
      %v2095 = vand.u32 2147483647, %v414
      %v2096 = vand.u32 2147483647, %v415
      %v2097 = vand.u32 2147483647, %v416
      %v2098 = vand.u32 2147483647, %v417
      %v2099 = vand.u32 2147483647, %v418
      %v2100 = vand.u32 2147483647, %v419
      %v2101 = vand.u32 2147483647, %v420
      %v2102 = vand.u32 2147483647, %v421
      %v2103 = vand.u32 2147483647, %v422
      %v2104 = vand.u32 2147483647, %v423
      %v2105 = vand.u32 2147483647, %v424
      %v2106 = vand.u32 2147483647, %v425
      %vm2107 = vcmp.lt.f32.partialorder %v2091, 1e-05
      %vm2108 = vcmp.lt.f32.partialorder %v2092, 1e-05
      %vm2109 = vcmp.lt.f32.partialorder %v2093, 1e-05
      %vm2110 = vcmp.lt.f32.partialorder %v2094, 1e-05
      %vm2111 = vcmp.lt.f32.partialorder %v2095, 1e-05
      %vm2112 = vcmp.lt.f32.partialorder %v2096, 1e-05
      %vm2113 = vcmp.lt.f32.partialorder %v2097, 1e-05
      %vm2114 = vcmp.lt.f32.partialorder %v2098, 1e-05
      %vm2115 = vcmp.lt.f32.partialorder %v2099, 1e-05
      %vm2116 = vcmp.lt.f32.partialorder %v2100, 1e-05
      %vm2117 = vcmp.lt.f32.partialorder %v2101, 1e-05
      %vm2118 = vcmp.lt.f32.partialorder %v2102, 1e-05
      %vm2119 = vcmp.lt.f32.partialorder %v2103, 1e-05
      %vm2120 = vcmp.lt.f32.partialorder %v2104, 1e-05
      %vm2121 = vcmp.lt.f32.partialorder %v2105, 1e-05
      %vm2122 = vcmp.lt.f32.partialorder %v2106, 1e-05
      %v2123 = vand.u32 2147483647, %v427
      %vm2124 = vcmp.le.f32.partialorder %v2123, 0.7853982
      %vm2125 = vcmp.lt.s32.totalorder %v427, 0
      %v2126 = vand.u32 %v427, 2139095040
      %v2127 = vshrl.u32 %v2126, 23
      %v2128 = vsub.s32 %v2127, 127
      %v2129 = vand.u32 2147483647, %v427
      %v2130 = vand.u32 %v2129, 8388607
      %v2131 = vor.u32 %v2130, 8388608
      %v2132 = vsub.s32 0, %v2131
      %v2133 = vadd.s32 %v2128, 1
      %vm2134 = vcmp.gt.s32.totalorder %v2133, 0
      %v2135 = vsel %vm2134, %v2133, 0
      %v2136 = vshrl.u32 %v2135, 5
      %v2137 = vand.u32 %v2135, 31
      %v2138 = vsub.s32 32, %v2137
      %v2139 = vshrl.u32 683565275, %v2138
      %v2140 = vshll.u32 683565275, %v2137
      %v2141 = vshrl.u32 2475754826, %v2138
      %v2142 = vor.u32 %v2140, %v2141
      %v2143 = vshll.u32 2475754826, %v2137
      %v2144 = vshrl.u32 2131351028, %v2138
      %v2145 = vor.u32 %v2143, %v2144
      %v2146 = vshll.u32 2131351028, %v2137
      %v2147 = vshrl.u32 2102212464, %v2138
      %v2148 = vor.u32 %v2146, %v2147
      %v2149 = vshll.u32 2102212464, %v2137
      %v2150 = vshrl.u32 920167782, %v2138
      %v2151 = vor.u32 %v2149, %v2150
      %v2152 = vshll.u32 920167782, %v2137
      %v2153 = vshrl.u32 1326507024, %v2138
      %v2154 = vor.u32 %v2152, %v2153
      %vm2155 = vcmp.lt.s32.totalorder %v2136, 1
      %vm2156 = vcmp.lt.s32.totalorder %v2136, 2
      %vm2157 = vcmp.lt.s32.totalorder %v2136, 3
      %vm2158 = vcmp.lt.s32.totalorder %v2136, 4
      %v2159 = vsel %vm2155, %v2139, %v2142
      %v2160 = vsel %vm2158, %v2148, 2102212464
      %v2161 = vsel %vm2157, %v2145, %v2160
      %v2162 = vsel %vm2156, %v2159, %v2161
      %v2163 = vsel %vm2155, %v2142, %v2145
      %v2164 = vsel %vm2158, %v2151, 920167782
      %v2165 = vsel %vm2157, %v2148, %v2164
      %v2166 = vsel %vm2156, %v2163, %v2165
      %v2167 = vsel %vm2155, %v2145, %v2148
      %v2168 = vsel %vm2158, %v2154, 1326507024
      %v2169 = vsel %vm2157, %v2151, %v2168
      %v2170 = vsel %vm2156, %v2167, %v2169
      %v2171 = vshll.u32 %v2131, 8
      %v2172 = vmul.u32.u64.compose %v2171, %v2170
      %v2173 = vextract.low.u32 %v2172
      %v2174 = vextract.high.u32 %v2172
      %v2175 = vmul.u32.u64.compose %v2171, %v2166
      %v2176 = vextract.low.u32 %v2175
      %v2177 = vextract.high.u32 %v2175
      %v2178 = vmul.u32 %v2171, %v2162
      %v2179 = vadd.s32 %v2174, %v2176
      %vm2180 = vc.u32 %v2174, %v2176
      %v2181 = vadd.s32 %v2177, 1
      %v2182 = vsel %vm2180, %v2181, %v2177
      %v2183 = vadd.s32 %v2178, %v2182
      %v2184 = vadd.s32 %v2183, 536870912
      %v2185 = vshrl.u32 %v2184, 30
      %v2186 = vshll.u32 %v2185, 30
      %v2187 = vsub.s32 %v2183, %v2186
      %vm2188 = vcmp.lt.s32.totalorder %v2187, 0
      %v2189 = vsub.s32 0, %v2187
      %v2190 = vsel %vm2188, %v2189, %v2187
      %v2191 = vclz %v2190
      %v2192 = vsub.s32 %v2191, 2
      %vm2193 = vcmp.gt.s32.totalorder 0, %v2192
      %v2194 = vsel %vm2193, 0, %v2192
      %v2195 = vsub.s32 32, %v2194
      %v2196 = vshll.u32 %v2187, %v2194
      %v2197 = vshrl.u32 %v2179, %v2195
      %v2198 = vor.u32 %v2196, %v2197
      %v2199 = vsub.s32 4294967266, %v2194
      %v2200 = vadd.s32 %v2199, 127
      %v2201 = vshll.u32 %v2200, 23
      %v2202 = vor.u32 4788187, %v2201
      %v2203 = vand.u32 2147483647, %v2202
      %v2205 = vcvt.s32.f32 %v2198
      %v2206 = vmul.f32 %v2205, %v2203
      %v2207 = vxor.u32 %v2206, 2147483648
      %v2208 = vsel %vm2125, %v2207, %v2206
      %v2209 = vsub.s32 4, %v2185
      %v2210 = vsel %vm2125, %v2209, %v2185
      %v2211 = vsel %vm2124, %v427, %v2208
      %v2212 = vsel %vm2124, 0, %v2210
      %v2213 = vcosq.f32.pop %v2211
      %v2214 = vsinq.f32.pop %v2211
      %vm2215 = vweird.f32 %v427
      %v2216 = vadd.s32 %v2212, 3
      %v2217 = vand.u32 %v2216, 3
      %vm2218 = vcmp.lt.s32.totalorder %v2217, 2
      %vm2219 = vcmp.eq.s32.totalorder %v2217, 0
      %v2220 = vxor.u32 %v2214, 2147483648
      %v2221 = vsel %vm2219, %v2213, %v2220
      %vm2222 = vcmp.eq.s32.totalorder %v2217, 2
      %v2223 = vxor.u32 %v2213, 2147483648
      %v2224 = vsel %vm2222, %v2223, %v2214
      %v2225 = vsel %vm2218, %v2221, %v2224
      %v2226 = vsel %vm2215, nan, %v2225
      %v2227 = vand.u32 2147483647, %v428
      %vm2228 = vcmp.le.f32.partialorder %v2227, 0.7853982
      %vm2229 = vcmp.lt.s32.totalorder %v428, 0
      %v2230 = vand.u32 %v428, 2139095040
      %v2231 = vshrl.u32 %v2230, 23
      %v2232 = vsub.s32 %v2231, 127
      %v2233 = vand.u32 2147483647, %v428
      %v2234 = vand.u32 %v2233, 8388607
      %v2235 = vor.u32 %v2234, 8388608
      %v2236 = vsub.s32 0, %v2235
      %v2237 = vadd.s32 %v2232, 1
      %vm2238 = vcmp.gt.s32.totalorder %v2237, 0
      %v2239 = vsel %vm2238, %v2237, 0
      %v2240 = vshrl.u32 %v2239, 5
      %v2241 = vand.u32 %v2239, 31
      %v2242 = vsub.s32 32, %v2241
      %v2243 = vshrl.u32 683565275, %v2242
      %v2244 = vshll.u32 683565275, %v2241
      %v2245 = vshrl.u32 2475754826, %v2242
      %v2246 = vor.u32 %v2244, %v2245
      %v2247 = vshll.u32 2475754826, %v2241
      %v2248 = vshrl.u32 2131351028, %v2242
      %v2249 = vor.u32 %v2247, %v2248
      %v2250 = vshll.u32 2131351028, %v2241
      %v2251 = vshrl.u32 2102212464, %v2242
      %v2252 = vor.u32 %v2250, %v2251
      %v2253 = vshll.u32 2102212464, %v2241
      %v2254 = vshrl.u32 920167782, %v2242
      %v2255 = vor.u32 %v2253, %v2254
      %v2256 = vshll.u32 920167782, %v2241
      %v2257 = vshrl.u32 1326507024, %v2242
      %v2258 = vor.u32 %v2256, %v2257
      %vm2259 = vcmp.lt.s32.totalorder %v2240, 1
      %vm2260 = vcmp.lt.s32.totalorder %v2240, 2
      %vm2261 = vcmp.lt.s32.totalorder %v2240, 3
      %vm2262 = vcmp.lt.s32.totalorder %v2240, 4
      %v2263 = vsel %vm2259, %v2243, %v2246
      %v2264 = vsel %vm2262, %v2252, 2102212464
      %v2265 = vsel %vm2261, %v2249, %v2264
      %v2266 = vsel %vm2260, %v2263, %v2265
      %v2267 = vsel %vm2259, %v2246, %v2249
      %v2268 = vsel %vm2262, %v2255, 920167782
      %v2269 = vsel %vm2261, %v2252, %v2268
      %v2270 = vsel %vm2260, %v2267, %v2269
      %v2271 = vsel %vm2259, %v2249, %v2252
      %v2272 = vsel %vm2262, %v2258, 1326507024
      %v2273 = vsel %vm2261, %v2255, %v2272
      %v2274 = vsel %vm2260, %v2271, %v2273
      %v2275 = vshll.u32 %v2235, 8
      %v2276 = vmul.u32.u64.compose %v2275, %v2274
      %v2277 = vextract.low.u32 %v2276
      %v2278 = vextract.high.u32 %v2276
      %v2279 = vmul.u32.u64.compose %v2275, %v2270
      %v2280 = vextract.low.u32 %v2279
      %v2281 = vextract.high.u32 %v2279
      %v2282 = vmul.u32 %v2275, %v2266
      %v2283 = vadd.s32 %v2278, %v2280
      %vm2284 = vc.u32 %v2278, %v2280
      %v2285 = vadd.s32 %v2281, 1
      %v2286 = vsel %vm2284, %v2285, %v2281
      %v2287 = vadd.s32 %v2282, %v2286
      %v2288 = vadd.s32 %v2287, 536870912
      %v2289 = vshrl.u32 %v2288, 30
      %v2290 = vshll.u32 %v2289, 30
      %v2291 = vsub.s32 %v2287, %v2290
      %vm2292 = vcmp.lt.s32.totalorder %v2291, 0
      %v2293 = vsub.s32 0, %v2291
      %v2294 = vsel %vm2292, %v2293, %v2291
      %v2295 = vclz %v2294
      %v2296 = vsub.s32 %v2295, 2
      %vm2297 = vcmp.gt.s32.totalorder 0, %v2296
      %v2298 = vsel %vm2297, 0, %v2296
      %v2299 = vsub.s32 32, %v2298
      %v2300 = vshll.u32 %v2291, %v2298
      %v2301 = vshrl.u32 %v2283, %v2299
      %v2302 = vor.u32 %v2300, %v2301
      %v2303 = vsub.s32 4294967266, %v2298
      %v2304 = vadd.s32 %v2303, 127
      %v2305 = vshll.u32 %v2304, 23
      %v2306 = vor.u32 4788187, %v2305
      %v2307 = vand.u32 2147483647, %v2306
      %v2309 = vcvt.s32.f32 %v2302
      %v2310 = vmul.f32 %v2309, %v2307
      %v2311 = vxor.u32 %v2310, 2147483648
      %v2312 = vsel %vm2229, %v2311, %v2310
      %v2313 = vsub.s32 4, %v2289
      %v2314 = vsel %vm2229, %v2313, %v2289
      %v2315 = vsel %vm2228, %v428, %v2312
      %v2316 = vsel %vm2228, 0, %v2314
      %v2317 = vcosq.f32.pop %v2315
      %v2318 = vsinq.f32.pop %v2315
      %vm2319 = vweird.f32 %v428
      %v2320 = vadd.s32 %v2316, 3
      %v2321 = vand.u32 %v2320, 3
      %vm2322 = vcmp.lt.s32.totalorder %v2321, 2
      %vm2323 = vcmp.eq.s32.totalorder %v2321, 0
      %v2324 = vxor.u32 %v2318, 2147483648
      %v2325 = vsel %vm2323, %v2317, %v2324
      %vm2326 = vcmp.eq.s32.totalorder %v2321, 2
      %v2327 = vxor.u32 %v2317, 2147483648
      %v2328 = vsel %vm2326, %v2327, %v2318
      %v2329 = vsel %vm2322, %v2325, %v2328
      %v2330 = vsel %vm2319, nan, %v2329
      %v2331 = vand.u32 2147483647, %v429
      %vm2332 = vcmp.le.f32.partialorder %v2331, 0.7853982
      %vm2333 = vcmp.lt.s32.totalorder %v429, 0
      %v2334 = vand.u32 %v429, 2139095040
      %v2335 = vshrl.u32 %v2334, 23
      %v2336 = vsub.s32 %v2335, 127
      %v2337 = vand.u32 2147483647, %v429
      %v2338 = vand.u32 %v2337, 8388607
      %v2339 = vor.u32 %v2338, 8388608
      %v2340 = vsub.s32 0, %v2339
      %v2341 = vadd.s32 %v2336, 1
      %vm2342 = vcmp.gt.s32.totalorder %v2341, 0
      %v2343 = vsel %vm2342, %v2341, 0
      %v2344 = vshrl.u32 %v2343, 5
      %v2345 = vand.u32 %v2343, 31
      %v2346 = vsub.s32 32, %v2345
      %v2347 = vshrl.u32 683565275, %v2346
      %v2348 = vshll.u32 683565275, %v2345
      %v2349 = vshrl.u32 2475754826, %v2346
      %v2350 = vor.u32 %v2348, %v2349
      %v2351 = vshll.u32 2475754826, %v2345
      %v2352 = vshrl.u32 2131351028, %v2346
      %v2353 = vor.u32 %v2351, %v2352
      %v2354 = vshll.u32 2131351028, %v2345
      %v2355 = vshrl.u32 2102212464, %v2346
      %v2356 = vor.u32 %v2354, %v2355
      %v2357 = vshll.u32 2102212464, %v2345
      %v2358 = vshrl.u32 920167782, %v2346
      %v2359 = vor.u32 %v2357, %v2358
      %v2360 = vshll.u32 920167782, %v2345
      %v2361 = vshrl.u32 1326507024, %v2346
      %v2362 = vor.u32 %v2360, %v2361
      %vm2363 = vcmp.lt.s32.totalorder %v2344, 1
      %vm2364 = vcmp.lt.s32.totalorder %v2344, 2
      %vm2365 = vcmp.lt.s32.totalorder %v2344, 3
      %vm2366 = vcmp.lt.s32.totalorder %v2344, 4
      %v2367 = vsel %vm2363, %v2347, %v2350
      %v2368 = vsel %vm2366, %v2356, 2102212464
      %v2369 = vsel %vm2365, %v2353, %v2368
      %v2370 = vsel %vm2364, %v2367, %v2369
      %v2371 = vsel %vm2363, %v2350, %v2353
      %v2372 = vsel %vm2366, %v2359, 920167782
      %v2373 = vsel %vm2365, %v2356, %v2372
      %v2374 = vsel %vm2364, %v2371, %v2373
      %v2375 = vsel %vm2363, %v2353, %v2356
      %v2376 = vsel %vm2366, %v2362, 1326507024
      %v2377 = vsel %vm2365, %v2359, %v2376
      %v2378 = vsel %vm2364, %v2375, %v2377
      %v2379 = vshll.u32 %v2339, 8
      %v2380 = vmul.u32.u64.compose %v2379, %v2378
      %v2381 = vextract.low.u32 %v2380
      %v2382 = vextract.high.u32 %v2380
      %v2383 = vmul.u32.u64.compose %v2379, %v2374
      %v2384 = vextract.low.u32 %v2383
      %v2385 = vextract.high.u32 %v2383
      %v2386 = vmul.u32 %v2379, %v2370
      %v2387 = vadd.s32 %v2382, %v2384
      %vm2388 = vc.u32 %v2382, %v2384
      %v2389 = vadd.s32 %v2385, 1
      %v2390 = vsel %vm2388, %v2389, %v2385
      %v2391 = vadd.s32 %v2386, %v2390
      %v2392 = vadd.s32 %v2391, 536870912
      %v2393 = vshrl.u32 %v2392, 30
      %v2394 = vshll.u32 %v2393, 30
      %v2395 = vsub.s32 %v2391, %v2394
      %vm2396 = vcmp.lt.s32.totalorder %v2395, 0
      %v2397 = vsub.s32 0, %v2395
      %v2398 = vsel %vm2396, %v2397, %v2395
      %v2399 = vclz %v2398
      %v2400 = vsub.s32 %v2399, 2
      %vm2401 = vcmp.gt.s32.totalorder 0, %v2400
      %v2402 = vsel %vm2401, 0, %v2400
      %v2403 = vsub.s32 32, %v2402
      %v2404 = vshll.u32 %v2395, %v2402
      %v2405 = vshrl.u32 %v2387, %v2403
      %v2406 = vor.u32 %v2404, %v2405
      %v2407 = vsub.s32 4294967266, %v2402
      %v2408 = vadd.s32 %v2407, 127
      %v2409 = vshll.u32 %v2408, 23
      %v2410 = vor.u32 4788187, %v2409
      %v2411 = vand.u32 2147483647, %v2410
      %v2413 = vcvt.s32.f32 %v2406
      %v2414 = vmul.f32 %v2413, %v2411
      %v2415 = vxor.u32 %v2414, 2147483648
      %v2416 = vsel %vm2333, %v2415, %v2414
      %v2417 = vsub.s32 4, %v2393
      %v2418 = vsel %vm2333, %v2417, %v2393
      %v2419 = vsel %vm2332, %v429, %v2416
      %v2420 = vsel %vm2332, 0, %v2418
      %v2421 = vcosq.f32.pop %v2419
      %v2422 = vsinq.f32.pop %v2419
      %vm2423 = vweird.f32 %v429
      %v2424 = vadd.s32 %v2420, 3
      %v2425 = vand.u32 %v2424, 3
      %vm2426 = vcmp.lt.s32.totalorder %v2425, 2
      %vm2427 = vcmp.eq.s32.totalorder %v2425, 0
      %v2428 = vxor.u32 %v2422, 2147483648
      %v2429 = vsel %vm2427, %v2421, %v2428
      %vm2430 = vcmp.eq.s32.totalorder %v2425, 2
      %v2431 = vxor.u32 %v2421, 2147483648
      %v2432 = vsel %vm2430, %v2431, %v2422
      %v2433 = vsel %vm2426, %v2429, %v2432
      %v2434 = vsel %vm2423, nan, %v2433
      %v2435 = vand.u32 2147483647, %v430
      %vm2436 = vcmp.le.f32.partialorder %v2435, 0.7853982
      %vm2437 = vcmp.lt.s32.totalorder %v430, 0
      %v2438 = vand.u32 %v430, 2139095040
      %v2439 = vshrl.u32 %v2438, 23
      %v2440 = vsub.s32 %v2439, 127
      %v2441 = vand.u32 2147483647, %v430
      %v2442 = vand.u32 %v2441, 8388607
      %v2443 = vor.u32 %v2442, 8388608
      %v2444 = vsub.s32 0, %v2443
      %v2445 = vadd.s32 %v2440, 1
      %vm2446 = vcmp.gt.s32.totalorder %v2445, 0
      %v2447 = vsel %vm2446, %v2445, 0
      %v2448 = vshrl.u32 %v2447, 5
      %v2449 = vand.u32 %v2447, 31
      %v2450 = vsub.s32 32, %v2449
      %v2451 = vshrl.u32 683565275, %v2450
      %v2452 = vshll.u32 683565275, %v2449
      %v2453 = vshrl.u32 2475754826, %v2450
      %v2454 = vor.u32 %v2452, %v2453
      %v2455 = vshll.u32 2475754826, %v2449
      %v2456 = vshrl.u32 2131351028, %v2450
      %v2457 = vor.u32 %v2455, %v2456
      %v2458 = vshll.u32 2131351028, %v2449
      %v2459 = vshrl.u32 2102212464, %v2450
      %v2460 = vor.u32 %v2458, %v2459
      %v2461 = vshll.u32 2102212464, %v2449
      %v2462 = vshrl.u32 920167782, %v2450
      %v2463 = vor.u32 %v2461, %v2462
      %v2464 = vshll.u32 920167782, %v2449
      %v2465 = vshrl.u32 1326507024, %v2450
      %v2466 = vor.u32 %v2464, %v2465
      %vm2467 = vcmp.lt.s32.totalorder %v2448, 1
      %vm2468 = vcmp.lt.s32.totalorder %v2448, 2
      %vm2469 = vcmp.lt.s32.totalorder %v2448, 3
      %vm2470 = vcmp.lt.s32.totalorder %v2448, 4
      %v2471 = vsel %vm2467, %v2451, %v2454
      %v2472 = vsel %vm2470, %v2460, 2102212464
      %v2473 = vsel %vm2469, %v2457, %v2472
      %v2474 = vsel %vm2468, %v2471, %v2473
      %v2475 = vsel %vm2467, %v2454, %v2457
      %v2476 = vsel %vm2470, %v2463, 920167782
      %v2477 = vsel %vm2469, %v2460, %v2476
      %v2478 = vsel %vm2468, %v2475, %v2477
      %v2479 = vsel %vm2467, %v2457, %v2460
      %v2480 = vsel %vm2470, %v2466, 1326507024
      %v2481 = vsel %vm2469, %v2463, %v2480
      %v2482 = vsel %vm2468, %v2479, %v2481
      %v2483 = vshll.u32 %v2443, 8
      %v2484 = vmul.u32.u64.compose %v2483, %v2482
      %v2485 = vextract.low.u32 %v2484
      %v2486 = vextract.high.u32 %v2484
      %v2487 = vmul.u32.u64.compose %v2483, %v2478
      %v2488 = vextract.low.u32 %v2487
      %v2489 = vextract.high.u32 %v2487
      %v2490 = vmul.u32 %v2483, %v2474
      %v2491 = vadd.s32 %v2486, %v2488
      %vm2492 = vc.u32 %v2486, %v2488
      %v2493 = vadd.s32 %v2489, 1
      %v2494 = vsel %vm2492, %v2493, %v2489
      %v2495 = vadd.s32 %v2490, %v2494
      %v2496 = vadd.s32 %v2495, 536870912
      %v2497 = vshrl.u32 %v2496, 30
      %v2498 = vshll.u32 %v2497, 30
      %v2499 = vsub.s32 %v2495, %v2498
      %vm2500 = vcmp.lt.s32.totalorder %v2499, 0
      %v2501 = vsub.s32 0, %v2499
      %v2502 = vsel %vm2500, %v2501, %v2499
      %v2503 = vclz %v2502
      %v2504 = vsub.s32 %v2503, 2
      %vm2505 = vcmp.gt.s32.totalorder 0, %v2504
      %v2506 = vsel %vm2505, 0, %v2504
      %v2507 = vsub.s32 32, %v2506
      %v2508 = vshll.u32 %v2499, %v2506
      %v2509 = vshrl.u32 %v2491, %v2507
      %v2510 = vor.u32 %v2508, %v2509
      %v2511 = vsub.s32 4294967266, %v2506
      %v2512 = vadd.s32 %v2511, 127
      %v2513 = vshll.u32 %v2512, 23
      %v2514 = vor.u32 4788187, %v2513
      %v2515 = vand.u32 2147483647, %v2514
      %v2517 = vcvt.s32.f32 %v2510
      %v2518 = vmul.f32 %v2517, %v2515
      %v2519 = vxor.u32 %v2518, 2147483648
      %v2520 = vsel %vm2437, %v2519, %v2518
      %v2521 = vsub.s32 4, %v2497
      %v2522 = vsel %vm2437, %v2521, %v2497
      %v2523 = vsel %vm2436, %v430, %v2520
      %v2524 = vsel %vm2436, 0, %v2522
      %v2525 = vcosq.f32.pop %v2523
      %v2526 = vsinq.f32.pop %v2523
      %vm2527 = vweird.f32 %v430
      %v2528 = vadd.s32 %v2524, 3
      %v2529 = vand.u32 %v2528, 3
      %vm2530 = vcmp.lt.s32.totalorder %v2529, 2
      %vm2531 = vcmp.eq.s32.totalorder %v2529, 0
      %v2532 = vxor.u32 %v2526, 2147483648
      %v2533 = vsel %vm2531, %v2525, %v2532
      %vm2534 = vcmp.eq.s32.totalorder %v2529, 2
      %v2535 = vxor.u32 %v2525, 2147483648
      %v2536 = vsel %vm2534, %v2535, %v2526
      %v2537 = vsel %vm2530, %v2533, %v2536
      %v2538 = vsel %vm2527, nan, %v2537
      %v2539 = vand.u32 2147483647, %v431
      %vm2540 = vcmp.le.f32.partialorder %v2539, 0.7853982
      %vm2541 = vcmp.lt.s32.totalorder %v431, 0
      %v2542 = vand.u32 %v431, 2139095040
      %v2543 = vshrl.u32 %v2542, 23
      %v2544 = vsub.s32 %v2543, 127
      %v2545 = vand.u32 2147483647, %v431
      %v2546 = vand.u32 %v2545, 8388607
      %v2547 = vor.u32 %v2546, 8388608
      %v2548 = vsub.s32 0, %v2547
      %v2549 = vadd.s32 %v2544, 1
      %vm2550 = vcmp.gt.s32.totalorder %v2549, 0
      %v2551 = vsel %vm2550, %v2549, 0
      %v2552 = vshrl.u32 %v2551, 5
      %v2553 = vand.u32 %v2551, 31
      %v2554 = vsub.s32 32, %v2553
      %v2555 = vshrl.u32 683565275, %v2554
      %v2556 = vshll.u32 683565275, %v2553
      %v2557 = vshrl.u32 2475754826, %v2554
      %v2558 = vor.u32 %v2556, %v2557
      %v2559 = vshll.u32 2475754826, %v2553
      %v2560 = vshrl.u32 2131351028, %v2554
      %v2561 = vor.u32 %v2559, %v2560
      %v2562 = vshll.u32 2131351028, %v2553
      %v2563 = vshrl.u32 2102212464, %v2554
      %v2564 = vor.u32 %v2562, %v2563
      %v2565 = vshll.u32 2102212464, %v2553
      %v2566 = vshrl.u32 920167782, %v2554
      %v2567 = vor.u32 %v2565, %v2566
      %v2568 = vshll.u32 920167782, %v2553
      %v2569 = vshrl.u32 1326507024, %v2554
      %v2570 = vor.u32 %v2568, %v2569
      %vm2571 = vcmp.lt.s32.totalorder %v2552, 1
      %vm2572 = vcmp.lt.s32.totalorder %v2552, 2
      %vm2573 = vcmp.lt.s32.totalorder %v2552, 3
      %vm2574 = vcmp.lt.s32.totalorder %v2552, 4
      %v2575 = vsel %vm2571, %v2555, %v2558
      %v2576 = vsel %vm2574, %v2564, 2102212464
      %v2577 = vsel %vm2573, %v2561, %v2576
      %v2578 = vsel %vm2572, %v2575, %v2577
      %v2579 = vsel %vm2571, %v2558, %v2561
      %v2580 = vsel %vm2574, %v2567, 920167782
      %v2581 = vsel %vm2573, %v2564, %v2580
      %v2582 = vsel %vm2572, %v2579, %v2581
      %v2583 = vsel %vm2571, %v2561, %v2564
      %v2584 = vsel %vm2574, %v2570, 1326507024
      %v2585 = vsel %vm2573, %v2567, %v2584
      %v2586 = vsel %vm2572, %v2583, %v2585
      %v2587 = vshll.u32 %v2547, 8
      %v2588 = vmul.u32.u64.compose %v2587, %v2586
      %v2589 = vextract.low.u32 %v2588
      %v2590 = vextract.high.u32 %v2588
      %v2591 = vmul.u32.u64.compose %v2587, %v2582
      %v2592 = vextract.low.u32 %v2591
      %v2593 = vextract.high.u32 %v2591
      %v2594 = vmul.u32 %v2587, %v2578
      %v2595 = vadd.s32 %v2590, %v2592
      %vm2596 = vc.u32 %v2590, %v2592
      %v2597 = vadd.s32 %v2593, 1
      %v2598 = vsel %vm2596, %v2597, %v2593
      %v2599 = vadd.s32 %v2594, %v2598
      %v2600 = vadd.s32 %v2599, 536870912
      %v2601 = vshrl.u32 %v2600, 30
      %v2602 = vshll.u32 %v2601, 30
      %v2603 = vsub.s32 %v2599, %v2602
      %vm2604 = vcmp.lt.s32.totalorder %v2603, 0
      %v2605 = vsub.s32 0, %v2603
      %v2606 = vsel %vm2604, %v2605, %v2603
      %v2607 = vclz %v2606
      %v2608 = vsub.s32 %v2607, 2
      %vm2609 = vcmp.gt.s32.totalorder 0, %v2608
      %v2610 = vsel %vm2609, 0, %v2608
      %v2611 = vsub.s32 32, %v2610
      %v2612 = vshll.u32 %v2603, %v2610
      %v2613 = vshrl.u32 %v2595, %v2611
      %v2614 = vor.u32 %v2612, %v2613
      %v2615 = vsub.s32 4294967266, %v2610
      %v2616 = vadd.s32 %v2615, 127
      %v2617 = vshll.u32 %v2616, 23
      %v2618 = vor.u32 4788187, %v2617
      %v2619 = vand.u32 2147483647, %v2618
      %v2621 = vcvt.s32.f32 %v2614
      %v2622 = vmul.f32 %v2621, %v2619
      %v2623 = vxor.u32 %v2622, 2147483648
      %v2624 = vsel %vm2541, %v2623, %v2622
      %v2625 = vsub.s32 4, %v2601
      %v2626 = vsel %vm2541, %v2625, %v2601
      %v2627 = vsel %vm2540, %v431, %v2624
      %v2628 = vsel %vm2540, 0, %v2626
      %v2629 = vcosq.f32.pop %v2627
      %v2630 = vsinq.f32.pop %v2627
      %vm2631 = vweird.f32 %v431
      %v2632 = vadd.s32 %v2628, 3
      %v2633 = vand.u32 %v2632, 3
      %vm2634 = vcmp.lt.s32.totalorder %v2633, 2
      %vm2635 = vcmp.eq.s32.totalorder %v2633, 0
      %v2636 = vxor.u32 %v2630, 2147483648
      %v2637 = vsel %vm2635, %v2629, %v2636
      %vm2638 = vcmp.eq.s32.totalorder %v2633, 2
      %v2639 = vxor.u32 %v2629, 2147483648
      %v2640 = vsel %vm2638, %v2639, %v2630
      %v2641 = vsel %vm2634, %v2637, %v2640
      %v2642 = vsel %vm2631, nan, %v2641
      %v2643 = vand.u32 2147483647, %v432
      %vm2644 = vcmp.le.f32.partialorder %v2643, 0.7853982
      %vm2645 = vcmp.lt.s32.totalorder %v432, 0
      %v2646 = vand.u32 %v432, 2139095040
      %v2647 = vshrl.u32 %v2646, 23
      %v2648 = vsub.s32 %v2647, 127
      %v2649 = vand.u32 2147483647, %v432
      %v2650 = vand.u32 %v2649, 8388607
      %v2651 = vor.u32 %v2650, 8388608
      %v2652 = vsub.s32 0, %v2651
      %v2653 = vadd.s32 %v2648, 1
      %vm2654 = vcmp.gt.s32.totalorder %v2653, 0
      %v2655 = vsel %vm2654, %v2653, 0
      %v2656 = vshrl.u32 %v2655, 5
      %v2657 = vand.u32 %v2655, 31
      %v2658 = vsub.s32 32, %v2657
      %v2659 = vshrl.u32 683565275, %v2658
      %v2660 = vshll.u32 683565275, %v2657
      %v2661 = vshrl.u32 2475754826, %v2658
      %v2662 = vor.u32 %v2660, %v2661
      %v2663 = vshll.u32 2475754826, %v2657
      %v2664 = vshrl.u32 2131351028, %v2658
      %v2665 = vor.u32 %v2663, %v2664
      %v2666 = vshll.u32 2131351028, %v2657
      %v2667 = vshrl.u32 2102212464, %v2658
      %v2668 = vor.u32 %v2666, %v2667
      %v2669 = vshll.u32 2102212464, %v2657
      %v2670 = vshrl.u32 920167782, %v2658
      %v2671 = vor.u32 %v2669, %v2670
      %v2672 = vshll.u32 920167782, %v2657
      %v2673 = vshrl.u32 1326507024, %v2658
      %v2674 = vor.u32 %v2672, %v2673
      %vm2675 = vcmp.lt.s32.totalorder %v2656, 1
      %vm2676 = vcmp.lt.s32.totalorder %v2656, 2
      %vm2677 = vcmp.lt.s32.totalorder %v2656, 3
      %vm2678 = vcmp.lt.s32.totalorder %v2656, 4
      %v2679 = vsel %vm2675, %v2659, %v2662
      %v2680 = vsel %vm2678, %v2668, 2102212464
      %v2681 = vsel %vm2677, %v2665, %v2680
      %v2682 = vsel %vm2676, %v2679, %v2681
      %v2683 = vsel %vm2675, %v2662, %v2665
      %v2684 = vsel %vm2678, %v2671, 920167782
      %v2685 = vsel %vm2677, %v2668, %v2684
      %v2686 = vsel %vm2676, %v2683, %v2685
      %v2687 = vsel %vm2675, %v2665, %v2668
      %v2688 = vsel %vm2678, %v2674, 1326507024
      %v2689 = vsel %vm2677, %v2671, %v2688
      %v2690 = vsel %vm2676, %v2687, %v2689
      %v2691 = vshll.u32 %v2651, 8
      %v2692 = vmul.u32.u64.compose %v2691, %v2690
      %v2693 = vextract.low.u32 %v2692
      %v2694 = vextract.high.u32 %v2692
      %v2695 = vmul.u32.u64.compose %v2691, %v2686
      %v2696 = vextract.low.u32 %v2695
      %v2697 = vextract.high.u32 %v2695
      %v2698 = vmul.u32 %v2691, %v2682
      %v2699 = vadd.s32 %v2694, %v2696
      %vm2700 = vc.u32 %v2694, %v2696
      %v2701 = vadd.s32 %v2697, 1
      %v2702 = vsel %vm2700, %v2701, %v2697
      %v2703 = vadd.s32 %v2698, %v2702
      %v2704 = vadd.s32 %v2703, 536870912
      %v2705 = vshrl.u32 %v2704, 30
      %v2706 = vshll.u32 %v2705, 30
      %v2707 = vsub.s32 %v2703, %v2706
      %vm2708 = vcmp.lt.s32.totalorder %v2707, 0
      %v2709 = vsub.s32 0, %v2707
      %v2710 = vsel %vm2708, %v2709, %v2707
      %v2711 = vclz %v2710
      %v2712 = vsub.s32 %v2711, 2
      %vm2713 = vcmp.gt.s32.totalorder 0, %v2712
      %v2714 = vsel %vm2713, 0, %v2712
      %v2715 = vsub.s32 32, %v2714
      %v2716 = vshll.u32 %v2707, %v2714
      %v2717 = vshrl.u32 %v2699, %v2715
      %v2718 = vor.u32 %v2716, %v2717
      %v2719 = vsub.s32 4294967266, %v2714
      %v2720 = vadd.s32 %v2719, 127
      %v2721 = vshll.u32 %v2720, 23
      %v2722 = vor.u32 4788187, %v2721
      %v2723 = vand.u32 2147483647, %v2722
      %v2725 = vcvt.s32.f32 %v2718
      %v2726 = vmul.f32 %v2725, %v2723
      %v2727 = vxor.u32 %v2726, 2147483648
      %v2728 = vsel %vm2645, %v2727, %v2726
      %v2729 = vsub.s32 4, %v2705
      %v2730 = vsel %vm2645, %v2729, %v2705
      %v2731 = vsel %vm2644, %v432, %v2728
      %v2732 = vsel %vm2644, 0, %v2730
      %v2733 = vcosq.f32.pop %v2731
      %v2734 = vsinq.f32.pop %v2731
      %vm2735 = vweird.f32 %v432
      %v2736 = vadd.s32 %v2732, 3
      %v2737 = vand.u32 %v2736, 3
      %vm2738 = vcmp.lt.s32.totalorder %v2737, 2
      %vm2739 = vcmp.eq.s32.totalorder %v2737, 0
      %v2740 = vxor.u32 %v2734, 2147483648
      %v2741 = vsel %vm2739, %v2733, %v2740
      %vm2742 = vcmp.eq.s32.totalorder %v2737, 2
      %v2743 = vxor.u32 %v2733, 2147483648
      %v2744 = vsel %vm2742, %v2743, %v2734
      %v2745 = vsel %vm2738, %v2741, %v2744
      %v2746 = vsel %vm2735, nan, %v2745
      %v2747 = vand.u32 2147483647, %v433
      %vm2748 = vcmp.le.f32.partialorder %v2747, 0.7853982
      %vm2749 = vcmp.lt.s32.totalorder %v433, 0
      %v2750 = vand.u32 %v433, 2139095040
      %v2751 = vshrl.u32 %v2750, 23
      %v2752 = vsub.s32 %v2751, 127
      %v2753 = vand.u32 2147483647, %v433
      %v2754 = vand.u32 %v2753, 8388607
      %v2755 = vor.u32 %v2754, 8388608
      %v2756 = vsub.s32 0, %v2755
      %v2757 = vadd.s32 %v2752, 1
      %vm2758 = vcmp.gt.s32.totalorder %v2757, 0
      %v2759 = vsel %vm2758, %v2757, 0
      %v2760 = vshrl.u32 %v2759, 5
      %v2761 = vand.u32 %v2759, 31
      %v2762 = vsub.s32 32, %v2761
      %v2763 = vshrl.u32 683565275, %v2762
      %v2764 = vshll.u32 683565275, %v2761
      %v2765 = vshrl.u32 2475754826, %v2762
      %v2766 = vor.u32 %v2764, %v2765
      %v2767 = vshll.u32 2475754826, %v2761
      %v2768 = vshrl.u32 2131351028, %v2762
      %v2769 = vor.u32 %v2767, %v2768
      %v2770 = vshll.u32 2131351028, %v2761
      %v2771 = vshrl.u32 2102212464, %v2762
      %v2772 = vor.u32 %v2770, %v2771
      %v2773 = vshll.u32 2102212464, %v2761
      %v2774 = vshrl.u32 920167782, %v2762
      %v2775 = vor.u32 %v2773, %v2774
      %v2776 = vshll.u32 920167782, %v2761
      %v2777 = vshrl.u32 1326507024, %v2762
      %v2778 = vor.u32 %v2776, %v2777
      %vm2779 = vcmp.lt.s32.totalorder %v2760, 1
      %vm2780 = vcmp.lt.s32.totalorder %v2760, 2
      %vm2781 = vcmp.lt.s32.totalorder %v2760, 3
      %vm2782 = vcmp.lt.s32.totalorder %v2760, 4
      %v2783 = vsel %vm2779, %v2763, %v2766
      %v2784 = vsel %vm2782, %v2772, 2102212464
      %v2785 = vsel %vm2781, %v2769, %v2784
      %v2786 = vsel %vm2780, %v2783, %v2785
      %v2787 = vsel %vm2779, %v2766, %v2769
      %v2788 = vsel %vm2782, %v2775, 920167782
      %v2789 = vsel %vm2781, %v2772, %v2788
      %v2790 = vsel %vm2780, %v2787, %v2789
      %v2791 = vsel %vm2779, %v2769, %v2772
      %v2792 = vsel %vm2782, %v2778, 1326507024
      %v2793 = vsel %vm2781, %v2775, %v2792
      %v2794 = vsel %vm2780, %v2791, %v2793
      %v2795 = vshll.u32 %v2755, 8
      %v2796 = vmul.u32.u64.compose %v2795, %v2794
      %v2797 = vextract.low.u32 %v2796
      %v2798 = vextract.high.u32 %v2796
      %v2799 = vmul.u32.u64.compose %v2795, %v2790
      %v2800 = vextract.low.u32 %v2799
      %v2801 = vextract.high.u32 %v2799
      %v2802 = vmul.u32 %v2795, %v2786
      %v2803 = vadd.s32 %v2798, %v2800
      %vm2804 = vc.u32 %v2798, %v2800
      %v2805 = vadd.s32 %v2801, 1
      %v2806 = vsel %vm2804, %v2805, %v2801
      %v2807 = vadd.s32 %v2802, %v2806
      %v2808 = vadd.s32 %v2807, 536870912
      %v2809 = vshrl.u32 %v2808, 30
      %v2810 = vshll.u32 %v2809, 30
      %v2811 = vsub.s32 %v2807, %v2810
      %vm2812 = vcmp.lt.s32.totalorder %v2811, 0
      %v2813 = vsub.s32 0, %v2811
      %v2814 = vsel %vm2812, %v2813, %v2811
      %v2815 = vclz %v2814
      %v2816 = vsub.s32 %v2815, 2
      %vm2817 = vcmp.gt.s32.totalorder 0, %v2816
      %v2818 = vsel %vm2817, 0, %v2816
      %v2819 = vsub.s32 32, %v2818
      %v2820 = vshll.u32 %v2811, %v2818
      %v2821 = vshrl.u32 %v2803, %v2819
      %v2822 = vor.u32 %v2820, %v2821
      %v2823 = vsub.s32 4294967266, %v2818
      %v2824 = vadd.s32 %v2823, 127
      %v2825 = vshll.u32 %v2824, 23
      %v2826 = vor.u32 4788187, %v2825
      %v2827 = vand.u32 2147483647, %v2826
      %v2829 = vcvt.s32.f32 %v2822
      %v2830 = vmul.f32 %v2829, %v2827
      %v2831 = vxor.u32 %v2830, 2147483648
      %v2832 = vsel %vm2749, %v2831, %v2830
      %v2833 = vsub.s32 4, %v2809
      %v2834 = vsel %vm2749, %v2833, %v2809
      %v2835 = vsel %vm2748, %v433, %v2832
      %v2836 = vsel %vm2748, 0, %v2834
      %v2837 = vcosq.f32.pop %v2835
      %v2838 = vsinq.f32.pop %v2835
      %vm2839 = vweird.f32 %v433
      %v2840 = vadd.s32 %v2836, 3
      %v2841 = vand.u32 %v2840, 3
      %vm2842 = vcmp.lt.s32.totalorder %v2841, 2
      %vm2843 = vcmp.eq.s32.totalorder %v2841, 0
      %v2844 = vxor.u32 %v2838, 2147483648
      %v2845 = vsel %vm2843, %v2837, %v2844
      %vm2846 = vcmp.eq.s32.totalorder %v2841, 2
      %v2847 = vxor.u32 %v2837, 2147483648
      %v2848 = vsel %vm2846, %v2847, %v2838
      %v2849 = vsel %vm2842, %v2845, %v2848
      %v2850 = vsel %vm2839, nan, %v2849
      %v2851 = vand.u32 2147483647, %v434
      %vm2852 = vcmp.le.f32.partialorder %v2851, 0.7853982
      %vm2853 = vcmp.lt.s32.totalorder %v434, 0
      %v2854 = vand.u32 %v434, 2139095040
      %v2855 = vshrl.u32 %v2854, 23
      %v2856 = vsub.s32 %v2855, 127
      %v2857 = vand.u32 2147483647, %v434
      %v2858 = vand.u32 %v2857, 8388607
      %v2859 = vor.u32 %v2858, 8388608
      %v2860 = vsub.s32 0, %v2859
      %v2861 = vadd.s32 %v2856, 1
      %vm2862 = vcmp.gt.s32.totalorder %v2861, 0
      %v2863 = vsel %vm2862, %v2861, 0
      %v2864 = vshrl.u32 %v2863, 5
      %v2865 = vand.u32 %v2863, 31
      %v2866 = vsub.s32 32, %v2865
      %v2867 = vshrl.u32 683565275, %v2866
      %v2868 = vshll.u32 683565275, %v2865
      %v2869 = vshrl.u32 2475754826, %v2866
      %v2870 = vor.u32 %v2868, %v2869
      %v2871 = vshll.u32 2475754826, %v2865
      %v2872 = vshrl.u32 2131351028, %v2866
      %v2873 = vor.u32 %v2871, %v2872
      %v2874 = vshll.u32 2131351028, %v2865
      %v2875 = vshrl.u32 2102212464, %v2866
      %v2876 = vor.u32 %v2874, %v2875
      %v2877 = vshll.u32 2102212464, %v2865
      %v2878 = vshrl.u32 920167782, %v2866
      %v2879 = vor.u32 %v2877, %v2878
      %v2880 = vshll.u32 920167782, %v2865
      %v2881 = vshrl.u32 1326507024, %v2866
      %v2882 = vor.u32 %v2880, %v2881
      %vm2883 = vcmp.lt.s32.totalorder %v2864, 1
      %vm2884 = vcmp.lt.s32.totalorder %v2864, 2
      %vm2885 = vcmp.lt.s32.totalorder %v2864, 3
      %vm2886 = vcmp.lt.s32.totalorder %v2864, 4
      %v2887 = vsel %vm2883, %v2867, %v2870
      %v2888 = vsel %vm2886, %v2876, 2102212464
      %v2889 = vsel %vm2885, %v2873, %v2888
      %v2890 = vsel %vm2884, %v2887, %v2889
      %v2891 = vsel %vm2883, %v2870, %v2873
      %v2892 = vsel %vm2886, %v2879, 920167782
      %v2893 = vsel %vm2885, %v2876, %v2892
      %v2894 = vsel %vm2884, %v2891, %v2893
      %v2895 = vsel %vm2883, %v2873, %v2876
      %v2896 = vsel %vm2886, %v2882, 1326507024
      %v2897 = vsel %vm2885, %v2879, %v2896
      %v2898 = vsel %vm2884, %v2895, %v2897
      %v2899 = vshll.u32 %v2859, 8
      %v2900 = vmul.u32.u64.compose %v2899, %v2898
      %v2901 = vextract.low.u32 %v2900
      %v2902 = vextract.high.u32 %v2900
      %v2903 = vmul.u32.u64.compose %v2899, %v2894
      %v2904 = vextract.low.u32 %v2903
      %v2905 = vextract.high.u32 %v2903
      %v2906 = vmul.u32 %v2899, %v2890
      %v2907 = vadd.s32 %v2902, %v2904
      %vm2908 = vc.u32 %v2902, %v2904
      %v2909 = vadd.s32 %v2905, 1
      %v2910 = vsel %vm2908, %v2909, %v2905
      %v2911 = vadd.s32 %v2906, %v2910
      %v2912 = vadd.s32 %v2911, 536870912
      %v2913 = vshrl.u32 %v2912, 30
      %v2914 = vshll.u32 %v2913, 30
      %v2915 = vsub.s32 %v2911, %v2914
      %vm2916 = vcmp.lt.s32.totalorder %v2915, 0
      %v2917 = vsub.s32 0, %v2915
      %v2918 = vsel %vm2916, %v2917, %v2915
      %v2919 = vclz %v2918
      %v2920 = vsub.s32 %v2919, 2
      %vm2921 = vcmp.gt.s32.totalorder 0, %v2920
      %v2922 = vsel %vm2921, 0, %v2920
      %v2923 = vsub.s32 32, %v2922
      %v2924 = vshll.u32 %v2915, %v2922
      %v2925 = vshrl.u32 %v2907, %v2923
      %v2926 = vor.u32 %v2924, %v2925
      %v2927 = vsub.s32 4294967266, %v2922
      %v2928 = vadd.s32 %v2927, 127
      %v2929 = vshll.u32 %v2928, 23
      %v2930 = vor.u32 4788187, %v2929
      %v2931 = vand.u32 2147483647, %v2930
      %v2933 = vcvt.s32.f32 %v2926
      %v2934 = vmul.f32 %v2933, %v2931
      %v2935 = vxor.u32 %v2934, 2147483648
      %v2936 = vsel %vm2853, %v2935, %v2934
      %v2937 = vsub.s32 4, %v2913
      %v2938 = vsel %vm2853, %v2937, %v2913
      %v2939 = vsel %vm2852, %v434, %v2936
      %v2940 = vsel %vm2852, 0, %v2938
      %v2941 = vcosq.f32.pop %v2939
      %v2942 = vsinq.f32.pop %v2939
      %vm2943 = vweird.f32 %v434
      %v2944 = vadd.s32 %v2940, 3
      %v2945 = vand.u32 %v2944, 3
      %vm2946 = vcmp.lt.s32.totalorder %v2945, 2
      %vm2947 = vcmp.eq.s32.totalorder %v2945, 0
      %v2948 = vxor.u32 %v2942, 2147483648
      %v2949 = vsel %vm2947, %v2941, %v2948
      %vm2950 = vcmp.eq.s32.totalorder %v2945, 2
      %v2951 = vxor.u32 %v2941, 2147483648
      %v2952 = vsel %vm2950, %v2951, %v2942
      %v2953 = vsel %vm2946, %v2949, %v2952
      %v2954 = vsel %vm2943, nan, %v2953
      %v2955 = vand.u32 2147483647, %v435
      %vm2956 = vcmp.le.f32.partialorder %v2955, 0.7853982
      %vm2957 = vcmp.lt.s32.totalorder %v435, 0
      %v2958 = vand.u32 %v435, 2139095040
      %v2959 = vshrl.u32 %v2958, 23
      %v2960 = vsub.s32 %v2959, 127
      %v2961 = vand.u32 2147483647, %v435
      %v2962 = vand.u32 %v2961, 8388607
      %v2963 = vor.u32 %v2962, 8388608
      %v2964 = vsub.s32 0, %v2963
      %v2965 = vadd.s32 %v2960, 1
      %vm2966 = vcmp.gt.s32.totalorder %v2965, 0
      %v2967 = vsel %vm2966, %v2965, 0
      %v2968 = vshrl.u32 %v2967, 5
      %v2969 = vand.u32 %v2967, 31
      %v2970 = vsub.s32 32, %v2969
      %v2971 = vshrl.u32 683565275, %v2970
      %v2972 = vshll.u32 683565275, %v2969
      %v2973 = vshrl.u32 2475754826, %v2970
      %v2974 = vor.u32 %v2972, %v2973
      %v2975 = vshll.u32 2475754826, %v2969
      %v2976 = vshrl.u32 2131351028, %v2970
      %v2977 = vor.u32 %v2975, %v2976
      %v2978 = vshll.u32 2131351028, %v2969
      %v2979 = vshrl.u32 2102212464, %v2970
      %v2980 = vor.u32 %v2978, %v2979
      %v2981 = vshll.u32 2102212464, %v2969
      %v2982 = vshrl.u32 920167782, %v2970
      %v2983 = vor.u32 %v2981, %v2982
      %v2984 = vshll.u32 920167782, %v2969
      %v2985 = vshrl.u32 1326507024, %v2970
      %v2986 = vor.u32 %v2984, %v2985
      %vm2987 = vcmp.lt.s32.totalorder %v2968, 1
      %vm2988 = vcmp.lt.s32.totalorder %v2968, 2
      %vm2989 = vcmp.lt.s32.totalorder %v2968, 3
      %vm2990 = vcmp.lt.s32.totalorder %v2968, 4
      %v2991 = vsel %vm2987, %v2971, %v2974
      %v2992 = vsel %vm2990, %v2980, 2102212464
      %v2993 = vsel %vm2989, %v2977, %v2992
      %v2994 = vsel %vm2988, %v2991, %v2993
      %v2995 = vsel %vm2987, %v2974, %v2977
      %v2996 = vsel %vm2990, %v2983, 920167782
      %v2997 = vsel %vm2989, %v2980, %v2996
      %v2998 = vsel %vm2988, %v2995, %v2997
      %v2999 = vsel %vm2987, %v2977, %v2980
      %v3000 = vsel %vm2990, %v2986, 1326507024
      %v3001 = vsel %vm2989, %v2983, %v3000
      %v3002 = vsel %vm2988, %v2999, %v3001
      %v3003 = vshll.u32 %v2963, 8
      %v3004 = vmul.u32.u64.compose %v3003, %v3002
      %v3005 = vextract.low.u32 %v3004
      %v3006 = vextract.high.u32 %v3004
      %v3007 = vmul.u32.u64.compose %v3003, %v2998
      %v3008 = vextract.low.u32 %v3007
      %v3009 = vextract.high.u32 %v3007
      %v3010 = vmul.u32 %v3003, %v2994
      %v3011 = vadd.s32 %v3006, %v3008
      %vm3012 = vc.u32 %v3006, %v3008
      %v3013 = vadd.s32 %v3009, 1
      %v3014 = vsel %vm3012, %v3013, %v3009
      %v3015 = vadd.s32 %v3010, %v3014
      %v3016 = vadd.s32 %v3015, 536870912
      %v3017 = vshrl.u32 %v3016, 30
      %v3018 = vshll.u32 %v3017, 30
      %v3019 = vsub.s32 %v3015, %v3018
      %vm3020 = vcmp.lt.s32.totalorder %v3019, 0
      %v3021 = vsub.s32 0, %v3019
      %v3022 = vsel %vm3020, %v3021, %v3019
      %v3023 = vclz %v3022
      %v3024 = vsub.s32 %v3023, 2
      %vm3025 = vcmp.gt.s32.totalorder 0, %v3024
      %v3026 = vsel %vm3025, 0, %v3024
      %v3027 = vsub.s32 32, %v3026
      %v3028 = vshll.u32 %v3019, %v3026
      %v3029 = vshrl.u32 %v3011, %v3027
      %v3030 = vor.u32 %v3028, %v3029
      %v3031 = vsub.s32 4294967266, %v3026
      %v3032 = vadd.s32 %v3031, 127
      %v3033 = vshll.u32 %v3032, 23
      %v3034 = vor.u32 4788187, %v3033
      %v3035 = vand.u32 2147483647, %v3034
      %v3037 = vcvt.s32.f32 %v3030
      %v3038 = vmul.f32 %v3037, %v3035
      %v3039 = vxor.u32 %v3038, 2147483648
      %v3040 = vsel %vm2957, %v3039, %v3038
      %v3041 = vsub.s32 4, %v3017
      %v3042 = vsel %vm2957, %v3041, %v3017
      %v3043 = vsel %vm2956, %v435, %v3040
      %v3044 = vsel %vm2956, 0, %v3042
      %v3045 = vcosq.f32.pop %v3043
      %v3046 = vsinq.f32.pop %v3043
      %vm3047 = vweird.f32 %v435
      %v3048 = vadd.s32 %v3044, 3
      %v3049 = vand.u32 %v3048, 3
      %vm3050 = vcmp.lt.s32.totalorder %v3049, 2
      %vm3051 = vcmp.eq.s32.totalorder %v3049, 0
      %v3052 = vxor.u32 %v3046, 2147483648
      %v3053 = vsel %vm3051, %v3045, %v3052
      %vm3054 = vcmp.eq.s32.totalorder %v3049, 2
      %v3055 = vxor.u32 %v3045, 2147483648
      %v3056 = vsel %vm3054, %v3055, %v3046
      %v3057 = vsel %vm3050, %v3053, %v3056
      %v3058 = vsel %vm3047, nan, %v3057
      %v3059 = vand.u32 2147483647, %v436
      %vm3060 = vcmp.le.f32.partialorder %v3059, 0.7853982
      %vm3061 = vcmp.lt.s32.totalorder %v436, 0
      %v3062 = vand.u32 %v436, 2139095040
      %v3063 = vshrl.u32 %v3062, 23
      %v3064 = vsub.s32 %v3063, 127
      %v3065 = vand.u32 2147483647, %v436
      %v3066 = vand.u32 %v3065, 8388607
      %v3067 = vor.u32 %v3066, 8388608
      %v3068 = vsub.s32 0, %v3067
      %v3069 = vadd.s32 %v3064, 1
      %vm3070 = vcmp.gt.s32.totalorder %v3069, 0
      %v3071 = vsel %vm3070, %v3069, 0
      %v3072 = vshrl.u32 %v3071, 5
      %v3073 = vand.u32 %v3071, 31
      %v3074 = vsub.s32 32, %v3073
      %v3075 = vshrl.u32 683565275, %v3074
      %v3076 = vshll.u32 683565275, %v3073
      %v3077 = vshrl.u32 2475754826, %v3074
      %v3078 = vor.u32 %v3076, %v3077
      %v3079 = vshll.u32 2475754826, %v3073
      %v3080 = vshrl.u32 2131351028, %v3074
      %v3081 = vor.u32 %v3079, %v3080
      %v3082 = vshll.u32 2131351028, %v3073
      %v3083 = vshrl.u32 2102212464, %v3074
      %v3084 = vor.u32 %v3082, %v3083
      %v3085 = vshll.u32 2102212464, %v3073
      %v3086 = vshrl.u32 920167782, %v3074
      %v3087 = vor.u32 %v3085, %v3086
      %v3088 = vshll.u32 920167782, %v3073
      %v3089 = vshrl.u32 1326507024, %v3074
      %v3090 = vor.u32 %v3088, %v3089
      %vm3091 = vcmp.lt.s32.totalorder %v3072, 1
      %vm3092 = vcmp.lt.s32.totalorder %v3072, 2
      %vm3093 = vcmp.lt.s32.totalorder %v3072, 3
      %vm3094 = vcmp.lt.s32.totalorder %v3072, 4
      %v3095 = vsel %vm3091, %v3075, %v3078
      %v3096 = vsel %vm3094, %v3084, 2102212464
      %v3097 = vsel %vm3093, %v3081, %v3096
      %v3098 = vsel %vm3092, %v3095, %v3097
      %v3099 = vsel %vm3091, %v3078, %v3081
      %v3100 = vsel %vm3094, %v3087, 920167782
      %v3101 = vsel %vm3093, %v3084, %v3100
      %v3102 = vsel %vm3092, %v3099, %v3101
      %v3103 = vsel %vm3091, %v3081, %v3084
      %v3104 = vsel %vm3094, %v3090, 1326507024
      %v3105 = vsel %vm3093, %v3087, %v3104
      %v3106 = vsel %vm3092, %v3103, %v3105
      %v3107 = vshll.u32 %v3067, 8
      %v3108 = vmul.u32.u64.compose %v3107, %v3106
      %v3109 = vextract.low.u32 %v3108
      %v3110 = vextract.high.u32 %v3108
      %v3111 = vmul.u32.u64.compose %v3107, %v3102
      %v3112 = vextract.low.u32 %v3111
      %v3113 = vextract.high.u32 %v3111
      %v3114 = vmul.u32 %v3107, %v3098
      %v3115 = vadd.s32 %v3110, %v3112
      %vm3116 = vc.u32 %v3110, %v3112
      %v3117 = vadd.s32 %v3113, 1
      %v3118 = vsel %vm3116, %v3117, %v3113
      %v3119 = vadd.s32 %v3114, %v3118
      %v3120 = vadd.s32 %v3119, 536870912
      %v3121 = vshrl.u32 %v3120, 30
      %v3122 = vshll.u32 %v3121, 30
      %v3123 = vsub.s32 %v3119, %v3122
      %vm3124 = vcmp.lt.s32.totalorder %v3123, 0
      %v3125 = vsub.s32 0, %v3123
      %v3126 = vsel %vm3124, %v3125, %v3123
      %v3127 = vclz %v3126
      %v3128 = vsub.s32 %v3127, 2
      %vm3129 = vcmp.gt.s32.totalorder 0, %v3128
      %v3130 = vsel %vm3129, 0, %v3128
      %v3131 = vsub.s32 32, %v3130
      %v3132 = vshll.u32 %v3123, %v3130
      %v3133 = vshrl.u32 %v3115, %v3131
      %v3134 = vor.u32 %v3132, %v3133
      %v3135 = vsub.s32 4294967266, %v3130
      %v3136 = vadd.s32 %v3135, 127
      %v3137 = vshll.u32 %v3136, 23
      %v3138 = vor.u32 4788187, %v3137
      %v3139 = vand.u32 2147483647, %v3138
      %v3141 = vcvt.s32.f32 %v3134
      %v3142 = vmul.f32 %v3141, %v3139
      %v3143 = vxor.u32 %v3142, 2147483648
      %v3144 = vsel %vm3061, %v3143, %v3142
      %v3145 = vsub.s32 4, %v3121
      %v3146 = vsel %vm3061, %v3145, %v3121
      %v3147 = vsel %vm3060, %v436, %v3144
      %v3148 = vsel %vm3060, 0, %v3146
      %v3149 = vcosq.f32.pop %v3147
      %v3150 = vsinq.f32.pop %v3147
      %vm3151 = vweird.f32 %v436
      %v3152 = vadd.s32 %v3148, 3
      %v3153 = vand.u32 %v3152, 3
      %vm3154 = vcmp.lt.s32.totalorder %v3153, 2
      %vm3155 = vcmp.eq.s32.totalorder %v3153, 0
      %v3156 = vxor.u32 %v3150, 2147483648
      %v3157 = vsel %vm3155, %v3149, %v3156
      %vm3158 = vcmp.eq.s32.totalorder %v3153, 2
      %v3159 = vxor.u32 %v3149, 2147483648
      %v3160 = vsel %vm3158, %v3159, %v3150
      %v3161 = vsel %vm3154, %v3157, %v3160
      %v3162 = vsel %vm3151, nan, %v3161
      %v3163 = vand.u32 2147483647, %v437
      %vm3164 = vcmp.le.f32.partialorder %v3163, 0.7853982
      %vm3165 = vcmp.lt.s32.totalorder %v437, 0
      %v3166 = vand.u32 %v437, 2139095040
      %v3167 = vshrl.u32 %v3166, 23
      %v3168 = vsub.s32 %v3167, 127
      %v3169 = vand.u32 2147483647, %v437
      %v3170 = vand.u32 %v3169, 8388607
      %v3171 = vor.u32 %v3170, 8388608
      %v3172 = vsub.s32 0, %v3171
      %v3173 = vadd.s32 %v3168, 1
      %vm3174 = vcmp.gt.s32.totalorder %v3173, 0
      %v3175 = vsel %vm3174, %v3173, 0
      %v3176 = vshrl.u32 %v3175, 5
      %v3177 = vand.u32 %v3175, 31
      %v3178 = vsub.s32 32, %v3177
      %v3179 = vshrl.u32 683565275, %v3178
      %v3180 = vshll.u32 683565275, %v3177
      %v3181 = vshrl.u32 2475754826, %v3178
      %v3182 = vor.u32 %v3180, %v3181
      %v3183 = vshll.u32 2475754826, %v3177
      %v3184 = vshrl.u32 2131351028, %v3178
      %v3185 = vor.u32 %v3183, %v3184
      %v3186 = vshll.u32 2131351028, %v3177
      %v3187 = vshrl.u32 2102212464, %v3178
      %v3188 = vor.u32 %v3186, %v3187
      %v3189 = vshll.u32 2102212464, %v3177
      %v3190 = vshrl.u32 920167782, %v3178
      %v3191 = vor.u32 %v3189, %v3190
      %v3192 = vshll.u32 920167782, %v3177
      %v3193 = vshrl.u32 1326507024, %v3178
      %v3194 = vor.u32 %v3192, %v3193
      %vm3195 = vcmp.lt.s32.totalorder %v3176, 1
      %vm3196 = vcmp.lt.s32.totalorder %v3176, 2
      %vm3197 = vcmp.lt.s32.totalorder %v3176, 3
      %vm3198 = vcmp.lt.s32.totalorder %v3176, 4
      %v3199 = vsel %vm3195, %v3179, %v3182
      %v3200 = vsel %vm3198, %v3188, 2102212464
      %v3201 = vsel %vm3197, %v3185, %v3200
      %v3202 = vsel %vm3196, %v3199, %v3201
      %v3203 = vsel %vm3195, %v3182, %v3185
      %v3204 = vsel %vm3198, %v3191, 920167782
      %v3205 = vsel %vm3197, %v3188, %v3204
      %v3206 = vsel %vm3196, %v3203, %v3205
      %v3207 = vsel %vm3195, %v3185, %v3188
      %v3208 = vsel %vm3198, %v3194, 1326507024
      %v3209 = vsel %vm3197, %v3191, %v3208
      %v3210 = vsel %vm3196, %v3207, %v3209
      %v3211 = vshll.u32 %v3171, 8
      %v3212 = vmul.u32.u64.compose %v3211, %v3210
      %v3213 = vextract.low.u32 %v3212
      %v3214 = vextract.high.u32 %v3212
      %v3215 = vmul.u32.u64.compose %v3211, %v3206
      %v3216 = vextract.low.u32 %v3215
      %v3217 = vextract.high.u32 %v3215
      %v3218 = vmul.u32 %v3211, %v3202
      %v3219 = vadd.s32 %v3214, %v3216
      %vm3220 = vc.u32 %v3214, %v3216
      %v3221 = vadd.s32 %v3217, 1
      %v3222 = vsel %vm3220, %v3221, %v3217
      %v3223 = vadd.s32 %v3218, %v3222
      %v3224 = vadd.s32 %v3223, 536870912
      %v3225 = vshrl.u32 %v3224, 30
      %v3226 = vshll.u32 %v3225, 30
      %v3227 = vsub.s32 %v3223, %v3226
      %vm3228 = vcmp.lt.s32.totalorder %v3227, 0
      %v3229 = vsub.s32 0, %v3227
      %v3230 = vsel %vm3228, %v3229, %v3227
      %v3231 = vclz %v3230
      %v3232 = vsub.s32 %v3231, 2
      %vm3233 = vcmp.gt.s32.totalorder 0, %v3232
      %v3234 = vsel %vm3233, 0, %v3232
      %v3235 = vsub.s32 32, %v3234
      %v3236 = vshll.u32 %v3227, %v3234
      %v3237 = vshrl.u32 %v3219, %v3235
      %v3238 = vor.u32 %v3236, %v3237
      %v3239 = vsub.s32 4294967266, %v3234
      %v3240 = vadd.s32 %v3239, 127
      %v3241 = vshll.u32 %v3240, 23
      %v3242 = vor.u32 4788187, %v3241
      %v3243 = vand.u32 2147483647, %v3242
      %v3245 = vcvt.s32.f32 %v3238
      %v3246 = vmul.f32 %v3245, %v3243
      %v3247 = vxor.u32 %v3246, 2147483648
      %v3248 = vsel %vm3165, %v3247, %v3246
      %v3249 = vsub.s32 4, %v3225
      %v3250 = vsel %vm3165, %v3249, %v3225
      %v3251 = vsel %vm3164, %v437, %v3248
      %v3252 = vsel %vm3164, 0, %v3250
      %v3253 = vcosq.f32.pop %v3251
      %v3254 = vsinq.f32.pop %v3251
      %vm3255 = vweird.f32 %v437
      %v3256 = vadd.s32 %v3252, 3
      %v3257 = vand.u32 %v3256, 3
      %vm3258 = vcmp.lt.s32.totalorder %v3257, 2
      %vm3259 = vcmp.eq.s32.totalorder %v3257, 0
      %v3260 = vxor.u32 %v3254, 2147483648
      %v3261 = vsel %vm3259, %v3253, %v3260
      %vm3262 = vcmp.eq.s32.totalorder %v3257, 2
      %v3263 = vxor.u32 %v3253, 2147483648
      %v3264 = vsel %vm3262, %v3263, %v3254
      %v3265 = vsel %vm3258, %v3261, %v3264
      %v3266 = vsel %vm3255, nan, %v3265
      %v3267 = vand.u32 2147483647, %v438
      %vm3268 = vcmp.le.f32.partialorder %v3267, 0.7853982
      %vm3269 = vcmp.lt.s32.totalorder %v438, 0
      %v3270 = vand.u32 %v438, 2139095040
      %v3271 = vshrl.u32 %v3270, 23
      %v3272 = vsub.s32 %v3271, 127
      %v3273 = vand.u32 2147483647, %v438
      %v3274 = vand.u32 %v3273, 8388607
      %v3275 = vor.u32 %v3274, 8388608
      %v3276 = vsub.s32 0, %v3275
      %v3277 = vadd.s32 %v3272, 1
      %vm3278 = vcmp.gt.s32.totalorder %v3277, 0
      %v3279 = vsel %vm3278, %v3277, 0
      %v3280 = vshrl.u32 %v3279, 5
      %v3281 = vand.u32 %v3279, 31
      %v3282 = vsub.s32 32, %v3281
      %v3283 = vshrl.u32 683565275, %v3282
      %v3284 = vshll.u32 683565275, %v3281
      %v3285 = vshrl.u32 2475754826, %v3282
      %v3286 = vor.u32 %v3284, %v3285
      %v3287 = vshll.u32 2475754826, %v3281
      %v3288 = vshrl.u32 2131351028, %v3282
      %v3289 = vor.u32 %v3287, %v3288
      %v3290 = vshll.u32 2131351028, %v3281
      %v3291 = vshrl.u32 2102212464, %v3282
      %v3292 = vor.u32 %v3290, %v3291
      %v3293 = vshll.u32 2102212464, %v3281
      %v3294 = vshrl.u32 920167782, %v3282
      %v3295 = vor.u32 %v3293, %v3294
      %v3296 = vshll.u32 920167782, %v3281
      %v3297 = vshrl.u32 1326507024, %v3282
      %v3298 = vor.u32 %v3296, %v3297
      %vm3299 = vcmp.lt.s32.totalorder %v3280, 1
      %vm3300 = vcmp.lt.s32.totalorder %v3280, 2
      %vm3301 = vcmp.lt.s32.totalorder %v3280, 3
      %vm3302 = vcmp.lt.s32.totalorder %v3280, 4
      %v3303 = vsel %vm3299, %v3283, %v3286
      %v3304 = vsel %vm3302, %v3292, 2102212464
      %v3305 = vsel %vm3301, %v3289, %v3304
      %v3306 = vsel %vm3300, %v3303, %v3305
      %v3307 = vsel %vm3299, %v3286, %v3289
      %v3308 = vsel %vm3302, %v3295, 920167782
      %v3309 = vsel %vm3301, %v3292, %v3308
      %v3310 = vsel %vm3300, %v3307, %v3309
      %v3311 = vsel %vm3299, %v3289, %v3292
      %v3312 = vsel %vm3302, %v3298, 1326507024
      %v3313 = vsel %vm3301, %v3295, %v3312
      %v3314 = vsel %vm3300, %v3311, %v3313
      %v3315 = vshll.u32 %v3275, 8
      %v3316 = vmul.u32.u64.compose %v3315, %v3314
      %v3317 = vextract.low.u32 %v3316
      %v3318 = vextract.high.u32 %v3316
      %v3319 = vmul.u32.u64.compose %v3315, %v3310
      %v3320 = vextract.low.u32 %v3319
      %v3321 = vextract.high.u32 %v3319
      %v3322 = vmul.u32 %v3315, %v3306
      %v3323 = vadd.s32 %v3318, %v3320
      %vm3324 = vc.u32 %v3318, %v3320
      %v3325 = vadd.s32 %v3321, 1
      %v3326 = vsel %vm3324, %v3325, %v3321
      %v3327 = vadd.s32 %v3322, %v3326
      %v3328 = vadd.s32 %v3327, 536870912
      %v3329 = vshrl.u32 %v3328, 30
      %v3330 = vshll.u32 %v3329, 30
      %v3331 = vsub.s32 %v3327, %v3330
      %vm3332 = vcmp.lt.s32.totalorder %v3331, 0
      %v3333 = vsub.s32 0, %v3331
      %v3334 = vsel %vm3332, %v3333, %v3331
      %v3335 = vclz %v3334
      %v3336 = vsub.s32 %v3335, 2
      %vm3337 = vcmp.gt.s32.totalorder 0, %v3336
      %v3338 = vsel %vm3337, 0, %v3336
      %v3339 = vsub.s32 32, %v3338
      %v3340 = vshll.u32 %v3331, %v3338
      %v3341 = vshrl.u32 %v3323, %v3339
      %v3342 = vor.u32 %v3340, %v3341
      %v3343 = vsub.s32 4294967266, %v3338
      %v3344 = vadd.s32 %v3343, 127
      %v3345 = vshll.u32 %v3344, 23
      %v3346 = vor.u32 4788187, %v3345
      %v3347 = vand.u32 2147483647, %v3346
      %v3349 = vcvt.s32.f32 %v3342
      %v3350 = vmul.f32 %v3349, %v3347
      %v3351 = vxor.u32 %v3350, 2147483648
      %v3352 = vsel %vm3269, %v3351, %v3350
      %v3353 = vsub.s32 4, %v3329
      %v3354 = vsel %vm3269, %v3353, %v3329
      %v3355 = vsel %vm3268, %v438, %v3352
      %v3356 = vsel %vm3268, 0, %v3354
      %v3357 = vcosq.f32.pop %v3355
      %v3358 = vsinq.f32.pop %v3355
      %vm3359 = vweird.f32 %v438
      %v3360 = vadd.s32 %v3356, 3
      %v3361 = vand.u32 %v3360, 3
      %vm3362 = vcmp.lt.s32.totalorder %v3361, 2
      %vm3363 = vcmp.eq.s32.totalorder %v3361, 0
      %v3364 = vxor.u32 %v3358, 2147483648
      %v3365 = vsel %vm3363, %v3357, %v3364
      %vm3366 = vcmp.eq.s32.totalorder %v3361, 2
      %v3367 = vxor.u32 %v3357, 2147483648
      %v3368 = vsel %vm3366, %v3367, %v3358
      %v3369 = vsel %vm3362, %v3365, %v3368
      %v3370 = vsel %vm3359, nan, %v3369
      %v3371 = vand.u32 2147483647, %v439
      %vm3372 = vcmp.le.f32.partialorder %v3371, 0.7853982
      %vm3373 = vcmp.lt.s32.totalorder %v439, 0
      %v3374 = vand.u32 %v439, 2139095040
      %v3375 = vshrl.u32 %v3374, 23
      %v3376 = vsub.s32 %v3375, 127
      %v3377 = vand.u32 2147483647, %v439
      %v3378 = vand.u32 %v3377, 8388607
      %v3379 = vor.u32 %v3378, 8388608
      %v3380 = vsub.s32 0, %v3379
      %v3381 = vadd.s32 %v3376, 1
      %vm3382 = vcmp.gt.s32.totalorder %v3381, 0
      %v3383 = vsel %vm3382, %v3381, 0
      %v3384 = vshrl.u32 %v3383, 5
      %v3385 = vand.u32 %v3383, 31
      %v3386 = vsub.s32 32, %v3385
      %v3387 = vshrl.u32 683565275, %v3386
      %v3388 = vshll.u32 683565275, %v3385
      %v3389 = vshrl.u32 2475754826, %v3386
      %v3390 = vor.u32 %v3388, %v3389
      %v3391 = vshll.u32 2475754826, %v3385
      %v3392 = vshrl.u32 2131351028, %v3386
      %v3393 = vor.u32 %v3391, %v3392
      %v3394 = vshll.u32 2131351028, %v3385
      %v3395 = vshrl.u32 2102212464, %v3386
      %v3396 = vor.u32 %v3394, %v3395
      %v3397 = vshll.u32 2102212464, %v3385
      %v3398 = vshrl.u32 920167782, %v3386
      %v3399 = vor.u32 %v3397, %v3398
      %v3400 = vshll.u32 920167782, %v3385
      %v3401 = vshrl.u32 1326507024, %v3386
      %v3402 = vor.u32 %v3400, %v3401
      %vm3403 = vcmp.lt.s32.totalorder %v3384, 1
      %vm3404 = vcmp.lt.s32.totalorder %v3384, 2
      %vm3405 = vcmp.lt.s32.totalorder %v3384, 3
      %vm3406 = vcmp.lt.s32.totalorder %v3384, 4
      %v3407 = vsel %vm3403, %v3387, %v3390
      %v3408 = vsel %vm3406, %v3396, 2102212464
      %v3409 = vsel %vm3405, %v3393, %v3408
      %v3410 = vsel %vm3404, %v3407, %v3409
      %v3411 = vsel %vm3403, %v3390, %v3393
      %v3412 = vsel %vm3406, %v3399, 920167782
      %v3413 = vsel %vm3405, %v3396, %v3412
      %v3414 = vsel %vm3404, %v3411, %v3413
      %v3415 = vsel %vm3403, %v3393, %v3396
      %v3416 = vsel %vm3406, %v3402, 1326507024
      %v3417 = vsel %vm3405, %v3399, %v3416
      %v3418 = vsel %vm3404, %v3415, %v3417
      %v3419 = vshll.u32 %v3379, 8
      %v3420 = vmul.u32.u64.compose %v3419, %v3418
      %v3421 = vextract.low.u32 %v3420
      %v3422 = vextract.high.u32 %v3420
      %v3423 = vmul.u32.u64.compose %v3419, %v3414
      %v3424 = vextract.low.u32 %v3423
      %v3425 = vextract.high.u32 %v3423
      %v3426 = vmul.u32 %v3419, %v3410
      %v3427 = vadd.s32 %v3422, %v3424
      %vm3428 = vc.u32 %v3422, %v3424
      %v3429 = vadd.s32 %v3425, 1
      %v3430 = vsel %vm3428, %v3429, %v3425
      %v3431 = vadd.s32 %v3426, %v3430
      %v3432 = vadd.s32 %v3431, 536870912
      %v3433 = vshrl.u32 %v3432, 30
      %v3434 = vshll.u32 %v3433, 30
      %v3435 = vsub.s32 %v3431, %v3434
      %vm3436 = vcmp.lt.s32.totalorder %v3435, 0
      %v3437 = vsub.s32 0, %v3435
      %v3438 = vsel %vm3436, %v3437, %v3435
      %v3439 = vclz %v3438
      %v3440 = vsub.s32 %v3439, 2
      %vm3441 = vcmp.gt.s32.totalorder 0, %v3440
      %v3442 = vsel %vm3441, 0, %v3440
      %v3443 = vsub.s32 32, %v3442
      %v3444 = vshll.u32 %v3435, %v3442
      %v3445 = vshrl.u32 %v3427, %v3443
      %v3446 = vor.u32 %v3444, %v3445
      %v3447 = vsub.s32 4294967266, %v3442
      %v3448 = vadd.s32 %v3447, 127
      %v3449 = vshll.u32 %v3448, 23
      %v3450 = vor.u32 4788187, %v3449
      %v3451 = vand.u32 2147483647, %v3450
      %v3453 = vcvt.s32.f32 %v3446
      %v3454 = vmul.f32 %v3453, %v3451
      %v3455 = vxor.u32 %v3454, 2147483648
      %v3456 = vsel %vm3373, %v3455, %v3454
      %v3457 = vsub.s32 4, %v3433
      %v3458 = vsel %vm3373, %v3457, %v3433
      %v3459 = vsel %vm3372, %v439, %v3456
      %v3460 = vsel %vm3372, 0, %v3458
      %v3461 = vcosq.f32.pop %v3459
      %v3462 = vsinq.f32.pop %v3459
      %vm3463 = vweird.f32 %v439
      %v3464 = vadd.s32 %v3460, 3
      %v3465 = vand.u32 %v3464, 3
      %vm3466 = vcmp.lt.s32.totalorder %v3465, 2
      %vm3467 = vcmp.eq.s32.totalorder %v3465, 0
      %v3468 = vxor.u32 %v3462, 2147483648
      %v3469 = vsel %vm3467, %v3461, %v3468
      %vm3470 = vcmp.eq.s32.totalorder %v3465, 2
      %v3471 = vxor.u32 %v3461, 2147483648
      %v3472 = vsel %vm3470, %v3471, %v3462
      %v3473 = vsel %vm3466, %v3469, %v3472
      %v3474 = vsel %vm3463, nan, %v3473
      %v3475 = vand.u32 2147483647, %v440
      %vm3476 = vcmp.le.f32.partialorder %v3475, 0.7853982
      %vm3477 = vcmp.lt.s32.totalorder %v440, 0
      %v3478 = vand.u32 %v440, 2139095040
      %v3479 = vshrl.u32 %v3478, 23
      %v3480 = vsub.s32 %v3479, 127
      %v3481 = vand.u32 2147483647, %v440
      %v3482 = vand.u32 %v3481, 8388607
      %v3483 = vor.u32 %v3482, 8388608
      %v3484 = vsub.s32 0, %v3483
      %v3485 = vadd.s32 %v3480, 1
      %vm3486 = vcmp.gt.s32.totalorder %v3485, 0
      %v3487 = vsel %vm3486, %v3485, 0
      %v3488 = vshrl.u32 %v3487, 5
      %v3489 = vand.u32 %v3487, 31
      %v3490 = vsub.s32 32, %v3489
      %v3491 = vshrl.u32 683565275, %v3490
      %v3492 = vshll.u32 683565275, %v3489
      %v3493 = vshrl.u32 2475754826, %v3490
      %v3494 = vor.u32 %v3492, %v3493
      %v3495 = vshll.u32 2475754826, %v3489
      %v3496 = vshrl.u32 2131351028, %v3490
      %v3497 = vor.u32 %v3495, %v3496
      %v3498 = vshll.u32 2131351028, %v3489
      %v3499 = vshrl.u32 2102212464, %v3490
      %v3500 = vor.u32 %v3498, %v3499
      %v3501 = vshll.u32 2102212464, %v3489
      %v3502 = vshrl.u32 920167782, %v3490
      %v3503 = vor.u32 %v3501, %v3502
      %v3504 = vshll.u32 920167782, %v3489
      %v3505 = vshrl.u32 1326507024, %v3490
      %v3506 = vor.u32 %v3504, %v3505
      %vm3507 = vcmp.lt.s32.totalorder %v3488, 1
      %vm3508 = vcmp.lt.s32.totalorder %v3488, 2
      %vm3509 = vcmp.lt.s32.totalorder %v3488, 3
      %vm3510 = vcmp.lt.s32.totalorder %v3488, 4
      %v3511 = vsel %vm3507, %v3491, %v3494
      %v3512 = vsel %vm3510, %v3500, 2102212464
      %v3513 = vsel %vm3509, %v3497, %v3512
      %v3514 = vsel %vm3508, %v3511, %v3513
      %v3515 = vsel %vm3507, %v3494, %v3497
      %v3516 = vsel %vm3510, %v3503, 920167782
      %v3517 = vsel %vm3509, %v3500, %v3516
      %v3518 = vsel %vm3508, %v3515, %v3517
      %v3519 = vsel %vm3507, %v3497, %v3500
      %v3520 = vsel %vm3510, %v3506, 1326507024
      %v3521 = vsel %vm3509, %v3503, %v3520
      %v3522 = vsel %vm3508, %v3519, %v3521
      %v3523 = vshll.u32 %v3483, 8
      %v3524 = vmul.u32.u64.compose %v3523, %v3522
      %v3525 = vextract.low.u32 %v3524
      %v3526 = vextract.high.u32 %v3524
      %v3527 = vmul.u32.u64.compose %v3523, %v3518
      %v3528 = vextract.low.u32 %v3527
      %v3529 = vextract.high.u32 %v3527
      %v3530 = vmul.u32 %v3523, %v3514
      %v3531 = vadd.s32 %v3526, %v3528
      %vm3532 = vc.u32 %v3526, %v3528
      %v3533 = vadd.s32 %v3529, 1
      %v3534 = vsel %vm3532, %v3533, %v3529
      %v3535 = vadd.s32 %v3530, %v3534
      %v3536 = vadd.s32 %v3535, 536870912
      %v3537 = vshrl.u32 %v3536, 30
      %v3538 = vshll.u32 %v3537, 30
      %v3539 = vsub.s32 %v3535, %v3538
      %vm3540 = vcmp.lt.s32.totalorder %v3539, 0
      %v3541 = vsub.s32 0, %v3539
      %v3542 = vsel %vm3540, %v3541, %v3539
      %v3543 = vclz %v3542
      %v3544 = vsub.s32 %v3543, 2
      %vm3545 = vcmp.gt.s32.totalorder 0, %v3544
      %v3546 = vsel %vm3545, 0, %v3544
      %v3547 = vsub.s32 32, %v3546
      %v3548 = vshll.u32 %v3539, %v3546
      %v3549 = vshrl.u32 %v3531, %v3547
      %v3550 = vor.u32 %v3548, %v3549
      %v3551 = vsub.s32 4294967266, %v3546
      %v3552 = vadd.s32 %v3551, 127
      %v3553 = vshll.u32 %v3552, 23
      %v3554 = vor.u32 4788187, %v3553
      %v3555 = vand.u32 2147483647, %v3554
      %v3557 = vcvt.s32.f32 %v3550
      %v3558 = vmul.f32 %v3557, %v3555
      %v3559 = vxor.u32 %v3558, 2147483648
      %v3560 = vsel %vm3477, %v3559, %v3558
      %v3561 = vsub.s32 4, %v3537
      %v3562 = vsel %vm3477, %v3561, %v3537
      %v3563 = vsel %vm3476, %v440, %v3560
      %v3564 = vsel %vm3476, 0, %v3562
      %v3565 = vcosq.f32.pop %v3563
      %v3566 = vsinq.f32.pop %v3563
      %vm3567 = vweird.f32 %v440
      %v3568 = vadd.s32 %v3564, 3
      %v3569 = vand.u32 %v3568, 3
      %vm3570 = vcmp.lt.s32.totalorder %v3569, 2
      %vm3571 = vcmp.eq.s32.totalorder %v3569, 0
      %v3572 = vxor.u32 %v3566, 2147483648
      %v3573 = vsel %vm3571, %v3565, %v3572
      %vm3574 = vcmp.eq.s32.totalorder %v3569, 2
      %v3575 = vxor.u32 %v3565, 2147483648
      %v3576 = vsel %vm3574, %v3575, %v3566
      %v3577 = vsel %vm3570, %v3573, %v3576
      %v3578 = vsel %vm3567, nan, %v3577
      %v3579 = vand.u32 2147483647, %v441
      %vm3580 = vcmp.le.f32.partialorder %v3579, 0.7853982
      %vm3581 = vcmp.lt.s32.totalorder %v441, 0
      %v3582 = vand.u32 %v441, 2139095040
      %v3583 = vshrl.u32 %v3582, 23
      %v3584 = vsub.s32 %v3583, 127
      %v3585 = vand.u32 2147483647, %v441
      %v3586 = vand.u32 %v3585, 8388607
      %v3587 = vor.u32 %v3586, 8388608
      %v3588 = vsub.s32 0, %v3587
      %v3589 = vadd.s32 %v3584, 1
      %vm3590 = vcmp.gt.s32.totalorder %v3589, 0
      %v3591 = vsel %vm3590, %v3589, 0
      %v3592 = vshrl.u32 %v3591, 5
      %v3593 = vand.u32 %v3591, 31
      %v3594 = vsub.s32 32, %v3593
      %v3595 = vshrl.u32 683565275, %v3594
      %v3596 = vshll.u32 683565275, %v3593
      %v3597 = vshrl.u32 2475754826, %v3594
      %v3598 = vor.u32 %v3596, %v3597
      %v3599 = vshll.u32 2475754826, %v3593
      %v3600 = vshrl.u32 2131351028, %v3594
      %v3601 = vor.u32 %v3599, %v3600
      %v3602 = vshll.u32 2131351028, %v3593
      %v3603 = vshrl.u32 2102212464, %v3594
      %v3604 = vor.u32 %v3602, %v3603
      %v3605 = vshll.u32 2102212464, %v3593
      %v3606 = vshrl.u32 920167782, %v3594
      %v3607 = vor.u32 %v3605, %v3606
      %v3608 = vshll.u32 920167782, %v3593
      %v3609 = vshrl.u32 1326507024, %v3594
      %v3610 = vor.u32 %v3608, %v3609
      %vm3611 = vcmp.lt.s32.totalorder %v3592, 1
      %vm3612 = vcmp.lt.s32.totalorder %v3592, 2
      %vm3613 = vcmp.lt.s32.totalorder %v3592, 3
      %vm3614 = vcmp.lt.s32.totalorder %v3592, 4
      %v3615 = vsel %vm3611, %v3595, %v3598
      %v3616 = vsel %vm3614, %v3604, 2102212464
      %v3617 = vsel %vm3613, %v3601, %v3616
      %v3618 = vsel %vm3612, %v3615, %v3617
      %v3619 = vsel %vm3611, %v3598, %v3601
      %v3620 = vsel %vm3614, %v3607, 920167782
      %v3621 = vsel %vm3613, %v3604, %v3620
      %v3622 = vsel %vm3612, %v3619, %v3621
      %v3623 = vsel %vm3611, %v3601, %v3604
      %v3624 = vsel %vm3614, %v3610, 1326507024
      %v3625 = vsel %vm3613, %v3607, %v3624
      %v3626 = vsel %vm3612, %v3623, %v3625
      %v3627 = vshll.u32 %v3587, 8
      %v3628 = vmul.u32.u64.compose %v3627, %v3626
      %v3629 = vextract.low.u32 %v3628
      %v3630 = vextract.high.u32 %v3628
      %v3631 = vmul.u32.u64.compose %v3627, %v3622
      %v3632 = vextract.low.u32 %v3631
      %v3633 = vextract.high.u32 %v3631
      %v3634 = vmul.u32 %v3627, %v3618
      %v3635 = vadd.s32 %v3630, %v3632
      %vm3636 = vc.u32 %v3630, %v3632
      %v3637 = vadd.s32 %v3633, 1
      %v3638 = vsel %vm3636, %v3637, %v3633
      %v3639 = vadd.s32 %v3634, %v3638
      %v3640 = vadd.s32 %v3639, 536870912
      %v3641 = vshrl.u32 %v3640, 30
      %v3642 = vshll.u32 %v3641, 30
      %v3643 = vsub.s32 %v3639, %v3642
      %vm3644 = vcmp.lt.s32.totalorder %v3643, 0
      %v3645 = vsub.s32 0, %v3643
      %v3646 = vsel %vm3644, %v3645, %v3643
      %v3647 = vclz %v3646
      %v3648 = vsub.s32 %v3647, 2
      %vm3649 = vcmp.gt.s32.totalorder 0, %v3648
      %v3650 = vsel %vm3649, 0, %v3648
      %v3651 = vsub.s32 32, %v3650
      %v3652 = vshll.u32 %v3643, %v3650
      %v3653 = vshrl.u32 %v3635, %v3651
      %v3654 = vor.u32 %v3652, %v3653
      %v3655 = vsub.s32 4294967266, %v3650
      %v3656 = vadd.s32 %v3655, 127
      %v3657 = vshll.u32 %v3656, 23
      %v3658 = vor.u32 4788187, %v3657
      %v3659 = vand.u32 2147483647, %v3658
      %v3661 = vcvt.s32.f32 %v3654
      %v3662 = vmul.f32 %v3661, %v3659
      %v3663 = vxor.u32 %v3662, 2147483648
      %v3664 = vsel %vm3581, %v3663, %v3662
      %v3665 = vsub.s32 4, %v3641
      %v3666 = vsel %vm3581, %v3665, %v3641
      %v3667 = vsel %vm3580, %v441, %v3664
      %v3668 = vsel %vm3580, 0, %v3666
      %v3669 = vcosq.f32.pop %v3667
      %v3670 = vsinq.f32.pop %v3667
      %vm3671 = vweird.f32 %v441
      %v3672 = vadd.s32 %v3668, 3
      %v3673 = vand.u32 %v3672, 3
      %vm3674 = vcmp.lt.s32.totalorder %v3673, 2
      %vm3675 = vcmp.eq.s32.totalorder %v3673, 0
      %v3676 = vxor.u32 %v3670, 2147483648
      %v3677 = vsel %vm3675, %v3669, %v3676
      %vm3678 = vcmp.eq.s32.totalorder %v3673, 2
      %v3679 = vxor.u32 %v3669, 2147483648
      %v3680 = vsel %vm3678, %v3679, %v3670
      %v3681 = vsel %vm3674, %v3677, %v3680
      %v3682 = vsel %vm3671, nan, %v3681
      %v3683 = vand.u32 2147483647, %v442
      %vm3684 = vcmp.le.f32.partialorder %v3683, 0.7853982
      %vm3685 = vcmp.lt.s32.totalorder %v442, 0
      %v3686 = vand.u32 %v442, 2139095040
      %v3687 = vshrl.u32 %v3686, 23
      %v3688 = vsub.s32 %v3687, 127
      %v3689 = vand.u32 2147483647, %v442
      %v3690 = vand.u32 %v3689, 8388607
      %v3691 = vor.u32 %v3690, 8388608
      %v3692 = vsub.s32 0, %v3691
      %v3693 = vadd.s32 %v3688, 1
      %vm3694 = vcmp.gt.s32.totalorder %v3693, 0
      %v3695 = vsel %vm3694, %v3693, 0
      %v3696 = vshrl.u32 %v3695, 5
      %v3697 = vand.u32 %v3695, 31
      %v3698 = vsub.s32 32, %v3697
      %v3699 = vshrl.u32 683565275, %v3698
      %v3700 = vshll.u32 683565275, %v3697
      %v3701 = vshrl.u32 2475754826, %v3698
      %v3702 = vor.u32 %v3700, %v3701
      %v3703 = vshll.u32 2475754826, %v3697
      %v3704 = vshrl.u32 2131351028, %v3698
      %v3705 = vor.u32 %v3703, %v3704
      %v3706 = vshll.u32 2131351028, %v3697
      %v3707 = vshrl.u32 2102212464, %v3698
      %v3708 = vor.u32 %v3706, %v3707
      %v3709 = vshll.u32 2102212464, %v3697
      %v3710 = vshrl.u32 920167782, %v3698
      %v3711 = vor.u32 %v3709, %v3710
      %v3712 = vshll.u32 920167782, %v3697
      %v3713 = vshrl.u32 1326507024, %v3698
      %v3714 = vor.u32 %v3712, %v3713
      %vm3715 = vcmp.lt.s32.totalorder %v3696, 1
      %vm3716 = vcmp.lt.s32.totalorder %v3696, 2
      %vm3717 = vcmp.lt.s32.totalorder %v3696, 3
      %vm3718 = vcmp.lt.s32.totalorder %v3696, 4
      %v3719 = vsel %vm3715, %v3699, %v3702
      %v3720 = vsel %vm3718, %v3708, 2102212464
      %v3721 = vsel %vm3717, %v3705, %v3720
      %v3722 = vsel %vm3716, %v3719, %v3721
      %v3723 = vsel %vm3715, %v3702, %v3705
      %v3724 = vsel %vm3718, %v3711, 920167782
      %v3725 = vsel %vm3717, %v3708, %v3724
      %v3726 = vsel %vm3716, %v3723, %v3725
      %v3727 = vsel %vm3715, %v3705, %v3708
      %v3728 = vsel %vm3718, %v3714, 1326507024
      %v3729 = vsel %vm3717, %v3711, %v3728
      %v3730 = vsel %vm3716, %v3727, %v3729
      %v3731 = vshll.u32 %v3691, 8
      %v3732 = vmul.u32.u64.compose %v3731, %v3730
      %v3733 = vextract.low.u32 %v3732
      %v3734 = vextract.high.u32 %v3732
      %v3735 = vmul.u32.u64.compose %v3731, %v3726
      %v3736 = vextract.low.u32 %v3735
      %v3737 = vextract.high.u32 %v3735
      %v3738 = vmul.u32 %v3731, %v3722
      %v3739 = vadd.s32 %v3734, %v3736
      %vm3740 = vc.u32 %v3734, %v3736
      %v3741 = vadd.s32 %v3737, 1
      %v3742 = vsel %vm3740, %v3741, %v3737
      %v3743 = vadd.s32 %v3738, %v3742
      %v3744 = vadd.s32 %v3743, 536870912
      %v3745 = vshrl.u32 %v3744, 30
      %v3746 = vshll.u32 %v3745, 30
      %v3747 = vsub.s32 %v3743, %v3746
      %vm3748 = vcmp.lt.s32.totalorder %v3747, 0
      %v3749 = vsub.s32 0, %v3747
      %v3750 = vsel %vm3748, %v3749, %v3747
      %v3751 = vclz %v3750
      %v3752 = vsub.s32 %v3751, 2
      %vm3753 = vcmp.gt.s32.totalorder 0, %v3752
      %v3754 = vsel %vm3753, 0, %v3752
      %v3755 = vsub.s32 32, %v3754
      %v3756 = vshll.u32 %v3747, %v3754
      %v3757 = vshrl.u32 %v3739, %v3755
      %v3758 = vor.u32 %v3756, %v3757
      %v3759 = vsub.s32 4294967266, %v3754
      %v3760 = vadd.s32 %v3759, 127
      %v3761 = vshll.u32 %v3760, 23
      %v3762 = vor.u32 4788187, %v3761
      %v3763 = vand.u32 2147483647, %v3762
      %v3765 = vcvt.s32.f32 %v3758
      %v3766 = vmul.f32 %v3765, %v3763
      %v3767 = vxor.u32 %v3766, 2147483648
      %v3768 = vsel %vm3685, %v3767, %v3766
      %v3769 = vsub.s32 4, %v3745
      %v3770 = vsel %vm3685, %v3769, %v3745
      %v3771 = vsel %vm3684, %v442, %v3768
      %v3772 = vsel %vm3684, 0, %v3770
      %v3773 = vcosq.f32.pop %v3771
      %v3774 = vsinq.f32.pop %v3771
      %vm3775 = vweird.f32 %v442
      %v3776 = vadd.s32 %v3772, 3
      %v3777 = vand.u32 %v3776, 3
      %vm3778 = vcmp.lt.s32.totalorder %v3777, 2
      %vm3779 = vcmp.eq.s32.totalorder %v3777, 0
      %v3780 = vxor.u32 %v3774, 2147483648
      %v3781 = vsel %vm3779, %v3773, %v3780
      %vm3782 = vcmp.eq.s32.totalorder %v3777, 2
      %v3783 = vxor.u32 %v3773, 2147483648
      %v3784 = vsel %vm3782, %v3783, %v3774
      %v3785 = vsel %vm3778, %v3781, %v3784
      %v3786 = vsel %vm3775, nan, %v3785
      %v3787 = vsel %vm2107, 1.0, %v410
      %v3788 = vsel %vm2108, 1.0, %v411
      %v3789 = vsel %vm2109, 1.0, %v412
      %v3790 = vsel %vm2110, 1.0, %v413
      %v3791 = vsel %vm2111, 1.0, %v414
      %v3792 = vsel %vm2112, 1.0, %v415
      %v3793 = vsel %vm2113, 1.0, %v416
      %v3794 = vsel %vm2114, 1.0, %v417
      %v3795 = vsel %vm2115, 1.0, %v418
      %v3796 = vsel %vm2116, 1.0, %v419
      %v3797 = vsel %vm2117, 1.0, %v420
      %v3798 = vsel %vm2118, 1.0, %v421
      %v3799 = vsel %vm2119, 1.0, %v422
      %v3800 = vsel %vm2120, 1.0, %v423
      %v3801 = vsel %vm2121, 1.0, %v424
      %v3802 = vsel %vm2122, 1.0, %v425
      %v3803 = vrcp.pop %v3787
      %v3804 = vmul.f32 %v2226, %v3803
      %v3805 = vrcp.pop %v3788
      %v3806 = vmul.f32 %v2330, %v3805
      %v3807 = vrcp.pop %v3789
      %v3808 = vmul.f32 %v2434, %v3807
      %v3809 = vrcp.pop %v3790
      %v3810 = vmul.f32 %v2538, %v3809
      %v3811 = vrcp.pop %v3791
      %v3812 = vmul.f32 %v2642, %v3811
      %v3813 = vrcp.pop %v3792
      %v3814 = vmul.f32 %v2746, %v3813
      %v3815 = vrcp.pop %v3793
      %v3816 = vmul.f32 %v2850, %v3815
      %v3817 = vrcp.pop %v3794
      %v3818 = vmul.f32 %v2954, %v3817
      %v3819 = vrcp.pop %v3795
      %v3820 = vmul.f32 %v3058, %v3819
      %v3821 = vrcp.pop %v3796
      %v3822 = vmul.f32 %v3162, %v3821
      %v3823 = vrcp.pop %v3797
      %v3824 = vmul.f32 %v3266, %v3823
      %v3825 = vrcp.pop %v3798
      %v3826 = vmul.f32 %v3370, %v3825
      %v3827 = vrcp.pop %v3799
      %v3828 = vmul.f32 %v3474, %v3827
      %v3829 = vrcp.pop %v3800
      %v3830 = vmul.f32 %v3578, %v3829
      %v3831 = vrcp.pop %v3801
      %v3832 = vmul.f32 %v3682, %v3831
      %v3833 = vrcp.pop %v3802
      %v3834 = vmul.f32 %v3786, %v3833
      %v3835 = vsel %vm2107, %v426, %v3804
      %v3836 = vsel %vm2108, %v426, %v3806
      %v3837 = vsel %vm2109, %v426, %v3808
      %v3838 = vsel %vm2110, %v426, %v3810
      %v3839 = vsel %vm2111, %v426, %v3812
      %v3840 = vsel %vm2112, %v426, %v3814
      %v3841 = vsel %vm2113, %v426, %v3816
      %v3842 = vsel %vm2114, %v426, %v3818
      %v3843 = vsel %vm2115, %v426, %v3820
      %v3844 = vsel %vm2116, %v426, %v3822
      %v3845 = vsel %vm2117, %v426, %v3824
      %v3846 = vsel %vm2118, %v426, %v3826
      %v3847 = vsel %vm2119, %v426, %v3828
      %v3848 = vsel %vm2120, %v426, %v3830
      %v3849 = vsel %vm2121, %v426, %v3832
      %v3850 = vsel %vm2122, %v426, %v3834
      %v3851 = vld [vmem:[#allocation2] sm:$0xff]
      %v3852 = vld [vmem:[#allocation2 + $0x8] sm:$0xff]
      %v3853 = vld [vmem:[#allocation2 + $0x10] sm:$0xff]
      %v3854 = vld [vmem:[#allocation2 + $0x18] sm:$0xff]
      %v3855 = vld [vmem:[#allocation2 + $0x20] sm:$0xff]
      %v3856 = vld [vmem:[#allocation2 + $0x28] sm:$0xff]
      %v3857 = vld [vmem:[#allocation2 + $0x30] sm:$0xff]
      %v3858 = vld [vmem:[#allocation2 + $0x38] sm:$0xff]
      %v3859 = vld [vmem:[#allocation2 + $0x40] sm:$0xff]
      %v3860 = vld [vmem:[#allocation2 + $0x48] sm:$0xff]
      %v3861 = vld [vmem:[#allocation2 + $0x50] sm:$0xff]
      %v3862 = vld [vmem:[#allocation2 + $0x58] sm:$0xff]
      %v3863 = vld [vmem:[#allocation2 + $0x60] sm:$0xff]
      %v3864 = vld [vmem:[#allocation2 + $0x68] sm:$0xff]
      %v3865 = vld [vmem:[#allocation2 + $0x70] sm:$0xff]
      %v3866 = vld [vmem:[#allocation2 + $0x78] sm:$0xff]
      %v3867 = vld [vmem:[#allocation2 + $0x80] sm:$0xff]
      %v3868 = vld [vmem:[#allocation2 + $0x88] sm:$0xff]
      %v3869 = vld [vmem:[#allocation2 + $0x90] sm:$0xff]
      %v3870 = vld [vmem:[#allocation2 + $0x98] sm:$0xff]
      %v3871 = vld [vmem:[#allocation2 + $0xa0] sm:$0xff]
      %v3872 = vld [vmem:[#allocation2 + $0xa8] sm:$0xff]
      %v3873 = vld [vmem:[#allocation2 + $0xb0] sm:$0xff]
      %v3874 = vld [vmem:[#allocation2 + $0xb8] sm:$0xff]
      %v3875 = vld [vmem:[#allocation2 + $0xc0] sm:$0xff]
      %v3876 = vld [vmem:[#allocation2 + $0xc8] sm:$0xff]
      %v3877 = vld [vmem:[#allocation2 + $0xd0] sm:$0xff]
      %v3878 = vld [vmem:[#allocation2 + $0xd8] sm:$0xff]
      %v3879 = vld [vmem:[#allocation2 + $0xe0] sm:$0xff]
      %v3880 = vld [vmem:[#allocation2 + $0xe8] sm:$0xff]
      %v3881 = vld [vmem:[#allocation2 + $0xf0] sm:$0xff]
      %v3882 = vld [vmem:[#allocation2 + $0xf8] sm:$0xff]
      %3884 = vset.pattern.permute.xlu0 0
      %3885 = vperm.xlu0 %3884, %v545
      %v3886 = vpop.permute.xlu0 %3885
      %3889 = vset.pattern.permute.xlu0 0
      %3890 = vperm.xlu0 %3889, %v648
      %v3891 = vpop.permute.xlu0 %3890
      %3894 = vset.pattern.permute.xlu0 0
      %3895 = vperm.xlu0 %3894, %v751
      %v3896 = vpop.permute.xlu0 %3895
      %3899 = vset.pattern.permute.xlu0 0
      %3900 = vperm.xlu0 %3899, %v854
      %v3901 = vpop.permute.xlu0 %3900
      %3904 = vset.pattern.permute.xlu0 0
      %3905 = vperm.xlu0 %3904, %v957
      %v3906 = vpop.permute.xlu0 %3905
      %3909 = vset.pattern.permute.xlu0 0
      %3910 = vperm.xlu0 %3909, %v1060
      %v3911 = vpop.permute.xlu0 %3910
      %3914 = vset.pattern.permute.xlu0 0
      %3915 = vperm.xlu0 %3914, %v1163
      %v3916 = vpop.permute.xlu0 %3915
      %3919 = vset.pattern.permute.xlu0 0
      %3920 = vperm.xlu0 %3919, %v1266
      %v3921 = vpop.permute.xlu0 %3920
      %3924 = vset.pattern.permute.xlu0 0
      %3925 = vperm.xlu0 %3924, %v1369
      %v3926 = vpop.permute.xlu0 %3925
      %3929 = vset.pattern.permute.xlu0 0
      %3930 = vperm.xlu0 %3929, %v1472
      %v3931 = vpop.permute.xlu0 %3930
      %3934 = vset.pattern.permute.xlu0 0
      %3935 = vperm.xlu0 %3934, %v1575
      %v3936 = vpop.permute.xlu0 %3935
      %3939 = vset.pattern.permute.xlu0 0
      %3940 = vperm.xlu0 %3939, %v1678
      %v3941 = vpop.permute.xlu0 %3940
      %3944 = vset.pattern.permute.xlu0 0
      %3945 = vperm.xlu0 %3944, %v1781
      %v3946 = vpop.permute.xlu0 %3945
      %3949 = vset.pattern.permute.xlu0 0
      %3950 = vperm.xlu0 %3949, %v1884
      %v3951 = vpop.permute.xlu0 %3950
      %3954 = vset.pattern.permute.xlu0 0
      %3955 = vperm.xlu0 %3954, %v1987
      %v3956 = vpop.permute.xlu0 %3955
      %3959 = vset.pattern.permute.xlu0 0
      %3960 = vperm.xlu0 %3959, %v2090
      %v3961 = vpop.permute.xlu0 %3960
      %v3963 = vmul.f32 %v3886, %v3851
      %v3964 = vmul.f32 %v3891, %v3853
      %v3965 = vmul.f32 %v3896, %v3855
      %v3966 = vmul.f32 %v3901, %v3857
      %v3967 = vmul.f32 %v3906, %v3859
      %v3968 = vmul.f32 %v3911, %v3861
      %v3969 = vmul.f32 %v3916, %v3863
      %v3970 = vmul.f32 %v3921, %v3865
      %v3971 = vmul.f32 %v3926, %v3867
      %v3972 = vmul.f32 %v3931, %v3869
      %v3973 = vmul.f32 %v3936, %v3871
      %v3974 = vmul.f32 %v3941, %v3873
      %v3975 = vmul.f32 %v3946, %v3875
      %v3976 = vmul.f32 %v3951, %v3877
      %v3977 = vmul.f32 %v3956, %v3879
      %v3978 = vmul.f32 %v3961, %v3881
      %3980 = vset.pattern.permute.xlu0 0
      %3981 = vperm.xlu0 %3980, %v3835
      %v3982 = vpop.permute.xlu0 %3981
      %3985 = vset.pattern.permute.xlu0 0
      %3986 = vperm.xlu0 %3985, %v3836
      %v3987 = vpop.permute.xlu0 %3986
      %3990 = vset.pattern.permute.xlu0 0
      %3991 = vperm.xlu0 %3990, %v3837
      %v3992 = vpop.permute.xlu0 %3991
      %3995 = vset.pattern.permute.xlu0 0
      %3996 = vperm.xlu0 %3995, %v3838
      %v3997 = vpop.permute.xlu0 %3996
      %4000 = vset.pattern.permute.xlu0 0
      %4001 = vperm.xlu0 %4000, %v3839
      %v4002 = vpop.permute.xlu0 %4001
      %4005 = vset.pattern.permute.xlu0 0
      %4006 = vperm.xlu0 %4005, %v3840
      %v4007 = vpop.permute.xlu0 %4006
      %4010 = vset.pattern.permute.xlu0 0
      %4011 = vperm.xlu0 %4010, %v3841
      %v4012 = vpop.permute.xlu0 %4011
      %4015 = vset.pattern.permute.xlu0 0
      %4016 = vperm.xlu0 %4015, %v3842
      %v4017 = vpop.permute.xlu0 %4016
      %4020 = vset.pattern.permute.xlu0 0
      %4021 = vperm.xlu0 %4020, %v3843
      %v4022 = vpop.permute.xlu0 %4021
      %4025 = vset.pattern.permute.xlu0 0
      %4026 = vperm.xlu0 %4025, %v3844
      %v4027 = vpop.permute.xlu0 %4026
      %4030 = vset.pattern.permute.xlu0 0
      %4031 = vperm.xlu0 %4030, %v3845
      %v4032 = vpop.permute.xlu0 %4031
      %4035 = vset.pattern.permute.xlu0 0
      %4036 = vperm.xlu0 %4035, %v3846
      %v4037 = vpop.permute.xlu0 %4036
      %4040 = vset.pattern.permute.xlu0 0
      %4041 = vperm.xlu0 %4040, %v3847
      %v4042 = vpop.permute.xlu0 %4041
      %4045 = vset.pattern.permute.xlu0 0
      %4046 = vperm.xlu0 %4045, %v3848
      %v4047 = vpop.permute.xlu0 %4046
      %4050 = vset.pattern.permute.xlu0 0
      %4051 = vperm.xlu0 %4050, %v3849
      %v4052 = vpop.permute.xlu0 %4051
      %4055 = vset.pattern.permute.xlu0 0
      %4056 = vperm.xlu0 %4055, %v3850
      %v4057 = vpop.permute.xlu0 %4056
      %v4059 = vmul.f32 %v3982, %v3852
      %v4060 = vmul.f32 %v3987, %v3854
      %v4061 = vmul.f32 %v3992, %v3856
      %v4062 = vmul.f32 %v3997, %v3858
      %v4063 = vmul.f32 %v4002, %v3860
      %v4064 = vmul.f32 %v4007, %v3862
      %v4065 = vmul.f32 %v4012, %v3864
      %v4066 = vmul.f32 %v4017, %v3866
      %v4067 = vmul.f32 %v4022, %v3868
      %v4068 = vmul.f32 %v4027, %v3870
      %v4069 = vmul.f32 %v4032, %v3872
      %v4070 = vmul.f32 %v4037, %v3874
      %v4071 = vmul.f32 %v4042, %v3876
      %v4072 = vmul.f32 %v4047, %v3878
      %v4073 = vmul.f32 %v4052, %v3880
      %v4074 = vmul.f32 %v4057, %v3882
      %v4075 = vadd.f32 %v3963, %v4059
      %v4076 = vadd.f32 %v3964, %v4060
      %v4077 = vadd.f32 %v3965, %v4061
      %v4078 = vadd.f32 %v3966, %v4062
      %v4079 = vadd.f32 %v3967, %v4063
      %v4080 = vadd.f32 %v3968, %v4064
      %v4081 = vadd.f32 %v3969, %v4065
      %v4082 = vadd.f32 %v3970, %v4066
      %v4083 = vadd.f32 %v3971, %v4067
      %v4084 = vadd.f32 %v3972, %v4068
      %v4085 = vadd.f32 %v3973, %v4069
      %v4086 = vadd.f32 %v3974, %v4070
      %v4087 = vadd.f32 %v3975, %v4071
      %v4088 = vadd.f32 %v3976, %v4072
      %v4089 = vadd.f32 %v3977, %v4073
      %v4090 = vadd.f32 %v3978, %v4074
      %4091 = vst [vmem:[#allocation7] sm:$0xff] %v4075
      %4092 = vst [vmem:[#allocation7 + $0x8] sm:$0xff] %v4076
      %4093 = vst [vmem:[#allocation7 + $0x10] sm:$0xff] %v4077
      %4094 = vst [vmem:[#allocation7 + $0x18] sm:$0xff] %v4078
      %4095 = vst [vmem:[#allocation7 + $0x20] sm:$0xff] %v4079
      %4096 = vst [vmem:[#allocation7 + $0x28] sm:$0xff] %v4080
      %4097 = vst [vmem:[#allocation7 + $0x30] sm:$0xff] %v4081
      %4098 = vst [vmem:[#allocation7 + $0x38] sm:$0xff] %v4082
      %4099 = vst [vmem:[#allocation7 + $0x40] sm:$0xff] %v4083
      %4100 = vst [vmem:[#allocation7 + $0x48] sm:$0xff] %v4084
      %4101 = vst [vmem:[#allocation7 + $0x50] sm:$0xff] %v4085
      %4102 = vst [vmem:[#allocation7 + $0x58] sm:$0xff] %v4086
      %4103 = vst [vmem:[#allocation7 + $0x60] sm:$0xff] %v4087
      %4104 = vst [vmem:[#allocation7 + $0x68] sm:$0xff] %v4088
      %4105 = vst [vmem:[#allocation7 + $0x70] sm:$0xff] %v4089
      %4106 = vst [vmem:[#allocation7 + $0x78] sm:$0xff] %v4090
    $region29: #{tpu_custom_call.1} parent=1 // pred_fallthru
      _
    // Predicated region
    $region30: #{tpu_custom_call.1} parent=1 // pred_check
      _
    $region31: #{tpu_custom_call.1} parent=1 // pred_check_branch
      %4108 = sbr.rel (0) target = $region33
    $region32: #{tpu_custom_call.1} parent=1 // pred_region
      %s4110 = ssub.s32 2048, 2048
      %4111 = vsyncadd [#allocation6], %s4110
      %s4112 = sshll.u32 [#allocation7], 4
      %s4113 = int_to_ptr.vmem [resolvable:$true] %s4112
      %4118 = dma.vmem_to_hbm [thread:$0]  %s4113, 2048, %s4, [#allocation6], 128, 128, 8
    $region33: #{tpu_custom_call.1} parent=1 // pred_fallthru
      _
    // Predicated region
    $region34: #{tpu_custom_call.1} parent=1 // pred_check
      _
    $region35: #{tpu_custom_call.1} parent=1 // pred_check_branch
      %4120 = sbr.rel (0) target = $region37
    $region36: #{tpu_custom_call.1} parent=1 // pred_region
      %4121 = dma.done [#allocation6], 2048
    $region37: #{tpu_custom_call.1} parent=1 // pred_fallthru
      _
    %4122 = vsyncpa [#allocation5], 1
    %4123 = vsyncpa [#allocation6], 1

</llo_original>
